<compile_context>
chip_gen: v6e
topology: v6e:2x2x1
jax: 0.10.0
libtpu: 0.0.40
codegen_flags: <defaults>
</compile_context>

<pallas_src>
import functools

import jax
import jax.numpy as jnp
from jax.experimental import pallas as pl
from jax.experimental.pallas import tpu as pltpu

CONV_CHANNELS = 32      # out_channels of both conv layers (fixed by the module)
LINEAR_WIDTH = 256      # hidden width of the linear layer
MAX_BATCH_BLOCK = 32    # images per grid step (conv matmul M = 32 * H/2)


# ----------------------------------------------------------------------------
# The fused forward kernel (one batch block per grid step)
# ----------------------------------------------------------------------------
def _fused_forward_kernel(planes_ref, w1_ref, b1_ref, w2_ref, b2_ref,
                          lw_ref, lb_ref, hw_ref, hb_ref, o_ref, pad2_ref,
                          *, bb, H2, W2, H4, C_in):
    C1 = CONV_CHANNELS
    cdt = w1_ref.dtype                                   # compute dtype (f32/bf16)

    # ---- conv1 (3x3,pad1)+bias+ReLU+MaxPool(2,2): pool-parity, K-stacked taps --
    # planes_ref: (bb, 8, Hp, W2*C_in), plane p = a*4 + b*2 + c0 with
    #   planes[i, p, r, j*C_in + c] = x_pad[i, 2r + a, 2(j + c0) + b, c]
    # Per pool parity (pr, pc) the 9 tap slabs are concatenated along K and hit
    # the MXU as ONE (bb*H2, 9*W2*C_in) x (9*W2*C_in, W2*C1) matmul.
    accs = []
    for pr in range(2):
        for pc in range(2):
            slabs = []
            for kh in range(3):
                for kw in range(3):
                    a, r0 = (pr + kh) % 2, (pr + kh) // 2
                    b, c0 = (pc + kw) % 2, (pc + kw) // 2
                    slab = planes_ref[:, a * 4 + b * 2 + c0, r0:r0 + H2, :]
                    slabs.append(slab.reshape(bb * H2, W2 * C_in))
            lhs = jnp.concatenate(slabs, axis=-1)        # (bb*H2, 9*W2*C_in)
            accs.append(jnp.dot(lhs, w1_ref[...],
                                preferred_element_type=jnp.float32))
    conv1 = jnp.maximum(jnp.maximum(accs[0], accs[1]),
                        jnp.maximum(accs[2], accs[3]))
    pooled1 = jnp.maximum(conv1 + b1_ref[...], 0.0)      # (bb*H2, W2*C1), f32

    # ---- conv2 (3x3,pad1): full-resolution tap matmul on VMEM-resident pooled1
    # pad2_ref: (bb, H2+2, (W2+2)*C1) scratch holding zero-padded pooled1.
    pad2_ref[...] = jnp.zeros_like(pad2_ref)
    pad2_ref[:, 1:1 + H2, C1:C1 + W2 * C1] = (
        pooled1.reshape(bb, H2, W2 * C1).astype(cdt))
    slabs2 = []
    for kh in range(3):
        for kw in range(3):
            s = pad2_ref[:, kh:kh + H2, kw * C1:kw * C1 + W2 * C1]
            slabs2.append(s.reshape(bb * H2, W2 * C1))
    lhs2 = jnp.concatenate(slabs2, axis=-1)              # (bb*H2, 9*W2*C1)
    y2 = jnp.dot(lhs2, w2_ref[...], preferred_element_type=jnp.float32)
    y2 = jnp.maximum(y2 + b2_ref[...], 0.0)              # (bb*H2, W2*C1), f32
    y2 = y2.reshape(bb, H2, W2 * C1)

    # ---- 2x2 max-pool of conv2 + flatten --------------------------------------
    # Static slices only: for pooled row u, v_u[:, l] = max over the 2x2 block at
    # valid lanes l = j*2*C1 + c; invalid (garbage) lanes are killed by zero rows
    # folded into lw_ref, so no lane compaction / strided gather is needed.
    seg = (W2 - 1) * C1
    pieces = []
    for u in range(H4):
        quad = []
        for dr in range(2):
            row = y2[:, 2 * u + dr, :]                   # (bb, W2*C1)
            for dc in range(2):
                quad.append(row[:, dc * C1:dc * C1 + seg])
        pieces.append(jnp.maximum(jnp.maximum(quad[0], quad[1]),
                                  jnp.maximum(quad[2], quad[3])))
    z = jnp.concatenate(pieces, axis=-1)                 # (bb, H4*seg), f32

    # ---- Linear(flat,256)+ReLU and fused (actor | critic) head ----------------
    h = jnp.dot(z.astype(cdt), lw_ref[...], preferred_element_type=jnp.float32)
    h = jnp.maximum(h + lb_ref[...], 0.0)                # f32 epilogue (v5e-safe)
    out = jnp.dot(h.astype(cdt), hw_ref[...],
                  preferred_element_type=jnp.float32) + hb_ref[...]
    o_ref[...] = out.astype(o_ref.dtype)


# ----------------------------------------------------------------------------
# Wrapper
# ----------------------------------------------------------------------------
def _conv1_parity_planes(x_nhwc, H2, W2):
    """Stacked parity planes (B, 8, H2+1, W2*C) of the zero-padded input."""
    B, H, W, C = x_nhwc.shape
    xp = jnp.pad(x_nhwc, ((0, 0), (1, 1), (1, 1), (0, 0)))
    Hp = H2 + 1
    planes = []
    for a in range(2):
        for b in range(2):
            for c0 in range(2):
                q = xp[:, a::2, (2 * c0 + b)::2, :][:, :Hp, :W2, :]
                planes.append(q.reshape(B, Hp, W2 * C))
    return jnp.stack(planes, axis=1)


def actor_critic_forward(prepared, obs, *, obs_channels, num_outputs):
    """obs: NCHW (or NHWC); same layout autodetect as the PyTorch module."""
    if obs.ndim == 4 and obs.shape[1] == obs_channels:
        x = jnp.transpose(obs, (0, 2, 3, 1))             # NCHW -> NHWC internal
    else:
        x = obs
    B, H, W, C = x.shape
    assert C == obs_channels
    assert H % 4 == 0 and W % 4 == 0, "two MaxPool2d(2,2) stages need H,W % 4 == 0"
    H2, W2, H4 = H // 2, W // 2, H // 4
    C1 = CONV_CHANNELS
    head_n = prepared["head_w"].shape[1]
    cdt = prepared["w1"].dtype

    planes = _conv1_parity_planes(x.astype(cdt), H2, W2)  # (B, 8, H2+1, W2*C)

    # Batch blocking: single full block for small B, 32-image blocks otherwise
    # (>=2 grid steps keeps both TensorCores busy on v7x).
    if B <= MAX_BATCH_BLOCK:
        bb, Bp = B, B
    else:
        bb = MAX_BATCH_BLOCK
        Bp = pl.cdiv(B, bb) * bb
        if Bp != B:
            planes = jnp.pad(planes, ((0, Bp - B), (0, 0), (0, 0), (0, 0)))
    nb = Bp // bb
    Hp = H2 + 1

    kernel = functools.partial(_fused_forward_kernel,
                               bb=bb, H2=H2, W2=W2, H4=H4, C_in=C)
    const2 = lambda i: (0, 0)
    out = pl.pallas_call(
        kernel,
        out_shape=jax.ShapeDtypeStruct((Bp, head_n), jnp.float32),
        grid=(nb,),
        in_specs=[
            pl.BlockSpec((bb, 8, Hp, W2 * C), lambda i: (i, 0, 0, 0)),
            pl.BlockSpec(prepared["w1"].shape, const2),
            pl.BlockSpec(prepared["b1"].shape, const2),
            pl.BlockSpec(prepared["w2"].shape, const2),
            pl.BlockSpec(prepared["b2"].shape, const2),
            pl.BlockSpec(prepared["lin_w"].shape, const2),
            pl.BlockSpec(prepared["lin_b"].shape, const2),
            pl.BlockSpec(prepared["head_w"].shape, const2),
            pl.BlockSpec(prepared["head_b"].shape, const2),
        ],
        out_specs=pl.BlockSpec((bb, head_n), lambda i: (i, 0)),
        scratch_shapes=[pltpu.VMEM((bb, H2 + 2, (W2 + 2) * C1), cdt)],
        compiler_params=pltpu.CompilerParams(
            dimension_semantics=("parallel",),
            vmem_limit_bytes=48 * 1024 * 1024),
    )(planes, prepared["w1"], prepared["b1"], prepared["w2"], prepared["b2"],
      prepared["lin_w"], prepared["lin_b"], prepared["head_w"], prepared["head_b"])

    out = out[:B]
    logits = out[:, :num_outputs]
    value = out[:, num_outputs:num_outputs + 1]
    return logits, value


# ----------------------------------------------------------------------------
# Parameters: PyTorch-convention init + one-time kernel-ready re-layout
# ----------------------------------------------------------------------------
def init_params(key, h, w, c, num_outputs):
    ks = jax.random.split(key, 10)
    flat = CONV_CHANNELS * (h // 4) * (w // 4)
    return {
        "conv1_w": 0.1 * jax.random.normal(ks[0], (CONV_CHANNELS, c, 3, 3), jnp.float32),
        "conv1_b": 0.1 * jax.random.normal(ks[1], (CONV_CHANNELS,), jnp.float32),
        "conv2_w": 0.1 * jax.random.normal(ks[2], (CONV_CHANNELS, CONV_CHANNELS, 3, 3), jnp.float32),
        "conv2_b": 0.1 * jax.random.normal(ks[3], (CONV_CHANNELS,), jnp.float32),
        "lin_w": 0.05 * jax.random.normal(ks[4], (LINEAR_WIDTH, flat), jnp.float32),
        "lin_b": 0.05 * jax.random.normal(ks[5], (LINEAR_WIDTH,), jnp.float32),
        "actor_w": 0.05 * jax.random.normal(ks[6], (num_outputs, LINEAR_WIDTH), jnp.float32),
        "actor_b": 0.05 * jax.random.normal(ks[7], (num_outputs,), jnp.float32),
        "critic_w": 0.05 * jax.random.normal(ks[8], (1, LINEAR_WIDTH), jnp.float32),
        "critic_b": 0.05 * jax.random.normal(ks[9], (1,), jnp.float32),
    }


def prepare_params(params, h, w, c, num_outputs, compute_dtype=jnp.bfloat16):
    """One-time re-layout of PyTorch-convention weights into kernel-ready form.

    compute_dtype=bfloat16 (default) selects the bf16 MXU path; accumulation
    and all epilogues stay f32.  Use float32 to match the module numerics.
    """
    C1 = CONV_CHANNELS
    H4, W4, W2 = h // 4, w // 4, w // 2

    def stacked_kron(w_oihw, width):
        eye = jnp.eye(width, dtype=jnp.float32)
        blocks = [jnp.kron(eye, w_oihw[:, :, kh, kw].T.astype(jnp.float32))
                  for kh in range(3) for kw in range(3)]
        return jnp.concatenate(blocks, axis=0)            # K-stacked taps

    w1 = stacked_kron(params["conv1_w"], W2)               # (9*W2*c,  W2*C1)
    w2 = stacked_kron(params["conv2_w"], W2)                # (9*W2*C1, W2*C1)
    b1 = jnp.tile(params["conv1_b"], W2)[None, :]
    b2 = jnp.tile(params["conv2_b"], W2)[None, :]

    # Linear weight: fold the pool2 lane-selection + PyTorch NCHW flatten order
    # into the rows (zero rows at the garbage lanes of the kernel's z layout).
    seg = (W2 - 1) * C1
    uu, jj, cc = jnp.meshgrid(jnp.arange(H4), jnp.arange(W4), jnp.arange(C1),
                              indexing="ij")
    q = (uu * seg + jj * (2 * C1) + cc).reshape(-1)         # kernel z lane index
    f = (cc * (H4 * W4) + uu * W4 + jj).reshape(-1)          # PyTorch flat index
    lw = jnp.zeros((H4 * seg, LINEAR_WIDTH), jnp.float32)
    lw = lw.at[q].set(params["lin_w"][:, f].T)
    lb = params["lin_b"][None, :]

    # Fuse actor + critic into a single lane-dense head (N padded to >=128).
    head_n = ((num_outputs + 1 + 127) // 128) * 128
    head_w = jnp.zeros((LINEAR_WIDTH, head_n), jnp.float32)
    head_w = head_w.at[:, :num_outputs].set(params["actor_w"].T)
    head_w = head_w.at[:, num_outputs].set(params["critic_w"][0])
    head_b = (jnp.zeros((head_n,), jnp.float32)
              .at[:num_outputs].set(params["actor_b"])
              .at[num_outputs].set(params["critic_b"][0]))

    return {
        "w1": w1.astype(compute_dtype), "b1": b1.astype(jnp.float32),
        "w2": w2.astype(compute_dtype), "b2": b2.astype(jnp.float32),
        "lin_w": lw.astype(compute_dtype), "lin_b": lb.astype(jnp.float32),
        "head_w": head_w.astype(compute_dtype),
        "head_b": head_b[None, :].astype(jnp.float32),
    }


# ----------------------------------------------------------------------------
# Pure-JAX reference (for in-script self-check)
# ----------------------------------------------------------------------------
def _reference_forward(params, obs, *, obs_channels, num_outputs):
    if obs.ndim == 4 and obs.shape[1] != obs_channels:
        obs = jnp.transpose(obs, (0, 3, 1, 2))              # NHWC -> NCHW
    x = jnp.transpose(obs, (0, 2, 3, 1)).astype(jnp.float32)

    def block(x, w, b):
        y = jax.lax.conv_general_dilated(
            x, jnp.transpose(w, (2, 3, 1, 0)), (1, 1), ((1, 1), (1, 1)),
            dimension_numbers=("NHWC", "HWIO", "NHWC"))
        y = jnp.maximum(y + b, 0.0)
        Bn, H, W, C = y.shape
        return y.reshape(Bn, H // 2, 2, W // 2, 2, C).max(axis=(2, 4))

    x = block(x, params["conv1_w"], params["conv1_b"])
    x = block(x, params["conv2_w"], params["conv2_b"])
    Bn = x.shape[0]
    x = jnp.transpose(x, (0, 3, 1, 2)).reshape(Bn, -1)       # PyTorch NCHW flatten
    h = jnp.maximum(x @ params["lin_w"].T + params["lin_b"], 0.0)
    logits = h @ params["actor_w"].T + params["actor_b"]
    value = h @ params["critic_w"].T + params["critic_b"]
    return logits, value


if __name__ == "__main__":
    B, C, H, W = 2, 4, 16, 16
    NUM_OUTPUTS = 6

    key = jax.random.PRNGKey(0)
    k_obs, k_params = jax.random.split(key)
    obs = jax.random.normal(k_obs, (B, C, H, W), jnp.float32)    # NCHW input
    params = init_params(k_params, H, W, C, NUM_OUTPUTS)

    fwd = jax.jit(functools.partial(actor_critic_forward,
                                    obs_channels=C, num_outputs=NUM_OUTPUTS))

    with jax.default_matmul_precision("highest"):
        ref_logits, ref_value = _reference_forward(
            params, obs, obs_channels=C, num_outputs=NUM_OUTPUTS)

    # f32 path: matches the PyTorch module numerics.
    prepared_f32 = prepare_params(params, H, W, C, NUM_OUTPUTS,
                                  compute_dtype=jnp.float32)
    logits, value = fwd(prepared_f32, obs)
    jax.block_until_ready((logits, value))
    assert logits.shape == (B, NUM_OUTPUTS) and value.shape == (B, 1)
    assert logits.dtype == jnp.float32 and value.dtype == jnp.float32
    assert bool(jnp.allclose(logits, ref_logits, atol=5e-3, rtol=5e-3)), \
        float(jnp.max(jnp.abs(logits - ref_logits)))
    assert bool(jnp.allclose(value, ref_value, atol=5e-3, rtol=5e-3)), \
        float(jnp.max(jnp.abs(value - ref_value)))

    # bf16 deployed path (default): bf16 MXU, f32 accumulation/epilogues.
    prepared_bf16 = prepare_params(params, H, W, C, NUM_OUTPUTS)
    logits16, value16 = fwd(prepared_bf16, obs)
    jax.block_until_ready((logits16, value16))
    assert bool(jnp.allclose(logits16, ref_logits, atol=1e-1, rtol=1e-1)), \
        float(jnp.max(jnp.abs(logits16 - ref_logits)))
    assert bool(jnp.allclose(value16, ref_value, atol=1e-1, rtol=1e-1)), \
        float(jnp.max(jnp.abs(value16 - ref_value)))

    print("KERNEL_OK")
</pallas_src>

<mosaic_0001>
module attributes {stable_mosaic.version = 11 : i64} {
  func.func @_fused_forward_kernel(%arg0: i32, %arg1: memref<2x8x9x32xf32, #tpu.memory_space<vmem>>, %arg2: memref<288x256xf32, #tpu.memory_space<vmem>>, %arg3: memref<1x256xf32, #tpu.memory_space<vmem>>, %arg4: memref<2304x256xf32, #tpu.memory_space<vmem>>, %arg5: memref<1x256xf32, #tpu.memory_space<vmem>>, %arg6: memref<896x256xf32, #tpu.memory_space<vmem>>, %arg7: memref<1x256xf32, #tpu.memory_space<vmem>>, %arg8: memref<256x128xf32, #tpu.memory_space<vmem>>, %arg9: memref<1x128xf32, #tpu.memory_space<vmem>>, %arg10: memref<2x128xf32, #tpu.memory_space<vmem>>, %arg11: memref<2x10x320xf32, #tpu.memory_space<vmem>>) attributes {dimension_semantics = [#tpu.dimension_semantics<parallel>], iteration_bounds = array<i64: 1>, scalar_prefetch = 0 : i64, scratch_operands = 1 : i64, tpu.core_type = #tpu.core_type<tc>, window_params = [{transform_indices = @transform_0, window_bounds = array<i64: 2, 8, 9, 32>}, {pipeline_mode = #tpu.pipeline_mode<synchronous>, transform_indices = @transform_1, window_bounds = array<i64: 288, 256>}, {pipeline_mode = #tpu.pipeline_mode<synchronous>, transform_indices = @transform_2, window_bounds = array<i64: 1, 256>}, {pipeline_mode = #tpu.pipeline_mode<synchronous>, transform_indices = @transform_3, window_bounds = array<i64: 2304, 256>}, {pipeline_mode = #tpu.pipeline_mode<synchronous>, transform_indices = @transform_4, window_bounds = array<i64: 1, 256>}, {pipeline_mode = #tpu.pipeline_mode<synchronous>, transform_indices = @transform_5, window_bounds = array<i64: 896, 256>}, {pipeline_mode = #tpu.pipeline_mode<synchronous>, transform_indices = @transform_6, window_bounds = array<i64: 1, 256>}, {pipeline_mode = #tpu.pipeline_mode<synchronous>, transform_indices = @transform_7, window_bounds = array<i64: 256, 128>}, {pipeline_mode = #tpu.pipeline_mode<synchronous>, transform_indices = @transform_8, window_bounds = array<i64: 1, 128>}, {transform_indices = @transform_9, window_bounds = array<i64: 2, 128>}]} {
    %c0 = arith.constant 0 : index
    %c0_0 = arith.constant 0 : index
    %c0_1 = arith.constant 0 : index
    %c0_2 = arith.constant 0 : index
    %0 = vector.load %arg1[%c0, %c0_0, %c0_1, %c0_2] : memref<2x8x9x32xf32, #tpu.memory_space<vmem>>, vector<2x1x8x32xf32>
    %1 = vector.shape_cast %0 : vector<2x1x8x32xf32> to vector<2x8x32xf32>
    %2 = vector.shape_cast %1 : vector<2x8x32xf32> to vector<16x32xf32>
    %c0_3 = arith.constant 0 : index
    %c2 = arith.constant 2 : index
    %c0_4 = arith.constant 0 : index
    %c0_5 = arith.constant 0 : index
    %3 = vector.load %arg1[%c0_3, %c2, %c0_4, %c0_5] : memref<2x8x9x32xf32, #tpu.memory_space<vmem>>, vector<2x1x8x32xf32>
    %4 = vector.shape_cast %3 : vector<2x1x8x32xf32> to vector<2x8x32xf32>
    %5 = vector.shape_cast %4 : vector<2x8x32xf32> to vector<16x32xf32>
    %c0_6 = arith.constant 0 : index
    %c1 = arith.constant 1 : index
    %c0_7 = arith.constant 0 : index
    %c0_8 = arith.constant 0 : index
    %6 = vector.load %arg1[%c0_6, %c1, %c0_7, %c0_8] : memref<2x8x9x32xf32, #tpu.memory_space<vmem>>, vector<2x1x8x32xf32>
    %7 = vector.shape_cast %6 : vector<2x1x8x32xf32> to vector<2x8x32xf32>
    %8 = vector.shape_cast %7 : vector<2x8x32xf32> to vector<16x32xf32>
    %c0_9 = arith.constant 0 : index
    %c4 = arith.constant 4 : index
    %c0_10 = arith.constant 0 : index
    %c0_11 = arith.constant 0 : index
    %9 = vector.load %arg1[%c0_9, %c4, %c0_10, %c0_11] : memref<2x8x9x32xf32, #tpu.memory_space<vmem>>, vector<2x1x8x32xf32>
    %10 = vector.shape_cast %9 : vector<2x1x8x32xf32> to vector<2x8x32xf32>
    %11 = vector.shape_cast %10 : vector<2x8x32xf32> to vector<16x32xf32>
    %c0_12 = arith.constant 0 : index
    %c6 = arith.constant 6 : index
    %c0_13 = arith.constant 0 : index
    %c0_14 = arith.constant 0 : index
    %12 = vector.load %arg1[%c0_12, %c6, %c0_13, %c0_14] : memref<2x8x9x32xf32, #tpu.memory_space<vmem>>, vector<2x1x8x32xf32>
    %13 = vector.shape_cast %12 : vector<2x1x8x32xf32> to vector<2x8x32xf32>
    %14 = vector.shape_cast %13 : vector<2x8x32xf32> to vector<16x32xf32>
    %c0_15 = arith.constant 0 : index
    %c5 = arith.constant 5 : index
    %c0_16 = arith.constant 0 : index
    %c0_17 = arith.constant 0 : index
    %15 = vector.load %arg1[%c0_15, %c5, %c0_16, %c0_17] : memref<2x8x9x32xf32, #tpu.memory_space<vmem>>, vector<2x1x8x32xf32>
    %16 = vector.shape_cast %15 : vector<2x1x8x32xf32> to vector<2x8x32xf32>
    %17 = vector.shape_cast %16 : vector<2x8x32xf32> to vector<16x32xf32>
    %c0_18 = arith.constant 0 : index
    %c0_19 = arith.constant 0 : index
    %c1_20 = arith.constant 1 : index
    %c0_21 = arith.constant 0 : index
    %18 = vector.load %arg1[%c0_18, %c0_19, %c1_20, %c0_21] : memref<2x8x9x32xf32, #tpu.memory_space<vmem>>, vector<2x1x8x32xf32>
    %19 = vector.shape_cast %18 : vector<2x1x8x32xf32> to vector<2x8x32xf32>
    %20 = vector.shape_cast %19 : vector<2x8x32xf32> to vector<16x32xf32>
    %c0_22 = arith.constant 0 : index
    %c2_23 = arith.constant 2 : index
    %c1_24 = arith.constant 1 : index
    %c0_25 = arith.constant 0 : index
    %21 = vector.load %arg1[%c0_22, %c2_23, %c1_24, %c0_25] : memref<2x8x9x32xf32, #tpu.memory_space<vmem>>, vector<2x1x8x32xf32>
    %22 = vector.shape_cast %21 : vector<2x1x8x32xf32> to vector<2x8x32xf32>
    %23 = vector.shape_cast %22 : vector<2x8x32xf32> to vector<16x32xf32>
    %c0_26 = arith.constant 0 : index
    %c1_27 = arith.constant 1 : index
    %c1_28 = arith.constant 1 : index
    %c0_29 = arith.constant 0 : index
    %24 = vector.load %arg1[%c0_26, %c1_27, %c1_28, %c0_29] : memref<2x8x9x32xf32, #tpu.memory_space<vmem>>, vector<2x1x8x32xf32>
    %25 = vector.shape_cast %24 : vector<2x1x8x32xf32> to vector<2x8x32xf32>
    %26 = vector.shape_cast %25 : vector<2x8x32xf32> to vector<16x32xf32>
    %27 = tpu.concatenate %2, %5, %8, %11, %14, %17, %20, %23, %26 in 1 : vector<16x32xf32>, vector<16x32xf32>, vector<16x32xf32>, vector<16x32xf32>, vector<16x32xf32>, vector<16x32xf32>, vector<16x32xf32>, vector<16x32xf32>, vector<16x32xf32> -> vector<16x288xf32>
    %c0_30 = arith.constant 0 : index
    %c0_31 = arith.constant 0 : index
    %28 = vector.load %arg2[%c0_30, %c0_31] : memref<288x256xf32, #tpu.memory_space<vmem>>, vector<288x256xf32>
    %cst = arith.constant dense<0.000000e+00> : vector<16x256xf32>
    %29 = tpu.matmul %27, %28, %cst {dimension_numbers = #tpu.dot_dimension_numbers<[1], [0], [0], [1], [0, 0, 1, 1], [], []>} : vector<16x288xf32>, vector<288x256xf32>, vector<16x256xf32> -> vector<16x256xf32>
    %c0_32 = arith.constant 0 : index
    %c2_33 = arith.constant 2 : index
    %c0_34 = arith.constant 0 : index
    %c0_35 = arith.constant 0 : index
    %30 = vector.load %arg1[%c0_32, %c2_33, %c0_34, %c0_35] : memref<2x8x9x32xf32, #tpu.memory_space<vmem>>, vector<2x1x8x32xf32>
    %31 = vector.shape_cast %30 : vector<2x1x8x32xf32> to vector<2x8x32xf32>
    %32 = vector.shape_cast %31 : vector<2x8x32xf32> to vector<16x32xf32>
    %c0_36 = arith.constant 0 : index
    %c1_37 = arith.constant 1 : index
    %c0_38 = arith.constant 0 : index
    %c0_39 = arith.constant 0 : index
    %33 = vector.load %arg1[%c0_36, %c1_37, %c0_38, %c0_39] : memref<2x8x9x32xf32, #tpu.memory_space<vmem>>, vector<2x1x8x32xf32>
    %34 = vector.shape_cast %33 : vector<2x1x8x32xf32> to vector<2x8x32xf32>
    %35 = vector.shape_cast %34 : vector<2x8x32xf32> to vector<16x32xf32>
    %c0_40 = arith.constant 0 : index
    %c3 = arith.constant 3 : index
    %c0_41 = arith.constant 0 : index
    %c0_42 = arith.constant 0 : index
    %36 = vector.load %arg1[%c0_40, %c3, %c0_41, %c0_42] : memref<2x8x9x32xf32, #tpu.memory_space<vmem>>, vector<2x1x8x32xf32>
    %37 = vector.shape_cast %36 : vector<2x1x8x32xf32> to vector<2x8x32xf32>
    %38 = vector.shape_cast %37 : vector<2x8x32xf32> to vector<16x32xf32>
    %c0_43 = arith.constant 0 : index
    %c6_44 = arith.constant 6 : index
    %c0_45 = arith.constant 0 : index
    %c0_46 = arith.constant 0 : index
    %39 = vector.load %arg1[%c0_43, %c6_44, %c0_45, %c0_46] : memref<2x8x9x32xf32, #tpu.memory_space<vmem>>, vector<2x1x8x32xf32>
    %40 = vector.shape_cast %39 : vector<2x1x8x32xf32> to vector<2x8x32xf32>
    %41 = vector.shape_cast %40 : vector<2x8x32xf32> to vector<16x32xf32>
    %c0_47 = arith.constant 0 : index
    %c5_48 = arith.constant 5 : index
    %c0_49 = arith.constant 0 : index
    %c0_50 = arith.constant 0 : index
    %42 = vector.load %arg1[%c0_47, %c5_48, %c0_49, %c0_50] : memref<2x8x9x32xf32, #tpu.memory_space<vmem>>, vector<2x1x8x32xf32>
    %43 = vector.shape_cast %42 : vector<2x1x8x32xf32> to vector<2x8x32xf32>
    %44 = vector.shape_cast %43 : vector<2x8x32xf32> to vector<16x32xf32>
    %c0_51 = arith.constant 0 : index
    %c7 = arith.constant 7 : index
    %c0_52 = arith.constant 0 : index
    %c0_53 = arith.constant 0 : index
    %45 = vector.load %arg1[%c0_51, %c7, %c0_52, %c0_53] : memref<2x8x9x32xf32, #tpu.memory_space<vmem>>, vector<2x1x8x32xf32>
    %46 = vector.shape_cast %45 : vector<2x1x8x32xf32> to vector<2x8x32xf32>
    %47 = vector.shape_cast %46 : vector<2x8x32xf32> to vector<16x32xf32>
    %c0_54 = arith.constant 0 : index
    %c2_55 = arith.constant 2 : index
    %c1_56 = arith.constant 1 : index
    %c0_57 = arith.constant 0 : index
    %48 = vector.load %arg1[%c0_54, %c2_55, %c1_56, %c0_57] : memref<2x8x9x32xf32, #tpu.memory_space<vmem>>, vector<2x1x8x32xf32>
    %49 = vector.shape_cast %48 : vector<2x1x8x32xf32> to vector<2x8x32xf32>
    %50 = vector.shape_cast %49 : vector<2x8x32xf32> to vector<16x32xf32>
    %c0_58 = arith.constant 0 : index
    %c1_59 = arith.constant 1 : index
    %c1_60 = arith.constant 1 : index
    %c0_61 = arith.constant 0 : index
    %51 = vector.load %arg1[%c0_58, %c1_59, %c1_60, %c0_61] : memref<2x8x9x32xf32, #tpu.memory_space<vmem>>, vector<2x1x8x32xf32>
    %52 = vector.shape_cast %51 : vector<2x1x8x32xf32> to vector<2x8x32xf32>
    %53 = vector.shape_cast %52 : vector<2x8x32xf32> to vector<16x32xf32>
    %c0_62 = arith.constant 0 : index
    %c3_63 = arith.constant 3 : index
    %c1_64 = arith.constant 1 : index
    %c0_65 = arith.constant 0 : index
    %54 = vector.load %arg1[%c0_62, %c3_63, %c1_64, %c0_65] : memref<2x8x9x32xf32, #tpu.memory_space<vmem>>, vector<2x1x8x32xf32>
    %55 = vector.shape_cast %54 : vector<2x1x8x32xf32> to vector<2x8x32xf32>
    %56 = vector.shape_cast %55 : vector<2x8x32xf32> to vector<16x32xf32>
    %57 = tpu.concatenate %32, %35, %38, %41, %44, %47, %50, %53, %56 in 1 : vector<16x32xf32>, vector<16x32xf32>, vector<16x32xf32>, vector<16x32xf32>, vector<16x32xf32>, vector<16x32xf32>, vector<16x32xf32>, vector<16x32xf32>, vector<16x32xf32> -> vector<16x288xf32>
    %c0_66 = arith.constant 0 : index
    %c0_67 = arith.constant 0 : index
    %58 = vector.load %arg2[%c0_66, %c0_67] : memref<288x256xf32, #tpu.memory_space<vmem>>, vector<288x256xf32>
    %cst_68 = arith.constant dense<0.000000e+00> : vector<16x256xf32>
    %59 = tpu.matmul %57, %58, %cst_68 {dimension_numbers = #tpu.dot_dimension_numbers<[1], [0], [0], [1], [0, 0, 1, 1], [], []>} : vector<16x288xf32>, vector<288x256xf32>, vector<16x256xf32> -> vector<16x256xf32>
    %c0_69 = arith.constant 0 : index
    %c4_70 = arith.constant 4 : index
    %c0_71 = arith.constant 0 : index
    %c0_72 = arith.constant 0 : index
    %60 = vector.load %arg1[%c0_69, %c4_70, %c0_71, %c0_72] : memref<2x8x9x32xf32, #tpu.memory_space<vmem>>, vector<2x1x8x32xf32>
    %61 = vector.shape_cast %60 : vector<2x1x8x32xf32> to vector<2x8x32xf32>
    %62 = vector.shape_cast %61 : vector<2x8x32xf32> to vector<16x32xf32>
    %c0_73 = arith.constant 0 : index
    %c6_74 = arith.constant 6 : index
    %c0_75 = arith.constant 0 : index
    %c0_76 = arith.constant 0 : index
    %63 = vector.load %arg1[%c0_73, %c6_74, %c0_75, %c0_76] : memref<2x8x9x32xf32, #tpu.memory_space<vmem>>, vector<2x1x8x32xf32>
    %64 = vector.shape_cast %63 : vector<2x1x8x32xf32> to vector<2x8x32xf32>
    %65 = vector.shape_cast %64 : vector<2x8x32xf32> to vector<16x32xf32>
    %c0_77 = arith.constant 0 : index
    %c5_78 = arith.constant 5 : index
    %c0_79 = arith.constant 0 : index
    %c0_80 = arith.constant 0 : index
    %66 = vector.load %arg1[%c0_77, %c5_78, %c0_79, %c0_80] : memref<2x8x9x32xf32, #tpu.memory_space<vmem>>, vector<2x1x8x32xf32>
    %67 = vector.shape_cast %66 : vector<2x1x8x32xf32> to vector<2x8x32xf32>
    %68 = vector.shape_cast %67 : vector<2x8x32xf32> to vector<16x32xf32>
    %c0_81 = arith.constant 0 : index
    %c0_82 = arith.constant 0 : index
    %c1_83 = arith.constant 1 : index
    %c0_84 = arith.constant 0 : index
    %69 = vector.load %arg1[%c0_81, %c0_82, %c1_83, %c0_84] : memref<2x8x9x32xf32, #tpu.memory_space<vmem>>, vector<2x1x8x32xf32>
    %70 = vector.shape_cast %69 : vector<2x1x8x32xf32> to vector<2x8x32xf32>
    %71 = vector.shape_cast %70 : vector<2x8x32xf32> to vector<16x32xf32>
    %c0_85 = arith.constant 0 : index
    %c2_86 = arith.constant 2 : index
    %c1_87 = arith.constant 1 : index
    %c0_88 = arith.constant 0 : index
    %72 = vector.load %arg1[%c0_85, %c2_86, %c1_87, %c0_88] : memref<2x8x9x32xf32, #tpu.memory_space<vmem>>, vector<2x1x8x32xf32>
    %73 = vector.shape_cast %72 : vector<2x1x8x32xf32> to vector<2x8x32xf32>
    %74 = vector.shape_cast %73 : vector<2x8x32xf32> to vector<16x32xf32>
    %c0_89 = arith.constant 0 : index
    %c1_90 = arith.constant 1 : index
    %c1_91 = arith.constant 1 : index
    %c0_92 = arith.constant 0 : index
    %75 = vector.load %arg1[%c0_89, %c1_90, %c1_91, %c0_92] : memref<2x8x9x32xf32, #tpu.memory_space<vmem>>, vector<2x1x8x32xf32>
    %76 = vector.shape_cast %75 : vector<2x1x8x32xf32> to vector<2x8x32xf32>
    %77 = vector.shape_cast %76 : vector<2x8x32xf32> to vector<16x32xf32>
    %c0_93 = arith.constant 0 : index
    %c4_94 = arith.constant 4 : index
    %c1_95 = arith.constant 1 : index
    %c0_96 = arith.constant 0 : index
    %78 = vector.load %arg1[%c0_93, %c4_94, %c1_95, %c0_96] : memref<2x8x9x32xf32, #tpu.memory_space<vmem>>, vector<2x1x8x32xf32>
    %79 = vector.shape_cast %78 : vector<2x1x8x32xf32> to vector<2x8x32xf32>
    %80 = vector.shape_cast %79 : vector<2x8x32xf32> to vector<16x32xf32>
    %c0_97 = arith.constant 0 : index
    %c6_98 = arith.constant 6 : index
    %c1_99 = arith.constant 1 : index
    %c0_100 = arith.constant 0 : index
    %81 = vector.load %arg1[%c0_97, %c6_98, %c1_99, %c0_100] : memref<2x8x9x32xf32, #tpu.memory_space<vmem>>, vector<2x1x8x32xf32>
    %82 = vector.shape_cast %81 : vector<2x1x8x32xf32> to vector<2x8x32xf32>
    %83 = vector.shape_cast %82 : vector<2x8x32xf32> to vector<16x32xf32>
    %c0_101 = arith.constant 0 : index
    %c5_102 = arith.constant 5 : index
    %c1_103 = arith.constant 1 : index
    %c0_104 = arith.constant 0 : index
    %84 = vector.load %arg1[%c0_101, %c5_102, %c1_103, %c0_104] : memref<2x8x9x32xf32, #tpu.memory_space<vmem>>, vector<2x1x8x32xf32>
    %85 = vector.shape_cast %84 : vector<2x1x8x32xf32> to vector<2x8x32xf32>
    %86 = vector.shape_cast %85 : vector<2x8x32xf32> to vector<16x32xf32>
    %87 = tpu.concatenate %62, %65, %68, %71, %74, %77, %80, %83, %86 in 1 : vector<16x32xf32>, vector<16x32xf32>, vector<16x32xf32>, vector<16x32xf32>, vector<16x32xf32>, vector<16x32xf32>, vector<16x32xf32>, vector<16x32xf32>, vector<16x32xf32> -> vector<16x288xf32>
    %c0_105 = arith.constant 0 : index
    %c0_106 = arith.constant 0 : index
    %88 = vector.load %arg2[%c0_105, %c0_106] : memref<288x256xf32, #tpu.memory_space<vmem>>, vector<288x256xf32>
    %cst_107 = arith.constant dense<0.000000e+00> : vector<16x256xf32>
    %89 = tpu.matmul %87, %88, %cst_107 {dimension_numbers = #tpu.dot_dimension_numbers<[1], [0], [0], [1], [0, 0, 1, 1], [], []>} : vector<16x288xf32>, vector<288x256xf32>, vector<16x256xf32> -> vector<16x256xf32>
    %c0_108 = arith.constant 0 : index
    %c6_109 = arith.constant 6 : index
    %c0_110 = arith.constant 0 : index
    %c0_111 = arith.constant 0 : index
    %90 = vector.load %arg1[%c0_108, %c6_109, %c0_110, %c0_111] : memref<2x8x9x32xf32, #tpu.memory_space<vmem>>, vector<2x1x8x32xf32>
    %91 = vector.shape_cast %90 : vector<2x1x8x32xf32> to vector<2x8x32xf32>
    %92 = vector.shape_cast %91 : vector<2x8x32xf32> to vector<16x32xf32>
    %c0_112 = arith.constant 0 : index
    %c5_113 = arith.constant 5 : index
    %c0_114 = arith.constant 0 : index
    %c0_115 = arith.constant 0 : index
    %93 = vector.load %arg1[%c0_112, %c5_113, %c0_114, %c0_115] : memref<2x8x9x32xf32, #tpu.memory_space<vmem>>, vector<2x1x8x32xf32>
    %94 = vector.shape_cast %93 : vector<2x1x8x32xf32> to vector<2x8x32xf32>
    %95 = vector.shape_cast %94 : vector<2x8x32xf32> to vector<16x32xf32>
    %c0_116 = arith.constant 0 : index
    %c7_117 = arith.constant 7 : index
    %c0_118 = arith.constant 0 : index
    %c0_119 = arith.constant 0 : index
    %96 = vector.load %arg1[%c0_116, %c7_117, %c0_118, %c0_119] : memref<2x8x9x32xf32, #tpu.memory_space<vmem>>, vector<2x1x8x32xf32>
    %97 = vector.shape_cast %96 : vector<2x1x8x32xf32> to vector<2x8x32xf32>
    %98 = vector.shape_cast %97 : vector<2x8x32xf32> to vector<16x32xf32>
    %c0_120 = arith.constant 0 : index
    %c2_121 = arith.constant 2 : index
    %c1_122 = arith.constant 1 : index
    %c0_123 = arith.constant 0 : index
    %99 = vector.load %arg1[%c0_120, %c2_121, %c1_122, %c0_123] : memref<2x8x9x32xf32, #tpu.memory_space<vmem>>, vector<2x1x8x32xf32>
    %100 = vector.shape_cast %99 : vector<2x1x8x32xf32> to vector<2x8x32xf32>
    %101 = vector.shape_cast %100 : vector<2x8x32xf32> to vector<16x32xf32>
    %c0_124 = arith.constant 0 : index
    %c1_125 = arith.constant 1 : index
    %c1_126 = arith.constant 1 : index
    %c0_127 = arith.constant 0 : index
    %102 = vector.load %arg1[%c0_124, %c1_125, %c1_126, %c0_127] : memref<2x8x9x32xf32, #tpu.memory_space<vmem>>, vector<2x1x8x32xf32>
    %103 = vector.shape_cast %102 : vector<2x1x8x32xf32> to vector<2x8x32xf32>
    %104 = vector.shape_cast %103 : vector<2x8x32xf32> to vector<16x32xf32>
    %c0_128 = arith.constant 0 : index
    %c3_129 = arith.constant 3 : index
    %c1_130 = arith.constant 1 : index
    %c0_131 = arith.constant 0 : index
    %105 = vector.load %arg1[%c0_128, %c3_129, %c1_130, %c0_131] : memref<2x8x9x32xf32, #tpu.memory_space<vmem>>, vector<2x1x8x32xf32>
    %106 = vector.shape_cast %105 : vector<2x1x8x32xf32> to vector<2x8x32xf32>
    %107 = vector.shape_cast %106 : vector<2x8x32xf32> to vector<16x32xf32>
    %c0_132 = arith.constant 0 : index
    %c6_133 = arith.constant 6 : index
    %c1_134 = arith.constant 1 : index
    %c0_135 = arith.constant 0 : index
    %108 = vector.load %arg1[%c0_132, %c6_133, %c1_134, %c0_135] : memref<2x8x9x32xf32, #tpu.memory_space<vmem>>, vector<2x1x8x32xf32>
    %109 = vector.shape_cast %108 : vector<2x1x8x32xf32> to vector<2x8x32xf32>
    %110 = vector.shape_cast %109 : vector<2x8x32xf32> to vector<16x32xf32>
    %c0_136 = arith.constant 0 : index
    %c5_137 = arith.constant 5 : index
    %c1_138 = arith.constant 1 : index
    %c0_139 = arith.constant 0 : index
    %111 = vector.load %arg1[%c0_136, %c5_137, %c1_138, %c0_139] : memref<2x8x9x32xf32, #tpu.memory_space<vmem>>, vector<2x1x8x32xf32>
    %112 = vector.shape_cast %111 : vector<2x1x8x32xf32> to vector<2x8x32xf32>
    %113 = vector.shape_cast %112 : vector<2x8x32xf32> to vector<16x32xf32>
    %c0_140 = arith.constant 0 : index
    %c7_141 = arith.constant 7 : index
    %c1_142 = arith.constant 1 : index
    %c0_143 = arith.constant 0 : index
    %114 = vector.load %arg1[%c0_140, %c7_141, %c1_142, %c0_143] : memref<2x8x9x32xf32, #tpu.memory_space<vmem>>, vector<2x1x8x32xf32>
    %115 = vector.shape_cast %114 : vector<2x1x8x32xf32> to vector<2x8x32xf32>
    %116 = vector.shape_cast %115 : vector<2x8x32xf32> to vector<16x32xf32>
    %117 = tpu.concatenate %92, %95, %98, %101, %104, %107, %110, %113, %116 in 1 : vector<16x32xf32>, vector<16x32xf32>, vector<16x32xf32>, vector<16x32xf32>, vector<16x32xf32>, vector<16x32xf32>, vector<16x32xf32>, vector<16x32xf32>, vector<16x32xf32> -> vector<16x288xf32>
    %c0_144 = arith.constant 0 : index
    %c0_145 = arith.constant 0 : index
    %118 = vector.load %arg2[%c0_144, %c0_145] : memref<288x256xf32, #tpu.memory_space<vmem>>, vector<288x256xf32>
    %cst_146 = arith.constant dense<0.000000e+00> : vector<16x256xf32>
    %119 = tpu.matmul %117, %118, %cst_146 {dimension_numbers = #tpu.dot_dimension_numbers<[1], [0], [0], [1], [0, 0, 1, 1], [], []>} : vector<16x288xf32>, vector<288x256xf32>, vector<16x256xf32> -> vector<16x256xf32>
    %120 = arith.maximumf %29, %59 : vector<16x256xf32>
    %121 = arith.maximumf %89, %119 : vector<16x256xf32>
    %122 = arith.maximumf %120, %121 : vector<16x256xf32>
    %c0_147 = arith.constant 0 : index
    %c0_148 = arith.constant 0 : index
    %123 = vector.load %arg3[%c0_147, %c0_148] : memref<1x256xf32, #tpu.memory_space<vmem>>, vector<1x256xf32>
    %124 = vector.broadcast %123 : vector<1x256xf32> to vector<16x256xf32>
    %125 = arith.addf %122, %124 : vector<16x256xf32>
    %cst_149 = arith.constant 0.000000e+00 : f32
    %126 = vector.broadcast %cst_149 : f32 to vector<16x256xf32>
    %127 = arith.maximumf %125, %126 : vector<16x256xf32>
    %cst_150 = arith.constant 0.000000e+00 : f32
    %128 = vector.broadcast %cst_150 : f32 to vector<2x10x320xf32>
    %c0_151 = arith.constant 0 : index
    %c0_152 = arith.constant 0 : index
    %c0_153 = arith.constant 0 : index
    %129 = vector.load %arg11[%c0_151, %c0_152, %c0_153] : memref<2x10x320xf32, #tpu.memory_space<vmem>>, vector<2x10x320xf32>
    tpu.vector_store %arg11[%c0_151, %c0_152, %c0_153], %128 {strides = array<i32>} : memref<2x10x320xf32, #tpu.memory_space<vmem>>, vector<2x10x320xf32>,
    %130 = vector.shape_cast %127 : vector<16x256xf32> to vector<2x8x256xf32>
    %c0_154 = arith.constant 0 : index
    %c1_155 = arith.constant 1 : index
    %c32 = arith.constant 32 : index
    %131 = vector.load %arg11[%c0_154, %c1_155, %c32] : memref<2x10x320xf32, #tpu.memory_space<vmem>>, vector<2x8x256xf32>
    tpu.vector_store %arg11[%c0_154, %c1_155, %c32], %130 {strides = array<i32>} : memref<2x10x320xf32, #tpu.memory_space<vmem>>, vector<2x8x256xf32>,
    %c0_156 = arith.constant 0 : index
    %c0_157 = arith.constant 0 : index
    %c0_158 = arith.constant 0 : index
    %132 = vector.load %arg11[%c0_156, %c0_157, %c0_158] : memref<2x10x320xf32, #tpu.memory_space<vmem>>, vector<2x8x256xf32>
    %133 = vector.shape_cast %132 : vector<2x8x256xf32> to vector<16x256xf32>
    %c0_159 = arith.constant 0 : index
    %c0_160 = arith.constant 0 : index
    %c32_161 = arith.constant 32 : index
    %134 = vector.load %arg11[%c0_159, %c0_160, %c32_161] : memref<2x10x320xf32, #tpu.memory_space<vmem>>, vector<2x8x256xf32>
    %135 = vector.shape_cast %134 : vector<2x8x256xf32> to vector<16x256xf32>
    %c0_162 = arith.constant 0 : index
    %c0_163 = arith.constant 0 : index
    %c64 = arith.constant 64 : index
    %136 = vector.load %arg11[%c0_162, %c0_163, %c64] : memref<2x10x320xf32, #tpu.memory_space<vmem>>, vector<2x8x256xf32>
    %137 = vector.shape_cast %136 : vector<2x8x256xf32> to vector<16x256xf32>
    %c0_164 = arith.constant 0 : index
    %c1_165 = arith.constant 1 : index
    %c0_166 = arith.constant 0 : index
    %138 = vector.load %arg11[%c0_164, %c1_165, %c0_166] : memref<2x10x320xf32, #tpu.memory_space<vmem>>, vector<2x8x256xf32>
    %139 = vector.shape_cast %138 : vector<2x8x256xf32> to vector<16x256xf32>
    %c0_167 = arith.constant 0 : index
    %c1_168 = arith.constant 1 : index
    %c32_169 = arith.constant 32 : index
    %140 = vector.load %arg11[%c0_167, %c1_168, %c32_169] : memref<2x10x320xf32, #tpu.memory_space<vmem>>, vector<2x8x256xf32>
    %141 = vector.shape_cast %140 : vector<2x8x256xf32> to vector<16x256xf32>
    %c0_170 = arith.constant 0 : index
    %c1_171 = arith.constant 1 : index
    %c64_172 = arith.constant 64 : index
    %142 = vector.load %arg11[%c0_170, %c1_171, %c64_172] : memref<2x10x320xf32, #tpu.memory_space<vmem>>, vector<2x8x256xf32>
    %143 = vector.shape_cast %142 : vector<2x8x256xf32> to vector<16x256xf32>
    %c0_173 = arith.constant 0 : index
    %c2_174 = arith.constant 2 : index
    %c0_175 = arith.constant 0 : index
    %144 = vector.load %arg11[%c0_173, %c2_174, %c0_175] : memref<2x10x320xf32, #tpu.memory_space<vmem>>, vector<2x8x256xf32>
    %145 = vector.shape_cast %144 : vector<2x8x256xf32> to vector<16x256xf32>
    %c0_176 = arith.constant 0 : index
    %c2_177 = arith.constant 2 : index
    %c32_178 = arith.constant 32 : index
    %146 = vector.load %arg11[%c0_176, %c2_177, %c32_178] : memref<2x10x320xf32, #tpu.memory_space<vmem>>, vector<2x8x256xf32>
    %147 = vector.shape_cast %146 : vector<2x8x256xf32> to vector<16x256xf32>
    %c0_179 = arith.constant 0 : index
    %c2_180 = arith.constant 2 : index
    %c64_181 = arith.constant 64 : index
    %148 = vector.load %arg11[%c0_179, %c2_180, %c64_181] : memref<2x10x320xf32, #tpu.memory_space<vmem>>, vector<2x8x256xf32>
    %149 = vector.shape_cast %148 : vector<2x8x256xf32> to vector<16x256xf32>
    %150 = tpu.concatenate %133, %135, %137, %139, %141, %143, %145, %147, %149 in 1 : vector<16x256xf32>, vector<16x256xf32>, vector<16x256xf32>, vector<16x256xf32>, vector<16x256xf32>, vector<16x256xf32>, vector<16x256xf32>, vector<16x256xf32>, vector<16x256xf32> -> vector<16x2304xf32>
    %c0_182 = arith.constant 0 : index
    %c0_183 = arith.constant 0 : index
    %151 = vector.load %arg4[%c0_182, %c0_183] : memref<2304x256xf32, #tpu.memory_space<vmem>>, vector<2304x256xf32>
    %cst_184 = arith.constant dense<0.000000e+00> : vector<16x256xf32>
    %152 = tpu.matmul %150, %151, %cst_184 {dimension_numbers = #tpu.dot_dimension_numbers<[1], [0], [0], [1], [0, 0, 1, 1], [], []>} : vector<16x2304xf32>, vector<2304x256xf32>, vector<16x256xf32> -> vector<16x256xf32>
    %c0_185 = arith.constant 0 : index
    %c0_186 = arith.constant 0 : index
    %153 = vector.load %arg5[%c0_185, %c0_186] : memref<1x256xf32, #tpu.memory_space<vmem>>, vector<1x256xf32>
    %154 = vector.broadcast %153 : vector<1x256xf32> to vector<16x256xf32>
    %155 = arith.addf %152, %154 : vector<16x256xf32>
    %cst_187 = arith.constant 0.000000e+00 : f32
    %156 = vector.broadcast %cst_187 : f32 to vector<16x256xf32>
    %157 = arith.maximumf %155, %156 : vector<16x256xf32>
    %158 = vector.shape_cast %157 : vector<16x256xf32> to vector<2x8x256xf32>
    %159 = vector.extract_strided_slice %158 {offsets = [0, 0, 0], sizes = [2, 1, 256], strides = [1, 1, 1]} : vector<2x8x256xf32> to vector<2x1x256xf32>
    %160 = vector.shape_cast %159 : vector<2x1x256xf32> to vector<2x256xf32>
    %161 = vector.extract_strided_slice %160 {offsets = [0, 0], sizes = [2, 224], strides = [1, 1]} : vector<2x256xf32> to vector<2x224xf32>
    %162 = vector.extract_strided_slice %160 {offsets = [0, 32], sizes = [2, 224], strides = [1, 1]} : vector<2x256xf32> to vector<2x224xf32>
    %163 = vector.extract_strided_slice %158 {offsets = [0, 1, 0], sizes = [2, 1, 256], strides = [1, 1, 1]} : vector<2x8x256xf32> to vector<2x1x256xf32>
    %164 = vector.shape_cast %163 : vector<2x1x256xf32> to vector<2x256xf32>
    %165 = vector.extract_strided_slice %164 {offsets = [0, 0], sizes = [2, 224], strides = [1, 1]} : vector<2x256xf32> to vector<2x224xf32>
    %166 = vector.extract_strided_slice %164 {offsets = [0, 32], sizes = [2, 224], strides = [1, 1]} : vector<2x256xf32> to vector<2x224xf32>
    %167 = arith.maximumf %161, %162 : vector<2x224xf32>
    %168 = arith.maximumf %165, %166 : vector<2x224xf32>
    %169 = arith.maximumf %167, %168 : vector<2x224xf32>
    %170 = vector.extract_strided_slice %158 {offsets = [0, 2, 0], sizes = [2, 1, 256], strides = [1, 1, 1]} : vector<2x8x256xf32> to vector<2x1x256xf32>
    %171 = vector.shape_cast %170 : vector<2x1x256xf32> to vector<2x256xf32>
    %172 = vector.extract_strided_slice %171 {offsets = [0, 0], sizes = [2, 224], strides = [1, 1]} : vector<2x256xf32> to vector<2x224xf32>
    %173 = vector.extract_strided_slice %171 {offsets = [0, 32], sizes = [2, 224], strides = [1, 1]} : vector<2x256xf32> to vector<2x224xf32>
    %174 = vector.extract_strided_slice %158 {offsets = [0, 3, 0], sizes = [2, 1, 256], strides = [1, 1, 1]} : vector<2x8x256xf32> to vector<2x1x256xf32>
    %175 = vector.shape_cast %174 : vector<2x1x256xf32> to vector<2x256xf32>
    %176 = vector.extract_strided_slice %175 {offsets = [0, 0], sizes = [2, 224], strides = [1, 1]} : vector<2x256xf32> to vector<2x224xf32>
    %177 = vector.extract_strided_slice %175 {offsets = [0, 32], sizes = [2, 224], strides = [1, 1]} : vector<2x256xf32> to vector<2x224xf32>
    %178 = arith.maximumf %172, %173 : vector<2x224xf32>
    %179 = arith.maximumf %176, %177 : vector<2x224xf32>
    %180 = arith.maximumf %178, %179 : vector<2x224xf32>
    %181 = vector.extract_strided_slice %158 {offsets = [0, 4, 0], sizes = [2, 1, 256], strides = [1, 1, 1]} : vector<2x8x256xf32> to vector<2x1x256xf32>
    %182 = vector.shape_cast %181 : vector<2x1x256xf32> to vector<2x256xf32>
    %183 = vector.extract_strided_slice %182 {offsets = [0, 0], sizes = [2, 224], strides = [1, 1]} : vector<2x256xf32> to vector<2x224xf32>
    %184 = vector.extract_strided_slice %182 {offsets = [0, 32], sizes = [2, 224], strides = [1, 1]} : vector<2x256xf32> to vector<2x224xf32>
    %185 = vector.extract_strided_slice %158 {offsets = [0, 5, 0], sizes = [2, 1, 256], strides = [1, 1, 1]} : vector<2x8x256xf32> to vector<2x1x256xf32>
    %186 = vector.shape_cast %185 : vector<2x1x256xf32> to vector<2x256xf32>
    %187 = vector.extract_strided_slice %186 {offsets = [0, 0], sizes = [2, 224], strides = [1, 1]} : vector<2x256xf32> to vector<2x224xf32>
    %188 = vector.extract_strided_slice %186 {offsets = [0, 32], sizes = [2, 224], strides = [1, 1]} : vector<2x256xf32> to vector<2x224xf32>
    %189 = arith.maximumf %183, %184 : vector<2x224xf32>
    %190 = arith.maximumf %187, %188 : vector<2x224xf32>
    %191 = arith.maximumf %189, %190 : vector<2x224xf32>
    %192 = vector.extract_strided_slice %158 {offsets = [0, 6, 0], sizes = [2, 1, 256], strides = [1, 1, 1]} : vector<2x8x256xf32> to vector<2x1x256xf32>
    %193 = vector.shape_cast %192 : vector<2x1x256xf32> to vector<2x256xf32>
    %194 = vector.extract_strided_slice %193 {offsets = [0, 0], sizes = [2, 224], strides = [1, 1]} : vector<2x256xf32> to vector<2x224xf32>
    %195 = vector.extract_strided_slice %193 {offsets = [0, 32], sizes = [2, 224], strides = [1, 1]} : vector<2x256xf32> to vector<2x224xf32>
    %196 = vector.extract_strided_slice %158 {offsets = [0, 7, 0], sizes = [2, 1, 256], strides = [1, 1, 1]} : vector<2x8x256xf32> to vector<2x1x256xf32>
    %197 = vector.shape_cast %196 : vector<2x1x256xf32> to vector<2x256xf32>
    %198 = vector.extract_strided_slice %197 {offsets = [0, 0], sizes = [2, 224], strides = [1, 1]} : vector<2x256xf32> to vector<2x224xf32>
    %199 = vector.extract_strided_slice %197 {offsets = [0, 32], sizes = [2, 224], strides = [1, 1]} : vector<2x256xf32> to vector<2x224xf32>
    %200 = arith.maximumf %194, %195 : vector<2x224xf32>
    %201 = arith.maximumf %198, %199 : vector<2x224xf32>
    %202 = arith.maximumf %200, %201 : vector<2x224xf32>
    %203 = tpu.concatenate %169, %180, %191, %202 in 1 : vector<2x224xf32>, vector<2x224xf32>, vector<2x224xf32>, vector<2x224xf32> -> vector<2x896xf32>
    %c0_188 = arith.constant 0 : index
    %c0_189 = arith.constant 0 : index
    %204 = vector.load %arg6[%c0_188, %c0_189] : memref<896x256xf32, #tpu.memory_space<vmem>>, vector<896x256xf32>
    %cst_190 = arith.constant dense<0.000000e+00> : vector<2x256xf32>
    %205 = tpu.matmul %203, %204, %cst_190 {dimension_numbers = #tpu.dot_dimension_numbers<[1], [0], [0], [1], [0, 0, 1, 1], [], []>} : vector<2x896xf32>, vector<896x256xf32>, vector<2x256xf32> -> vector<2x256xf32>
    %c0_191 = arith.constant 0 : index
    %c0_192 = arith.constant 0 : index
    %206 = vector.load %arg7[%c0_191, %c0_192] : memref<1x256xf32, #tpu.memory_space<vmem>>, vector<1x256xf32>
    %207 = vector.broadcast %206 : vector<1x256xf32> to vector<2x256xf32>
    %208 = arith.addf %205, %207 : vector<2x256xf32>
    %cst_193 = arith.constant 0.000000e+00 : f32
    %209 = vector.broadcast %cst_193 : f32 to vector<2x256xf32>
    %210 = arith.maximumf %208, %209 : vector<2x256xf32>
    %c0_194 = arith.constant 0 : index
    %c0_195 = arith.constant 0 : index
    %211 = vector.load %arg8[%c0_194, %c0_195] : memref<256x128xf32, #tpu.memory_space<vmem>>, vector<256x128xf32>
    %cst_196 = arith.constant dense<0.000000e+00> : vector<2x128xf32>
    %212 = tpu.matmul %210, %211, %cst_196 {dimension_numbers = #tpu.dot_dimension_numbers<[1], [0], [0], [1], [0, 0, 1, 1], [], []>} : vector<2x256xf32>, vector<256x128xf32>, vector<2x128xf32> -> vector<2x128xf32>
    %c0_197 = arith.constant 0 : index
    %c0_198 = arith.constant 0 : index
    %213 = vector.load %arg9[%c0_197, %c0_198] : memref<1x128xf32, #tpu.memory_space<vmem>>, vector<1x128xf32>
    %214 = vector.broadcast %213 : vector<1x128xf32> to vector<2x128xf32>
    %215 = arith.addf %212, %214 : vector<2x128xf32>
    %c0_199 = arith.constant 0 : index
    %c0_200 = arith.constant 0 : index
    %216 = vector.load %arg10[%c0_199, %c0_200] : memref<2x128xf32, #tpu.memory_space<vmem>>, vector<2x128xf32>
    tpu.vector_store %arg10[%c0_199, %c0_200], %215 {strides = array<i32>} : memref<2x128xf32, #tpu.memory_space<vmem>>, vector<2x128xf32>,
    return
  }
  func.func @transform_0(%arg0: i32) -> (i32, i32, i32, i32) {
    %c0_i32 = arith.constant 0 : i32
    %c0_i32_0 = arith.constant 0 : i32
    %c0_i32_1 = arith.constant 0 : i32
    %c0_i32_2 = arith.constant 0 : i32
    return %arg0, %c0_i32, %c0_i32_0, %c0_i32_1 : i32, i32, i32, i32
  }
  func.func @transform_1(%arg0: i32) -> (i32, i32) {
    %c0_i32 = arith.constant 0 : i32
    %c0_i32_0 = arith.constant 0 : i32
    %c0_i32_1 = arith.constant 0 : i32
    return %c0_i32, %c0_i32_0 : i32, i32
  }
  func.func @transform_2(%arg0: i32) -> (i32, i32) {
    %c0_i32 = arith.constant 0 : i32
    %c0_i32_0 = arith.constant 0 : i32
    %c0_i32_1 = arith.constant 0 : i32
    return %c0_i32, %c0_i32_0 : i32, i32
  }
  func.func @transform_3(%arg0: i32) -> (i32, i32) {
    %c0_i32 = arith.constant 0 : i32
    %c0_i32_0 = arith.constant 0 : i32
    %c0_i32_1 = arith.constant 0 : i32
    return %c0_i32, %c0_i32_0 : i32, i32
  }
  func.func @transform_4(%arg0: i32) -> (i32, i32) {
    %c0_i32 = arith.constant 0 : i32
    %c0_i32_0 = arith.constant 0 : i32
    %c0_i32_1 = arith.constant 0 : i32
    return %c0_i32, %c0_i32_0 : i32, i32
  }
  func.func @transform_5(%arg0: i32) -> (i32, i32) {
    %c0_i32 = arith.constant 0 : i32
    %c0_i32_0 = arith.constant 0 : i32
    %c0_i32_1 = arith.constant 0 : i32
    return %c0_i32, %c0_i32_0 : i32, i32
  }
  func.func @transform_6(%arg0: i32) -> (i32, i32) {
    %c0_i32 = arith.constant 0 : i32
    %c0_i32_0 = arith.constant 0 : i32
    %c0_i32_1 = arith.constant 0 : i32
    return %c0_i32, %c0_i32_0 : i32, i32
  }
  func.func @transform_7(%arg0: i32) -> (i32, i32) {
    %c0_i32 = arith.constant 0 : i32
    %c0_i32_0 = arith.constant 0 : i32
    %c0_i32_1 = arith.constant 0 : i32
    return %c0_i32, %c0_i32_0 : i32, i32
  }
  func.func @transform_8(%arg0: i32) -> (i32, i32) {
    %c0_i32 = arith.constant 0 : i32
    %c0_i32_0 = arith.constant 0 : i32
    %c0_i32_1 = arith.constant 0 : i32
    return %c0_i32, %c0_i32_0 : i32, i32
  }
  func.func @transform_9(%arg0: i32) -> (i32, i32) {
    %c0_i32 = arith.constant 0 : i32
    %c0_i32_0 = arith.constant 0 : i32
    return %arg0, %c0_i32 : i32, i32
  }
}

</mosaic_0001>

<llo_original>
// kernel: actor_critic_forward.1
$region0: #{actor_critic_forward.1}
  #allocation0 [shape = 'u32[]', space=smem, size = 0x4, offset = 0x4, fixed_abs, tag = 'smem constant byte address 0x4 - core index']
  #allocation1 [shape = 'u32[144,128]{1,0:T(1,128)}', space=vmem, size = 0x12000, scoped, tag = 'internal scratch']
  #allocation2 [shape = 'f32[2,10,320]{2,1,0:T(8,128)}', space=vmem, size = 0xc000, scoped, tag = 'scratch operand']
  %s0 = inlined_call_operand.vmem [shape: f32[2,8,9,32], index: 0, kind: input, shape index: {}]
  %s1 = inlined_call_operand.vmem [shape: f32[288,256], index: 1, kind: input, shape index: {}]
  %s2 = inlined_call_operand.vmem [shape: f32[1,256], index: 2, kind: input, shape index: {}]
  %s3 = inlined_call_operand.vmem [shape: f32[2304,256], index: 3, kind: input, shape index: {}]
  %s4 = inlined_call_operand.vmem [shape: f32[1,256], index: 4, kind: input, shape index: {}]
  %s5 = inlined_call_operand.hbm [shape: f32[896,256], index: 5, kind: input, shape index: {}]
  %s6 = inlined_call_operand.vmem [shape: f32[1,256], index: 6, kind: input, shape index: {}]
  %s7 = inlined_call_operand.hbm [shape: f32[256,128], index: 7, kind: input, shape index: {}]
  %s8 = inlined_call_operand.vmem [shape: f32[1,128], index: 8, kind: input, shape index: {}]
  %s9 = inlined_call_operand.vmem [shape: f32[2,128], index: 9, kind: output, shape index: {}]
  %s10 = sld [smem:[#allocation0]]
  $region54: #{actor_critic_forward.1} parent=0
    _
  %s12 = ssub.s32 1, %s10
  %s13 = scalar_select 0, %s12, %s10
  $region1: #{actor_critic_forward.1} parent=0
    #allocation3 [shape = 'u8[917504]{0}', space=vmem, size = 0xe0000, scoped, tag = 'input window, operand 5, single buffered']
    #allocation4 [shape = 's32[1]{0}', space=sflag, size = 0x4, scoped, tag = 'scoped memory for actor_critic_forward.1']
    #allocation5 [shape = 'u8[131072]{0}', space=vmem, size = 0x20000, scoped, tag = 'input window, operand 7, single buffered']
    #allocation6 [shape = 's32[1]{0}', space=sflag, size = 0x4, scoped, tag = 'scoped memory for actor_critic_forward.1']
    %14 = vsyncpa [#allocation4], 0
    %15 = vsyncpa [#allocation6], 0
    // Predicated region
    $region2: #{actor_critic_forward.1} parent=1 // pred_check
      _
    $region3: #{actor_critic_forward.1} parent=1 // pred_check_branch
      %17 = sbr.rel (0) target = $region5
    $region4: #{actor_critic_forward.1} parent=1 // pred_region
      _
    $region5: #{actor_critic_forward.1} parent=1 // pred_fallthru
      _
    // Predicated region
    $region6: #{actor_critic_forward.1} parent=1 // pred_check
      _
    $region7: #{actor_critic_forward.1} parent=1 // pred_check_branch
      %19 = sbr.rel (0) target = $region9
    $region8: #{actor_critic_forward.1} parent=1 // pred_region
      _
    $region9: #{actor_critic_forward.1} parent=1 // pred_fallthru
      _
    // Predicated region
    $region10: #{actor_critic_forward.1} parent=1 // pred_check
      _
    $region11: #{actor_critic_forward.1} parent=1 // pred_check_branch
      %21 = sbr.rel (0) target = $region13
    $region12: #{actor_critic_forward.1} parent=1 // pred_region
      _
    $region13: #{actor_critic_forward.1} parent=1 // pred_fallthru
      _
    // Predicated region
    $region14: #{actor_critic_forward.1} parent=1 // pred_check
      _
    $region15: #{actor_critic_forward.1} parent=1 // pred_check_branch
      %23 = sbr.rel (0) target = $region17
    $region16: #{actor_critic_forward.1} parent=1 // pred_region
      _
    $region17: #{actor_critic_forward.1} parent=1 // pred_fallthru
      _
    // Predicated region
    $region18: #{actor_critic_forward.1} parent=1 // pred_check
      _
    $region19: #{actor_critic_forward.1} parent=1 // pred_check_branch
      %25 = sbr.rel (0) target = $region21
    $region20: #{actor_critic_forward.1} parent=1 // pred_region
      _
    $region21: #{actor_critic_forward.1} parent=1 // pred_fallthru
      _
    // Predicated region
    $region22: #{actor_critic_forward.1} parent=1 // pred_check
      _
    $region23: #{actor_critic_forward.1} parent=1 // pred_check_branch
      %27 = sbr.rel (0) target = $region25
    $region24: #{actor_critic_forward.1} parent=1 // pred_region
      %s29 = ssub.s32 28672, 28672
      %30 = vsyncadd [#allocation4], %s29
      %s31 = sshll.u32 [#allocation3], 4
      %s32 = int_to_ptr.vmem [resolvable:$true] %s31
      %37 = dma.hbm_to_vmem [thread:$0]  %s5, 28672, %s32, [#allocation4], 256, 256, 16
    $region25: #{actor_critic_forward.1} parent=1 // pred_fallthru
      _
    // Predicated region
    $region26: #{actor_critic_forward.1} parent=1 // pred_check
      _
    $region27: #{actor_critic_forward.1} parent=1 // pred_check_branch
      %39 = sbr.rel (0) target = $region29
    $region28: #{actor_critic_forward.1} parent=1 // pred_region
      _
    $region29: #{actor_critic_forward.1} parent=1 // pred_fallthru
      _
    // Predicated region
    $region30: #{actor_critic_forward.1} parent=1 // pred_check
      _
    $region31: #{actor_critic_forward.1} parent=1 // pred_check_branch
      %41 = sbr.rel (0) target = $region33
    $region32: #{actor_critic_forward.1} parent=1 // pred_region
      %s43 = ssub.s32 4096, 4096
      %44 = vsyncadd [#allocation6], %s43
      %s45 = sshll.u32 [#allocation5], 4
      %s46 = int_to_ptr.vmem [resolvable:$true] %s45
      %51 = dma.hbm_to_vmem [thread:$0]  %s7, 4096, %s46, [#allocation6], 128, 128, 8
    $region33: #{actor_critic_forward.1} parent=1 // pred_fallthru
      _
    // Predicated region
    $region34: #{actor_critic_forward.1} parent=1 // pred_check
      _
    $region35: #{actor_critic_forward.1} parent=1 // pred_check_branch
      %53 = sbr.rel (0) target = $region37
    $region36: #{actor_critic_forward.1} parent=1 // pred_region
      _
    $region37: #{actor_critic_forward.1} parent=1 // pred_fallthru
      _
    // Predicated region
    $region38: #{actor_critic_forward.1} parent=1 // pred_check
      _
    $region39: #{actor_critic_forward.1} parent=1 // pred_check_branch
      %55 = sbr.rel (0) target = $region41
    $region40: #{actor_critic_forward.1} parent=1 // pred_region
      %56 = dma.done [#allocation4], 28672
    $region41: #{actor_critic_forward.1} parent=1 // pred_fallthru
      _
    // Predicated region
    $region42: #{actor_critic_forward.1} parent=1 // pred_check
      _
    $region43: #{actor_critic_forward.1} parent=1 // pred_check_branch
      %58 = sbr.rel (0) target = $region45
    $region44: #{actor_critic_forward.1} parent=1 // pred_region
      %59 = dma.done [#allocation6], 4096
    $region45: #{actor_critic_forward.1} parent=1 // pred_fallthru
      _
    %v60 = vld [vmem:[%s0] sm:$0xff]
    %v61 = vld [vmem:[%s0 + $0x80] sm:$0xff]
    %s62 = scalar_lea.vmem %s0, 32
    %v63 = vld [vmem:[%s62] sm:$0xff]
    %v64 = vld [vmem:[%s62 + $0x80] sm:$0xff]
    %s65 = scalar_lea.vmem %s0, 16
    %v66 = vld [vmem:[%s65] sm:$0xff]
    %v67 = vld [vmem:[%s65 + $0x80] sm:$0xff]
    %s68 = scalar_lea.vmem %s0, 64
    %v69 = vld [vmem:[%s68] sm:$0xff]
    %v70 = vld [vmem:[%s68 + $0x80] sm:$0xff]
    %s71 = scalar_lea.vmem %s0, 96
    %v72 = vld [vmem:[%s71] sm:$0xff]
    %v73 = vld [vmem:[%s71 + $0x80] sm:$0xff]
    %s74 = scalar_lea.vmem %s0, 80
    %v75 = vld [vmem:[%s74] sm:$0xff]
    %v76 = vld [vmem:[%s74 + $0x80] sm:$0xff]
    %v77 = vld [vmem:[%s0 + $0x1] sm:$0xff]
    %v78 = vld [vmem:[%s0 + $0x81] sm:$0xff]
    %v79 = vld [vmem:[%s62 + $0x1] sm:$0xff]
    %v80 = vld [vmem:[%s62 + $0x81] sm:$0xff]
    %v81 = vld [vmem:[%s65 + $0x1] sm:$0xff]
    %v82 = vld [vmem:[%s65 + $0x81] sm:$0xff]
    %85 = vrot.lane.b32.xlu0 %v63, 32
    %v86 = vpop.permute.xlu0 %85
    %87 = vrot.lane.b32.xlu0 %v64, 32
    %v88 = vpop.permute.xlu0 %87
    %93 = vrot.lane.b32.xlu0 %v66, 64
    %v94 = vpop.permute.xlu0 %93
    %95 = vrot.lane.b32.xlu0 %v67, 64
    %v96 = vpop.permute.xlu0 %95
    %101 = vrot.lane.b32.xlu0 %v69, 96
    %v102 = vpop.permute.xlu0 %101
    %103 = vrot.lane.b32.xlu0 %v70, 96
    %v104 = vpop.permute.xlu0 %103
    %109 = vrot.lane.b32.xlu0 %v75, 32
    %v110 = vpop.permute.xlu0 %109
    %111 = vrot.lane.b32.xlu0 %v76, 32
    %v112 = vpop.permute.xlu0 %111
    %117 = vrot.lane.b32.xlu0 %v77, 64
    %v118 = vpop.permute.xlu0 %117
    %119 = vrot.lane.b32.xlu0 %v78, 64
    %v120 = vpop.permute.xlu0 %119
    %125 = vrot.lane.b32.xlu0 %v79, 96
    %v126 = vpop.permute.xlu0 %125
    %127 = vrot.lane.b32.xlu0 %v80, 96
    %v128 = vpop.permute.xlu0 %127
    %vm131 = vcmask 261120
    %v132 = vsel %vm131, %v60, %v86
    %v133 = vsel %vm131, %v61, %v88
    %vm134 = vcmask 523264
    %v135 = vsel %vm134, %v132, %v94
    %v136 = vsel %vm134, %v133, %v96
    %vm137 = vcmask 785408
    %v138 = vsel %vm137, %v135, %v102
    %v139 = vsel %vm137, %v136, %v104
    %v140 = vsel %vm131, %v72, %v110
    %v141 = vsel %vm131, %v73, %v112
    %v142 = vsel %vm134, %v140, %v118
    %v143 = vsel %vm134, %v141, %v120
    %v144 = vsel %vm137, %v142, %v126
    %v145 = vsel %vm137, %v143, %v128
    %v146 = vld [vmem:[%s1] sm:$0xff]
    %v147 = vld [vmem:[%s1 + $0x8] sm:$0xff]
    %v148 = vld [vmem:[%s1 + $0x10] sm:$0xff]
    %v149 = vld [vmem:[%s1 + $0x18] sm:$0xff]
    %v150 = vld [vmem:[%s1 + $0x20] sm:$0xff]
    %v151 = vld [vmem:[%s1 + $0x28] sm:$0xff]
    %v152 = vld [vmem:[%s1 + $0x30] sm:$0xff]
    %v153 = vld [vmem:[%s1 + $0x38] sm:$0xff]
    %v154 = vld [vmem:[%s1 + $0x40] sm:$0xff]
    %v155 = vld [vmem:[%s1 + $0x48] sm:$0xff]
    %v156 = vld [vmem:[%s1 + $0x50] sm:$0xff]
    %v157 = vld [vmem:[%s1 + $0x58] sm:$0xff]
    %v158 = vld [vmem:[%s1 + $0x60] sm:$0xff]
    %v159 = vld [vmem:[%s1 + $0x68] sm:$0xff]
    %v160 = vld [vmem:[%s1 + $0x70] sm:$0xff]
    %v161 = vld [vmem:[%s1 + $0x78] sm:$0xff]
    %v162 = vld [vmem:[%s1 + $0x80] sm:$0xff]
    %v163 = vld [vmem:[%s1 + $0x88] sm:$0xff]
    %v164 = vld [vmem:[%s1 + $0x90] sm:$0xff]
    %v165 = vld [vmem:[%s1 + $0x98] sm:$0xff]
    %v166 = vld [vmem:[%s1 + $0xa0] sm:$0xff]
    %v167 = vld [vmem:[%s1 + $0xa8] sm:$0xff]
    %v168 = vld [vmem:[%s1 + $0xb0] sm:$0xff]
    %v169 = vld [vmem:[%s1 + $0xb8] sm:$0xff]
    %v170 = vld [vmem:[%s1 + $0xc0] sm:$0xff]
    %v171 = vld [vmem:[%s1 + $0xc8] sm:$0xff]
    %v172 = vld [vmem:[%s1 + $0xd0] sm:$0xff]
    %v173 = vld [vmem:[%s1 + $0xd8] sm:$0xff]
    %v174 = vld [vmem:[%s1 + $0xe0] sm:$0xff]
    %v175 = vld [vmem:[%s1 + $0xe8] sm:$0xff]
    %v176 = vld [vmem:[%s1 + $0xf0] sm:$0xff]
    %v177 = vld [vmem:[%s1 + $0xf8] sm:$0xff]
    %v178 = vld [vmem:[%s1 + $0x100] sm:$0xff]
    %v179 = vld [vmem:[%s1 + $0x108] sm:$0xff]
    %v180 = vld [vmem:[%s1 + $0x110] sm:$0xff]
    %v181 = vld [vmem:[%s1 + $0x118] sm:$0xff]
    %v182 = vld [vmem:[%s1 + $0x120] sm:$0xff]
    %v183 = vld [vmem:[%s1 + $0x128] sm:$0xff]
    %v184 = vld [vmem:[%s1 + $0x130] sm:$0xff]
    %v185 = vld [vmem:[%s1 + $0x138] sm:$0xff]
    %v186 = vld [vmem:[%s1 + $0x140] sm:$0xff]
    %v187 = vld [vmem:[%s1 + $0x148] sm:$0xff]
    %v188 = vld [vmem:[%s1 + $0x150] sm:$0xff]
    %v189 = vld [vmem:[%s1 + $0x158] sm:$0xff]
    %v190 = vld [vmem:[%s1 + $0x160] sm:$0xff]
    %v191 = vld [vmem:[%s1 + $0x168] sm:$0xff]
    %v192 = vld [vmem:[%s1 + $0x170] sm:$0xff]
    %v193 = vld [vmem:[%s1 + $0x178] sm:$0xff]
    %v194 = vld [vmem:[%s1 + $0x180] sm:$0xff]
    %v195 = vld [vmem:[%s1 + $0x188] sm:$0xff]
    %v196 = vld [vmem:[%s1 + $0x190] sm:$0xff]
    %v197 = vld [vmem:[%s1 + $0x198] sm:$0xff]
    %v198 = vld [vmem:[%s1 + $0x1a0] sm:$0xff]
    %v199 = vld [vmem:[%s1 + $0x1a8] sm:$0xff]
    %v200 = vld [vmem:[%s1 + $0x1b0] sm:$0xff]
    %v201 = vld [vmem:[%s1 + $0x1b8] sm:$0xff]
    %v202 = vld [vmem:[%s1 + $0x1c0] sm:$0xff]
    %v203 = vld [vmem:[%s1 + $0x1c8] sm:$0xff]
    %v204 = vld [vmem:[%s1 + $0x1d0] sm:$0xff]
    %v205 = vld [vmem:[%s1 + $0x1d8] sm:$0xff]
    %v206 = vld [vmem:[%s1 + $0x1e0] sm:$0xff]
    %v207 = vld [vmem:[%s1 + $0x1e8] sm:$0xff]
    %v208 = vld [vmem:[%s1 + $0x1f0] sm:$0xff]
    %v209 = vld [vmem:[%s1 + $0x1f8] sm:$0xff]
    %v210 = vld [vmem:[%s1 + $0x200] sm:$0xff]
    %v211 = vld [vmem:[%s1 + $0x208] sm:$0xff]
    %v212 = vld [vmem:[%s1 + $0x210] sm:$0xff]
    %v213 = vld [vmem:[%s1 + $0x218] sm:$0xff]
    %v214 = vld [vmem:[%s1 + $0x220] sm:$0xff]
    %v215 = vld [vmem:[%s1 + $0x228] sm:$0xff]
    %v216 = vld [vmem:[%s1 + $0x230] sm:$0xff]
    %v217 = vld [vmem:[%s1 + $0x238] sm:$0xff]
    %v219 = vsel %vm131, %v81, 0
    %v222 = vsel %vm131, %v82, 0
    %224 = vmatprep.subr.mxu0 %v177
    %225 = vmatpush1.msra.mxu0 %v176
    %226 = vmatprep.subr.mxu0 %v175
    %227 = vmatpush1.msra.mxu0 %v174
    %228 = vmatprep.subr.mxu0 %v173
    %229 = vmatpush1.msra.mxu0 %v172
    %230 = vmatprep.subr.mxu0 %v171
    %231 = vmatpush1.msra.mxu0 %v170
    %232 = vmatprep.subr.mxu0 %v169
    %233 = vmatpush1.msra.mxu0 %v168
    %234 = vmatprep.subr.mxu0 %v167
    %235 = vmatpush1.msra.mxu0 %v166
    %236 = vmatprep.subr.mxu0 %v165
    %237 = vmatpush1.msra.mxu0 %v164
    %238 = vmatprep.subr.mxu0 %v163
    %239 = vmatpush1.msra.mxu0 %v162
    %240 = vmatprep.subr.mxu0 %v161
    %241 = vmatpush1.msra.mxu0 %v160
    %242 = vmatprep.subr.mxu0 %v159
    %243 = vmatpush1.msra.mxu0 %v158
    %244 = vmatprep.subr.mxu0 %v157
    %245 = vmatpush1.msra.mxu0 %v156
    %246 = vmatprep.subr.mxu0 %v155
    %247 = vmatpush1.msra.mxu0 %v154
    %248 = vmatprep.subr.mxu0 %v153
    %249 = vmatpush1.msra.mxu0 %v152
    %250 = vmatprep.subr.mxu0 %v151
    %251 = vmatpush1.msra.mxu0 %v150
    %252 = vmatprep.subr.mxu0 %v149
    %253 = vmatpush1.msra.mxu0 %v148
    %254 = vmatprep.subr.mxu0 %v147
    %255 = vmatpush1.msra.mxu0 %v146
    %256 = vmatprep.subr.mxu0 %v209
    %257 = vmatpush2.msra.mxu0 %v208
    %258 = vmatprep.subr.mxu0 %v207
    %259 = vmatpush2.msra.mxu0 %v206
    %260 = vmatprep.subr.mxu0 %v205
    %261 = vmatpush2.msra.mxu0 %v204
    %262 = vmatprep.subr.mxu0 %v203
    %263 = vmatpush2.msra.mxu0 %v202
    %264 = vmatprep.subr.mxu0 %v201
    %265 = vmatpush2.msra.mxu0 %v200
    %266 = vmatprep.subr.mxu0 %v199
    %267 = vmatpush2.msra.mxu0 %v198
    %268 = vmatprep.subr.mxu0 %v197
    %269 = vmatpush2.msra.mxu0 %v196
    %270 = vmatprep.subr.mxu0 %v195
    %271 = vmatpush2.msra.mxu0 %v194
    %272 = vmatprep.subr.mxu0 %v193
    %273 = vmatpush2.msra.mxu0 %v192
    %274 = vmatprep.subr.mxu0 %v191
    %275 = vmatpush2.msra.mxu0 %v190
    %276 = vmatprep.subr.mxu0 %v189
    %277 = vmatpush2.msra.mxu0 %v188
    %278 = vmatprep.subr.mxu0 %v187
    %279 = vmatpush2.msra.mxu0 %v186
    %280 = vmatprep.subr.mxu0 %v185
    %281 = vmatpush2.msra.mxu0 %v184
    %282 = vmatprep.subr.mxu0 %v183
    %283 = vmatpush2.msra.mxu0 %v182
    %284 = vmatprep.subr.mxu0 %v181
    %285 = vmatpush2.msra.mxu0 %v180
    %286 = vmatprep.subr.mxu0 %v179
    %287 = vmatpush2.msra.mxu0 %v178
    %288 = vmatprep.mubr.f32.mxu0 %v144
    %289 = vmatmul.mubr.f32.gmra.mxu0 %v138
    %v290 = vpop.f32.mrf.mxu0
    %v291 = vadd.f32 0.0, %v290
    %v292 = vpop.f32.mrf.mxu0
    %v293 = vadd.f32 0.0, %v292
    %294 = vmatprep.mubr.f32.mxu0 %v145
    %295 = vmatmul.mubr.f32.gmra.mxu0 %v139
    %v296 = vpop.f32.mrf.mxu0
    %v297 = vadd.f32 0.0, %v296
    %v298 = vpop.f32.mrf.mxu0
    %v299 = vadd.f32 0.0, %v298
    %300 = vdwg.mxu0
    %301 = vmatprep.subr.mxu0 0.0
    %302 = vmatpush1.msra.mxu0 0.0
    %303 = vmatprep.subr.mxu0 0.0
    %304 = vmatpush1.msra.mxu0 0.0
    %305 = vmatprep.subr.mxu0 0.0
    %306 = vmatpush1.msra.mxu0 0.0
    %307 = vmatprep.subr.mxu0 0.0
    %308 = vmatpush1.msra.mxu0 0.0
    %309 = vmatprep.subr.mxu0 0.0
    %310 = vmatpush1.msra.mxu0 0.0
    %311 = vmatprep.subr.mxu0 0.0
    %312 = vmatpush1.msra.mxu0 0.0
    %313 = vmatprep.subr.mxu0 0.0
    %314 = vmatpush1.msra.mxu0 0.0
    %315 = vmatprep.subr.mxu0 0.0
    %316 = vmatpush1.msra.mxu0 0.0
    %317 = vmatprep.subr.mxu0 0.0
    %318 = vmatpush1.msra.mxu0 0.0
    %319 = vmatprep.subr.mxu0 0.0
    %320 = vmatpush1.msra.mxu0 0.0
    %321 = vmatprep.subr.mxu0 0.0
    %322 = vmatpush1.msra.mxu0 0.0
    %323 = vmatprep.subr.mxu0 0.0
    %324 = vmatpush1.msra.mxu0 0.0
    %325 = vmatprep.subr.mxu0 %v217
    %326 = vmatpush1.msra.mxu0 %v216
    %327 = vmatprep.subr.mxu0 %v215
    %328 = vmatpush1.msra.mxu0 %v214
    %329 = vmatprep.subr.mxu0 %v213
    %330 = vmatpush1.msra.mxu0 %v212
    %331 = vmatprep.subr.mxu0 %v211
    %332 = vmatpush1.msra.mxu0 %v210
    %333 = vmatprep.subr.mxu0 0.0
    %334 = vmatpush2.msra.mxu0 0.0
    %335 = vmatprep.subr.mxu0 0.0
    %336 = vmatpush2.msra.mxu0 0.0
    %337 = vmatprep.subr.mxu0 0.0
    %338 = vmatpush2.msra.mxu0 0.0
    %339 = vmatprep.subr.mxu0 0.0
    %340 = vmatpush2.msra.mxu0 0.0
    %341 = vmatprep.subr.mxu0 0.0
    %342 = vmatpush2.msra.mxu0 0.0
    %343 = vmatprep.subr.mxu0 0.0
    %344 = vmatpush2.msra.mxu0 0.0
    %345 = vmatprep.subr.mxu0 0.0
    %346 = vmatpush2.msra.mxu0 0.0
    %347 = vmatprep.subr.mxu0 0.0
    %348 = vmatpush2.msra.mxu0 0.0
    %349 = vmatprep.subr.mxu0 0.0
    %350 = vmatpush2.msra.mxu0 0.0
    %351 = vmatprep.subr.mxu0 0.0
    %352 = vmatpush2.msra.mxu0 0.0
    %353 = vmatprep.subr.mxu0 0.0
    %354 = vmatpush2.msra.mxu0 0.0
    %355 = vmatprep.subr.mxu0 0.0
    %356 = vmatpush2.msra.mxu0 0.0
    %357 = vmatprep.subr.mxu0 0.0
    %358 = vmatpush2.msra.mxu0 0.0
    %359 = vmatprep.subr.mxu0 0.0
    %360 = vmatpush2.msra.mxu0 0.0
    %361 = vmatprep.subr.mxu0 0.0
    %362 = vmatpush2.msra.mxu0 0.0
    %363 = vmatprep.subr.mxu0 0.0
    %364 = vmatpush2.msra.mxu0 0.0
    %365 = vmatprep.mubr.f32.mxu0 0.0
    %366 = vmatmul.mubr.f32.gmra.mxu0 %v219
    %v367 = vpop.f32.mrf.mxu0
    %v368 = vadd.f32 %v291, %v367
    %v369 = vpop.f32.mrf.mxu0
    %v370 = vadd.f32 %v293, %v369
    %371 = vmatprep.mubr.f32.mxu0 0.0
    %372 = vmatmul.mubr.f32.gmra.mxu0 %v222
    %v373 = vpop.f32.mrf.mxu0
    %v374 = vadd.f32 %v297, %v373
    %v375 = vpop.f32.mrf.mxu0
    %v376 = vadd.f32 %v299, %v375
    %377 = vdwg.mxu0
    %s378 = scalar_lea.vmem %s0, 48
    %v379 = vld [vmem:[%s378] sm:$0xff]
    %v380 = vld [vmem:[%s378 + $0x80] sm:$0xff]
    %s381 = scalar_lea.vmem %s0, 112
    %v382 = vld [vmem:[%s381] sm:$0xff]
    %v383 = vld [vmem:[%s381 + $0x80] sm:$0xff]
    %v384 = vld [vmem:[%s378 + $0x1] sm:$0xff]
    %v385 = vld [vmem:[%s378 + $0x81] sm:$0xff]
    %386 = vrot.lane.b32.xlu0 %v66, 32
    %v387 = vpop.permute.xlu0 %386
    %388 = vrot.lane.b32.xlu0 %v67, 32
    %v389 = vpop.permute.xlu0 %388
    %394 = vrot.lane.b32.xlu0 %v379, 64
    %v395 = vpop.permute.xlu0 %394
    %396 = vrot.lane.b32.xlu0 %v380, 64
    %v397 = vpop.permute.xlu0 %396
    %402 = vrot.lane.b32.xlu0 %v72, 96
    %v403 = vpop.permute.xlu0 %402
    %404 = vrot.lane.b32.xlu0 %v73, 96
    %v405 = vpop.permute.xlu0 %404
    %410 = vrot.lane.b32.xlu0 %v382, 32
    %v411 = vpop.permute.xlu0 %410
    %412 = vrot.lane.b32.xlu0 %v383, 32
    %v413 = vpop.permute.xlu0 %412
    %416 = vrot.lane.b32.xlu0 %v79, 64
    %v417 = vpop.permute.xlu0 %416
    %418 = vrot.lane.b32.xlu0 %v80, 64
    %v419 = vpop.permute.xlu0 %418
    %422 = vrot.lane.b32.xlu0 %v81, 96
    %v423 = vpop.permute.xlu0 %422
    %424 = vrot.lane.b32.xlu0 %v82, 96
    %v425 = vpop.permute.xlu0 %424
    %v428 = vsel %vm131, %v63, %v387
    %v429 = vsel %vm131, %v64, %v389
    %v430 = vsel %vm134, %v428, %v395
    %v431 = vsel %vm134, %v429, %v397
    %v432 = vsel %vm137, %v430, %v403
    %v433 = vsel %vm137, %v431, %v405
    %v434 = vsel %vm131, %v75, %v411
    %v435 = vsel %vm131, %v76, %v413
    %v436 = vsel %vm134, %v434, %v417
    %v437 = vsel %vm134, %v435, %v419
    %v438 = vsel %vm137, %v436, %v423
    %v439 = vsel %vm137, %v437, %v425
    %v441 = vsel %vm131, %v384, 0
    %v444 = vsel %vm131, %v385, 0
    %446 = vmatprep.subr.mxu0 %v177
    %447 = vmatpush1.msra.mxu0 %v176
    %448 = vmatprep.subr.mxu0 %v175
    %449 = vmatpush1.msra.mxu0 %v174
    %450 = vmatprep.subr.mxu0 %v173
    %451 = vmatpush1.msra.mxu0 %v172
    %452 = vmatprep.subr.mxu0 %v171
    %453 = vmatpush1.msra.mxu0 %v170
    %454 = vmatprep.subr.mxu0 %v169
    %455 = vmatpush1.msra.mxu0 %v168
    %456 = vmatprep.subr.mxu0 %v167
    %457 = vmatpush1.msra.mxu0 %v166
    %458 = vmatprep.subr.mxu0 %v165
    %459 = vmatpush1.msra.mxu0 %v164
    %460 = vmatprep.subr.mxu0 %v163
    %461 = vmatpush1.msra.mxu0 %v162
    %462 = vmatprep.subr.mxu0 %v161
    %463 = vmatpush1.msra.mxu0 %v160
    %464 = vmatprep.subr.mxu0 %v159
    %465 = vmatpush1.msra.mxu0 %v158
    %466 = vmatprep.subr.mxu0 %v157
    %467 = vmatpush1.msra.mxu0 %v156
    %468 = vmatprep.subr.mxu0 %v155
    %469 = vmatpush1.msra.mxu0 %v154
    %470 = vmatprep.subr.mxu0 %v153
    %471 = vmatpush1.msra.mxu0 %v152
    %472 = vmatprep.subr.mxu0 %v151
    %473 = vmatpush1.msra.mxu0 %v150
    %474 = vmatprep.subr.mxu0 %v149
    %475 = vmatpush1.msra.mxu0 %v148
    %476 = vmatprep.subr.mxu0 %v147
    %477 = vmatpush1.msra.mxu0 %v146
    %478 = vmatprep.subr.mxu0 %v209
    %479 = vmatpush2.msra.mxu0 %v208
    %480 = vmatprep.subr.mxu0 %v207
    %481 = vmatpush2.msra.mxu0 %v206
    %482 = vmatprep.subr.mxu0 %v205
    %483 = vmatpush2.msra.mxu0 %v204
    %484 = vmatprep.subr.mxu0 %v203
    %485 = vmatpush2.msra.mxu0 %v202
    %486 = vmatprep.subr.mxu0 %v201
    %487 = vmatpush2.msra.mxu0 %v200
    %488 = vmatprep.subr.mxu0 %v199
    %489 = vmatpush2.msra.mxu0 %v198
    %490 = vmatprep.subr.mxu0 %v197
    %491 = vmatpush2.msra.mxu0 %v196
    %492 = vmatprep.subr.mxu0 %v195
    %493 = vmatpush2.msra.mxu0 %v194
    %494 = vmatprep.subr.mxu0 %v193
    %495 = vmatpush2.msra.mxu0 %v192
    %496 = vmatprep.subr.mxu0 %v191
    %497 = vmatpush2.msra.mxu0 %v190
    %498 = vmatprep.subr.mxu0 %v189
    %499 = vmatpush2.msra.mxu0 %v188
    %500 = vmatprep.subr.mxu0 %v187
    %501 = vmatpush2.msra.mxu0 %v186
    %502 = vmatprep.subr.mxu0 %v185
    %503 = vmatpush2.msra.mxu0 %v184
    %504 = vmatprep.subr.mxu0 %v183
    %505 = vmatpush2.msra.mxu0 %v182
    %506 = vmatprep.subr.mxu0 %v181
    %507 = vmatpush2.msra.mxu0 %v180
    %508 = vmatprep.subr.mxu0 %v179
    %509 = vmatpush2.msra.mxu0 %v178
    %510 = vmatprep.mubr.f32.mxu0 %v438
    %511 = vmatmul.mubr.f32.gmra.mxu0 %v432
    %v512 = vpop.f32.mrf.mxu0
    %v513 = vadd.f32 0.0, %v512
    %v514 = vpop.f32.mrf.mxu0
    %v515 = vadd.f32 0.0, %v514
    %516 = vmatprep.mubr.f32.mxu0 %v439
    %517 = vmatmul.mubr.f32.gmra.mxu0 %v433
    %v518 = vpop.f32.mrf.mxu0
    %v519 = vadd.f32 0.0, %v518
    %v520 = vpop.f32.mrf.mxu0
    %v521 = vadd.f32 0.0, %v520
    %522 = vdwg.mxu0
    %523 = vmatprep.subr.mxu0 0.0
    %524 = vmatpush1.msra.mxu0 0.0
    %525 = vmatprep.subr.mxu0 0.0
    %526 = vmatpush1.msra.mxu0 0.0
    %527 = vmatprep.subr.mxu0 0.0
    %528 = vmatpush1.msra.mxu0 0.0
    %529 = vmatprep.subr.mxu0 0.0
    %530 = vmatpush1.msra.mxu0 0.0
    %531 = vmatprep.subr.mxu0 0.0
    %532 = vmatpush1.msra.mxu0 0.0
    %533 = vmatprep.subr.mxu0 0.0
    %534 = vmatpush1.msra.mxu0 0.0
    %535 = vmatprep.subr.mxu0 0.0
    %536 = vmatpush1.msra.mxu0 0.0
    %537 = vmatprep.subr.mxu0 0.0
    %538 = vmatpush1.msra.mxu0 0.0
    %539 = vmatprep.subr.mxu0 0.0
    %540 = vmatpush1.msra.mxu0 0.0
    %541 = vmatprep.subr.mxu0 0.0
    %542 = vmatpush1.msra.mxu0 0.0
    %543 = vmatprep.subr.mxu0 0.0
    %544 = vmatpush1.msra.mxu0 0.0
    %545 = vmatprep.subr.mxu0 0.0
    %546 = vmatpush1.msra.mxu0 0.0
    %547 = vmatprep.subr.mxu0 %v217
    %548 = vmatpush1.msra.mxu0 %v216
    %549 = vmatprep.subr.mxu0 %v215
    %550 = vmatpush1.msra.mxu0 %v214
    %551 = vmatprep.subr.mxu0 %v213
    %552 = vmatpush1.msra.mxu0 %v212
    %553 = vmatprep.subr.mxu0 %v211
    %554 = vmatpush1.msra.mxu0 %v210
    %555 = vmatprep.subr.mxu0 0.0
    %556 = vmatpush2.msra.mxu0 0.0
    %557 = vmatprep.subr.mxu0 0.0
    %558 = vmatpush2.msra.mxu0 0.0
    %559 = vmatprep.subr.mxu0 0.0
    %560 = vmatpush2.msra.mxu0 0.0
    %561 = vmatprep.subr.mxu0 0.0
    %562 = vmatpush2.msra.mxu0 0.0
    %563 = vmatprep.subr.mxu0 0.0
    %564 = vmatpush2.msra.mxu0 0.0
    %565 = vmatprep.subr.mxu0 0.0
    %566 = vmatpush2.msra.mxu0 0.0
    %567 = vmatprep.subr.mxu0 0.0
    %568 = vmatpush2.msra.mxu0 0.0
    %569 = vmatprep.subr.mxu0 0.0
    %570 = vmatpush2.msra.mxu0 0.0
    %571 = vmatprep.subr.mxu0 0.0
    %572 = vmatpush2.msra.mxu0 0.0
    %573 = vmatprep.subr.mxu0 0.0
    %574 = vmatpush2.msra.mxu0 0.0
    %575 = vmatprep.subr.mxu0 0.0
    %576 = vmatpush2.msra.mxu0 0.0
    %577 = vmatprep.subr.mxu0 0.0
    %578 = vmatpush2.msra.mxu0 0.0
    %579 = vmatprep.subr.mxu0 0.0
    %580 = vmatpush2.msra.mxu0 0.0
    %581 = vmatprep.subr.mxu0 0.0
    %582 = vmatpush2.msra.mxu0 0.0
    %583 = vmatprep.subr.mxu0 0.0
    %584 = vmatpush2.msra.mxu0 0.0
    %585 = vmatprep.subr.mxu0 0.0
    %586 = vmatpush2.msra.mxu0 0.0
    %587 = vmatprep.mubr.f32.mxu0 0.0
    %588 = vmatmul.mubr.f32.gmra.mxu0 %v441
    %v589 = vpop.f32.mrf.mxu0
    %v590 = vadd.f32 %v513, %v589
    %v591 = vpop.f32.mrf.mxu0
    %v592 = vadd.f32 %v515, %v591
    %593 = vmatprep.mubr.f32.mxu0 0.0
    %594 = vmatmul.mubr.f32.gmra.mxu0 %v444
    %v595 = vpop.f32.mrf.mxu0
    %v596 = vadd.f32 %v519, %v595
    %v597 = vpop.f32.mrf.mxu0
    %v598 = vadd.f32 %v521, %v597
    %599 = vdwg.mxu0
    %v600 = vld [vmem:[%s68 + $0x1] sm:$0xff]
    %v601 = vld [vmem:[%s68 + $0x81] sm:$0xff]
    %v602 = vld [vmem:[%s71 + $0x1] sm:$0xff]
    %v603 = vld [vmem:[%s71 + $0x81] sm:$0xff]
    %v604 = vld [vmem:[%s74 + $0x1] sm:$0xff]
    %v605 = vld [vmem:[%s74 + $0x81] sm:$0xff]
    %606 = vrot.lane.b32.xlu0 %v72, 32
    %v607 = vpop.permute.xlu0 %606
    %608 = vrot.lane.b32.xlu0 %v73, 32
    %v609 = vpop.permute.xlu0 %608
    %612 = vrot.lane.b32.xlu0 %v75, 64
    %v613 = vpop.permute.xlu0 %612
    %614 = vrot.lane.b32.xlu0 %v76, 64
    %v615 = vpop.permute.xlu0 %614
    %618 = vrot.lane.b32.xlu0 %v77, 96
    %v619 = vpop.permute.xlu0 %618
    %620 = vrot.lane.b32.xlu0 %v78, 96
    %v621 = vpop.permute.xlu0 %620
    %624 = vrot.lane.b32.xlu0 %v81, 32
    %v625 = vpop.permute.xlu0 %624
    %626 = vrot.lane.b32.xlu0 %v82, 32
    %v627 = vpop.permute.xlu0 %626
    %632 = vrot.lane.b32.xlu0 %v600, 64
    %v633 = vpop.permute.xlu0 %632
    %634 = vrot.lane.b32.xlu0 %v601, 64
    %v635 = vpop.permute.xlu0 %634
    %640 = vrot.lane.b32.xlu0 %v602, 96
    %v641 = vpop.permute.xlu0 %640
    %642 = vrot.lane.b32.xlu0 %v603, 96
    %v643 = vpop.permute.xlu0 %642
    %v646 = vsel %vm131, %v69, %v607
    %v647 = vsel %vm131, %v70, %v609
    %v648 = vsel %vm134, %v646, %v613
    %v649 = vsel %vm134, %v647, %v615
    %v650 = vsel %vm137, %v648, %v619
    %v651 = vsel %vm137, %v649, %v621
    %v652 = vsel %vm131, %v79, %v625
    %v653 = vsel %vm131, %v80, %v627
    %v654 = vsel %vm134, %v652, %v633
    %v655 = vsel %vm134, %v653, %v635
    %v656 = vsel %vm137, %v654, %v641
    %v657 = vsel %vm137, %v655, %v643
    %v659 = vsel %vm131, %v604, 0
    %v662 = vsel %vm131, %v605, 0
    %664 = vmatprep.subr.mxu0 %v177
    %665 = vmatpush1.msra.mxu0 %v176
    %666 = vmatprep.subr.mxu0 %v175
    %667 = vmatpush1.msra.mxu0 %v174
    %668 = vmatprep.subr.mxu0 %v173
    %669 = vmatpush1.msra.mxu0 %v172
    %670 = vmatprep.subr.mxu0 %v171
    %671 = vmatpush1.msra.mxu0 %v170
    %672 = vmatprep.subr.mxu0 %v169
    %673 = vmatpush1.msra.mxu0 %v168
    %674 = vmatprep.subr.mxu0 %v167
    %675 = vmatpush1.msra.mxu0 %v166
    %676 = vmatprep.subr.mxu0 %v165
    %677 = vmatpush1.msra.mxu0 %v164
    %678 = vmatprep.subr.mxu0 %v163
    %679 = vmatpush1.msra.mxu0 %v162
    %680 = vmatprep.subr.mxu0 %v161
    %681 = vmatpush1.msra.mxu0 %v160
    %682 = vmatprep.subr.mxu0 %v159
    %683 = vmatpush1.msra.mxu0 %v158
    %684 = vmatprep.subr.mxu0 %v157
    %685 = vmatpush1.msra.mxu0 %v156
    %686 = vmatprep.subr.mxu0 %v155
    %687 = vmatpush1.msra.mxu0 %v154
    %688 = vmatprep.subr.mxu0 %v153
    %689 = vmatpush1.msra.mxu0 %v152
    %690 = vmatprep.subr.mxu0 %v151
    %691 = vmatpush1.msra.mxu0 %v150
    %692 = vmatprep.subr.mxu0 %v149
    %693 = vmatpush1.msra.mxu0 %v148
    %694 = vmatprep.subr.mxu0 %v147
    %695 = vmatpush1.msra.mxu0 %v146
    %696 = vmatprep.subr.mxu0 %v209
    %697 = vmatpush2.msra.mxu0 %v208
    %698 = vmatprep.subr.mxu0 %v207
    %699 = vmatpush2.msra.mxu0 %v206
    %700 = vmatprep.subr.mxu0 %v205
    %701 = vmatpush2.msra.mxu0 %v204
    %702 = vmatprep.subr.mxu0 %v203
    %703 = vmatpush2.msra.mxu0 %v202
    %704 = vmatprep.subr.mxu0 %v201
    %705 = vmatpush2.msra.mxu0 %v200
    %706 = vmatprep.subr.mxu0 %v199
    %707 = vmatpush2.msra.mxu0 %v198
    %708 = vmatprep.subr.mxu0 %v197
    %709 = vmatpush2.msra.mxu0 %v196
    %710 = vmatprep.subr.mxu0 %v195
    %711 = vmatpush2.msra.mxu0 %v194
    %712 = vmatprep.subr.mxu0 %v193
    %713 = vmatpush2.msra.mxu0 %v192
    %714 = vmatprep.subr.mxu0 %v191
    %715 = vmatpush2.msra.mxu0 %v190
    %716 = vmatprep.subr.mxu0 %v189
    %717 = vmatpush2.msra.mxu0 %v188
    %718 = vmatprep.subr.mxu0 %v187
    %719 = vmatpush2.msra.mxu0 %v186
    %720 = vmatprep.subr.mxu0 %v185
    %721 = vmatpush2.msra.mxu0 %v184
    %722 = vmatprep.subr.mxu0 %v183
    %723 = vmatpush2.msra.mxu0 %v182
    %724 = vmatprep.subr.mxu0 %v181
    %725 = vmatpush2.msra.mxu0 %v180
    %726 = vmatprep.subr.mxu0 %v179
    %727 = vmatpush2.msra.mxu0 %v178
    %728 = vmatprep.mubr.f32.mxu0 %v656
    %729 = vmatmul.mubr.f32.gmra.mxu0 %v650
    %v730 = vpop.f32.mrf.mxu0
    %v731 = vadd.f32 0.0, %v730
    %v732 = vpop.f32.mrf.mxu0
    %v733 = vadd.f32 0.0, %v732
    %734 = vmatprep.mubr.f32.mxu0 %v657
    %735 = vmatmul.mubr.f32.gmra.mxu0 %v651
    %v736 = vpop.f32.mrf.mxu0
    %v737 = vadd.f32 0.0, %v736
    %v738 = vpop.f32.mrf.mxu0
    %v739 = vadd.f32 0.0, %v738
    %740 = vdwg.mxu0
    %741 = vmatprep.subr.mxu0 0.0
    %742 = vmatpush1.msra.mxu0 0.0
    %743 = vmatprep.subr.mxu0 0.0
    %744 = vmatpush1.msra.mxu0 0.0
    %745 = vmatprep.subr.mxu0 0.0
    %746 = vmatpush1.msra.mxu0 0.0
    %747 = vmatprep.subr.mxu0 0.0
    %748 = vmatpush1.msra.mxu0 0.0
    %749 = vmatprep.subr.mxu0 0.0
    %750 = vmatpush1.msra.mxu0 0.0
    %751 = vmatprep.subr.mxu0 0.0
    %752 = vmatpush1.msra.mxu0 0.0
    %753 = vmatprep.subr.mxu0 0.0
    %754 = vmatpush1.msra.mxu0 0.0
    %755 = vmatprep.subr.mxu0 0.0
    %756 = vmatpush1.msra.mxu0 0.0
    %757 = vmatprep.subr.mxu0 0.0
    %758 = vmatpush1.msra.mxu0 0.0
    %759 = vmatprep.subr.mxu0 0.0
    %760 = vmatpush1.msra.mxu0 0.0
    %761 = vmatprep.subr.mxu0 0.0
    %762 = vmatpush1.msra.mxu0 0.0
    %763 = vmatprep.subr.mxu0 0.0
    %764 = vmatpush1.msra.mxu0 0.0
    %765 = vmatprep.subr.mxu0 %v217
    %766 = vmatpush1.msra.mxu0 %v216
    %767 = vmatprep.subr.mxu0 %v215
    %768 = vmatpush1.msra.mxu0 %v214
    %769 = vmatprep.subr.mxu0 %v213
    %770 = vmatpush1.msra.mxu0 %v212
    %771 = vmatprep.subr.mxu0 %v211
    %772 = vmatpush1.msra.mxu0 %v210
    %773 = vmatprep.subr.mxu0 0.0
    %774 = vmatpush2.msra.mxu0 0.0
    %775 = vmatprep.subr.mxu0 0.0
    %776 = vmatpush2.msra.mxu0 0.0
    %777 = vmatprep.subr.mxu0 0.0
    %778 = vmatpush2.msra.mxu0 0.0
    %779 = vmatprep.subr.mxu0 0.0
    %780 = vmatpush2.msra.mxu0 0.0
    %781 = vmatprep.subr.mxu0 0.0
    %782 = vmatpush2.msra.mxu0 0.0
    %783 = vmatprep.subr.mxu0 0.0
    %784 = vmatpush2.msra.mxu0 0.0
    %785 = vmatprep.subr.mxu0 0.0
    %786 = vmatpush2.msra.mxu0 0.0
    %787 = vmatprep.subr.mxu0 0.0
    %788 = vmatpush2.msra.mxu0 0.0
    %789 = vmatprep.subr.mxu0 0.0
    %790 = vmatpush2.msra.mxu0 0.0
    %791 = vmatprep.subr.mxu0 0.0
    %792 = vmatpush2.msra.mxu0 0.0
    %793 = vmatprep.subr.mxu0 0.0
    %794 = vmatpush2.msra.mxu0 0.0
    %795 = vmatprep.subr.mxu0 0.0
    %796 = vmatpush2.msra.mxu0 0.0
    %797 = vmatprep.subr.mxu0 0.0
    %798 = vmatpush2.msra.mxu0 0.0
    %799 = vmatprep.subr.mxu0 0.0
    %800 = vmatpush2.msra.mxu0 0.0
    %801 = vmatprep.subr.mxu0 0.0
    %802 = vmatpush2.msra.mxu0 0.0
    %803 = vmatprep.subr.mxu0 0.0
    %804 = vmatpush2.msra.mxu0 0.0
    %805 = vmatprep.mubr.f32.mxu0 0.0
    %806 = vmatmul.mubr.f32.gmra.mxu0 %v659
    %v807 = vpop.f32.mrf.mxu0
    %v808 = vadd.f32 %v731, %v807
    %v809 = vpop.f32.mrf.mxu0
    %v810 = vadd.f32 %v733, %v809
    %811 = vmatprep.mubr.f32.mxu0 0.0
    %812 = vmatmul.mubr.f32.gmra.mxu0 %v662
    %v813 = vpop.f32.mrf.mxu0
    %v814 = vadd.f32 %v737, %v813
    %v815 = vpop.f32.mrf.mxu0
    %v816 = vadd.f32 %v739, %v815
    %817 = vdwg.mxu0
    %v818 = vld [vmem:[%s381 + $0x1] sm:$0xff]
    %v819 = vld [vmem:[%s381 + $0x81] sm:$0xff]
    %820 = vrot.lane.b32.xlu0 %v382, 64
    %v821 = vpop.permute.xlu0 %820
    %822 = vrot.lane.b32.xlu0 %v383, 64
    %v823 = vpop.permute.xlu0 %822
    %826 = vrot.lane.b32.xlu0 %v384, 32
    %v827 = vpop.permute.xlu0 %826
    %828 = vrot.lane.b32.xlu0 %v385, 32
    %v829 = vpop.permute.xlu0 %828
    %832 = vrot.lane.b32.xlu0 %v602, 64
    %v833 = vpop.permute.xlu0 %832
    %834 = vrot.lane.b32.xlu0 %v603, 64
    %v835 = vpop.permute.xlu0 %834
    %838 = vrot.lane.b32.xlu0 %v604, 96
    %v839 = vpop.permute.xlu0 %838
    %840 = vrot.lane.b32.xlu0 %v605, 96
    %v841 = vpop.permute.xlu0 %840
    %v844 = vsel %vm134, %v140, %v821
    %v845 = vsel %vm134, %v141, %v823
    %v846 = vsel %vm137, %v844, %v126
    %v847 = vsel %vm137, %v845, %v128
    %v848 = vsel %vm131, %v81, %v827
    %v849 = vsel %vm131, %v82, %v829
    %v850 = vsel %vm134, %v848, %v833
    %v851 = vsel %vm134, %v849, %v835
    %v852 = vsel %vm137, %v850, %v839
    %v853 = vsel %vm137, %v851, %v841
    %v855 = vsel %vm131, %v818, 0
    %v858 = vsel %vm131, %v819, 0
    %860 = vmatprep.subr.mxu0 %v177
    %861 = vmatpush1.msra.mxu0 %v176
    %862 = vmatprep.subr.mxu0 %v175
    %863 = vmatpush1.msra.mxu0 %v174
    %864 = vmatprep.subr.mxu0 %v173
    %865 = vmatpush1.msra.mxu0 %v172
    %866 = vmatprep.subr.mxu0 %v171
    %867 = vmatpush1.msra.mxu0 %v170
    %868 = vmatprep.subr.mxu0 %v169
    %869 = vmatpush1.msra.mxu0 %v168
    %870 = vmatprep.subr.mxu0 %v167
    %871 = vmatpush1.msra.mxu0 %v166
    %872 = vmatprep.subr.mxu0 %v165
    %873 = vmatpush1.msra.mxu0 %v164
    %874 = vmatprep.subr.mxu0 %v163
    %875 = vmatpush1.msra.mxu0 %v162
    %876 = vmatprep.subr.mxu0 %v161
    %877 = vmatpush1.msra.mxu0 %v160
    %878 = vmatprep.subr.mxu0 %v159
    %879 = vmatpush1.msra.mxu0 %v158
    %880 = vmatprep.subr.mxu0 %v157
    %881 = vmatpush1.msra.mxu0 %v156
    %882 = vmatprep.subr.mxu0 %v155
    %883 = vmatpush1.msra.mxu0 %v154
    %884 = vmatprep.subr.mxu0 %v153
    %885 = vmatpush1.msra.mxu0 %v152
    %886 = vmatprep.subr.mxu0 %v151
    %887 = vmatpush1.msra.mxu0 %v150
    %888 = vmatprep.subr.mxu0 %v149
    %889 = vmatpush1.msra.mxu0 %v148
    %890 = vmatprep.subr.mxu0 %v147
    %891 = vmatpush1.msra.mxu0 %v146
    %892 = vmatprep.subr.mxu0 %v209
    %893 = vmatpush2.msra.mxu0 %v208
    %894 = vmatprep.subr.mxu0 %v207
    %895 = vmatpush2.msra.mxu0 %v206
    %896 = vmatprep.subr.mxu0 %v205
    %897 = vmatpush2.msra.mxu0 %v204
    %898 = vmatprep.subr.mxu0 %v203
    %899 = vmatpush2.msra.mxu0 %v202
    %900 = vmatprep.subr.mxu0 %v201
    %901 = vmatpush2.msra.mxu0 %v200
    %902 = vmatprep.subr.mxu0 %v199
    %903 = vmatpush2.msra.mxu0 %v198
    %904 = vmatprep.subr.mxu0 %v197
    %905 = vmatpush2.msra.mxu0 %v196
    %906 = vmatprep.subr.mxu0 %v195
    %907 = vmatpush2.msra.mxu0 %v194
    %908 = vmatprep.subr.mxu0 %v193
    %909 = vmatpush2.msra.mxu0 %v192
    %910 = vmatprep.subr.mxu0 %v191
    %911 = vmatpush2.msra.mxu0 %v190
    %912 = vmatprep.subr.mxu0 %v189
    %913 = vmatpush2.msra.mxu0 %v188
    %914 = vmatprep.subr.mxu0 %v187
    %915 = vmatpush2.msra.mxu0 %v186
    %916 = vmatprep.subr.mxu0 %v185
    %917 = vmatpush2.msra.mxu0 %v184
    %918 = vmatprep.subr.mxu0 %v183
    %919 = vmatpush2.msra.mxu0 %v182
    %920 = vmatprep.subr.mxu0 %v181
    %921 = vmatpush2.msra.mxu0 %v180
    %922 = vmatprep.subr.mxu0 %v179
    %923 = vmatpush2.msra.mxu0 %v178
    %924 = vmatprep.mubr.f32.mxu0 %v852
    %925 = vmatmul.mubr.f32.gmra.mxu0 %v846
    %v926 = vpop.f32.mrf.mxu0
    %v927 = vadd.f32 0.0, %v926
    %v928 = vpop.f32.mrf.mxu0
    %v929 = vadd.f32 0.0, %v928
    %930 = vmatprep.mubr.f32.mxu0 %v853
    %931 = vmatmul.mubr.f32.gmra.mxu0 %v847
    %v932 = vpop.f32.mrf.mxu0
    %v933 = vadd.f32 0.0, %v932
    %v934 = vpop.f32.mrf.mxu0
    %v935 = vadd.f32 0.0, %v934
    %936 = vdwg.mxu0
    %937 = vmatprep.subr.mxu0 0.0
    %938 = vmatpush1.msra.mxu0 0.0
    %939 = vmatprep.subr.mxu0 0.0
    %940 = vmatpush1.msra.mxu0 0.0
    %941 = vmatprep.subr.mxu0 0.0
    %942 = vmatpush1.msra.mxu0 0.0
    %943 = vmatprep.subr.mxu0 0.0
    %944 = vmatpush1.msra.mxu0 0.0
    %945 = vmatprep.subr.mxu0 0.0
    %946 = vmatpush1.msra.mxu0 0.0
    %947 = vmatprep.subr.mxu0 0.0
    %948 = vmatpush1.msra.mxu0 0.0
    %949 = vmatprep.subr.mxu0 0.0
    %950 = vmatpush1.msra.mxu0 0.0
    %951 = vmatprep.subr.mxu0 0.0
    %952 = vmatpush1.msra.mxu0 0.0
    %953 = vmatprep.subr.mxu0 0.0
    %954 = vmatpush1.msra.mxu0 0.0
    %955 = vmatprep.subr.mxu0 0.0
    %956 = vmatpush1.msra.mxu0 0.0
    %957 = vmatprep.subr.mxu0 0.0
    %958 = vmatpush1.msra.mxu0 0.0
    %959 = vmatprep.subr.mxu0 0.0
    %960 = vmatpush1.msra.mxu0 0.0
    %961 = vmatprep.subr.mxu0 %v217
    %962 = vmatpush1.msra.mxu0 %v216
    %963 = vmatprep.subr.mxu0 %v215
    %964 = vmatpush1.msra.mxu0 %v214
    %965 = vmatprep.subr.mxu0 %v213
    %966 = vmatpush1.msra.mxu0 %v212
    %967 = vmatprep.subr.mxu0 %v211
    %968 = vmatpush1.msra.mxu0 %v210
    %969 = vmatprep.subr.mxu0 0.0
    %970 = vmatpush2.msra.mxu0 0.0
    %971 = vmatprep.subr.mxu0 0.0
    %972 = vmatpush2.msra.mxu0 0.0
    %973 = vmatprep.subr.mxu0 0.0
    %974 = vmatpush2.msra.mxu0 0.0
    %975 = vmatprep.subr.mxu0 0.0
    %976 = vmatpush2.msra.mxu0 0.0
    %977 = vmatprep.subr.mxu0 0.0
    %978 = vmatpush2.msra.mxu0 0.0
    %979 = vmatprep.subr.mxu0 0.0
    %980 = vmatpush2.msra.mxu0 0.0
    %981 = vmatprep.subr.mxu0 0.0
    %982 = vmatpush2.msra.mxu0 0.0
    %983 = vmatprep.subr.mxu0 0.0
    %984 = vmatpush2.msra.mxu0 0.0
    %985 = vmatprep.subr.mxu0 0.0
    %986 = vmatpush2.msra.mxu0 0.0
    %987 = vmatprep.subr.mxu0 0.0
    %988 = vmatpush2.msra.mxu0 0.0
    %989 = vmatprep.subr.mxu0 0.0
    %990 = vmatpush2.msra.mxu0 0.0
    %991 = vmatprep.subr.mxu0 0.0
    %992 = vmatpush2.msra.mxu0 0.0
    %993 = vmatprep.subr.mxu0 0.0
    %994 = vmatpush2.msra.mxu0 0.0
    %995 = vmatprep.subr.mxu0 0.0
    %996 = vmatpush2.msra.mxu0 0.0
    %997 = vmatprep.subr.mxu0 0.0
    %998 = vmatpush2.msra.mxu0 0.0
    %999 = vmatprep.subr.mxu0 0.0
    %1000 = vmatpush2.msra.mxu0 0.0
    %1001 = vmatprep.mubr.f32.mxu0 0.0
    %1002 = vmatmul.mubr.f32.gmra.mxu0 %v855
    %v1003 = vpop.f32.mrf.mxu0
    %v1004 = vadd.f32 %v927, %v1003
    %v1005 = vpop.f32.mrf.mxu0
    %v1006 = vadd.f32 %v929, %v1005
    %1007 = vmatprep.mubr.f32.mxu0 0.0
    %1008 = vmatmul.mubr.f32.gmra.mxu0 %v858
    %v1009 = vpop.f32.mrf.mxu0
    %v1010 = vadd.f32 %v933, %v1009
    %v1011 = vpop.f32.mrf.mxu0
    %v1012 = vadd.f32 %v935, %v1011
    %1013 = vdwg.mxu0
    %v1014 = vmax.f32 %v368, %v590
    %v1015 = vmax.f32 %v370, %v592
    %v1016 = vmax.f32 %v374, %v596
    %v1017 = vmax.f32 %v376, %v598
    %v1018 = vmax.f32 %v808, %v1004
    %v1019 = vmax.f32 %v810, %v1006
    %v1020 = vmax.f32 %v814, %v1010
    %v1021 = vmax.f32 %v816, %v1012
    %v1022 = vmax.f32 %v1014, %v1018
    %v1023 = vmax.f32 %v1015, %v1019
    %v1024 = vmax.f32 %v1016, %v1020
    %v1025 = vmax.f32 %v1017, %v1021
    %v1026 = vld [vmem:[%s2] sm:$0x3]
    %v1028 = vlaneseq
    %v1029 = vshrl.u32 %v1028, 7
    %v1030 = vsub.s32 0, %v1029
    %v1031 = vrot.slane %v1026, %v1030
    %v1032 = vlaneseq
    %v1033 = vshrl.u32 %v1032, 7
    %v1034 = vsub.s32 1, %v1033
    %v1035 = vrot.slane %v1026, %v1034
    %v1038 = vadd.f32 %v1022, %v1031
    %v1039 = vadd.f32 %v1023, %v1035
    %v1040 = vadd.f32 %v1024, %v1031
    %v1041 = vadd.f32 %v1025, %v1035
    %v1042 = vmax.f32 %v1038, 0.0
    %v1043 = vmax.f32 %v1039, 0.0
    %v1044 = vmax.f32 %v1040, 0.0
    %v1045 = vmax.f32 %v1041, 0.0
    %1046 = vst [vmem:[#allocation2] sm:$0xff] 0.0
    %1047 = vst [vmem:[#allocation2 + $0x8] sm:$0xff] 0.0
    %1048 = vst.msk [vmem:[#allocation2 + $0x10] sm:$0xff] %vm134, 0.0
    %1049 = vst [vmem:[#allocation2 + $0x18] sm:$0x3] 0.0
    %1050 = vst [vmem:[#allocation2 + $0x20] sm:$0x3] 0.0
    %vm1051 = vcmask 517120
    %1052 = vst.msk [vmem:[#allocation2 + $0x28] sm:$0x3] %vm1051, 0.0
    %1053 = vst [vmem:[#allocation2 + $0x30] sm:$0xff] 0.0
    %1054 = vst [vmem:[#allocation2 + $0x38] sm:$0xff] 0.0
    %1055 = vst.msk [vmem:[#allocation2 + $0x40] sm:$0xff] %vm134, 0.0
    %1056 = vst [vmem:[#allocation2 + $0x48] sm:$0x3] 0.0
    %1057 = vst [vmem:[#allocation2 + $0x50] sm:$0x3] 0.0
    %1058 = vst.msk [vmem:[#allocation2 + $0x58] sm:$0x3] %vm1051, 0.0
    %v1063 = vrot.slane %v1042, 7
    %v1064 = vrot.slane %v1043, 7
    %v1065 = vrot.slane %v1044, 7
    %v1066 = vrot.slane %v1045, 7
    %1067 = vrot.lane.b32.xlu0 %v1063, 32
    %v1068 = vpop.permute.xlu0 %1067
    %1069 = vrot.lane.b32.xlu0 %v1064, 32
    %v1070 = vpop.permute.xlu0 %1069
    %1071 = vrot.lane.b32.xlu0 %v1065, 32
    %v1072 = vpop.permute.xlu0 %1071
    %1073 = vrot.lane.b32.xlu0 %v1066, 32
    %v1074 = vpop.permute.xlu0 %1073
    %v1075 = vsel %vm131, %v1068, %v1070
    %v1076 = vsel %vm131, %v1072, %v1074
    %vm1083 = vcmask 1047809
    %1084 = vst.msk [vmem:[#allocation2] sm:$0xfe] %vm1083, %v1068
    %1085 = vst [vmem:[#allocation2 + $0x8] sm:$0xfe] %v1075
    %vm1086 = vcmask 261121
    %1087 = vst.msk [vmem:[#allocation2 + $0x10] sm:$0xfe] %vm1086, %v1070
    %vm1088 = vcmask 1040640
    %1089 = vst.msk [vmem:[#allocation2 + $0x18] sm:$0x1] %vm1088, %v1068
    %1090 = vst [vmem:[#allocation2 + $0x20] sm:$0x1] %v1075
    %vm1091 = vcmask 253952
    %1092 = vst.msk [vmem:[#allocation2 + $0x28] sm:$0x1] %vm1091, %v1070
    %1093 = vst.msk [vmem:[#allocation2 + $0x30] sm:$0xfe] %vm1083, %v1072
    %1094 = vst [vmem:[#allocation2 + $0x38] sm:$0xfe] %v1076
    %1095 = vst.msk [vmem:[#allocation2 + $0x40] sm:$0xfe] %vm1086, %v1074
    %1096 = vst.msk [vmem:[#allocation2 + $0x48] sm:$0x1] %vm1088, %v1072
    %1097 = vst [vmem:[#allocation2 + $0x50] sm:$0x1] %v1076
    %1098 = vst.msk [vmem:[#allocation2 + $0x58] sm:$0x1] %vm1091, %v1074
    %v1099 = vld [vmem:[#allocation2] sm:$0xff]
    %v1100 = vld [vmem:[#allocation2 + $0x8] sm:$0xff]
    %v1101 = vld [vmem:[#allocation2 + $0x30] sm:$0xff]
    %v1102 = vld [vmem:[#allocation2 + $0x38] sm:$0xff]
    %v1103 = vld [vmem:[#allocation2 + $0x10] sm:$0xff]
    %v1104 = vld [vmem:[#allocation2 + $0x40] sm:$0xff]
    %v1105 = vld [vmem:[#allocation2] sm:$0xfe]
    %v1106 = vld [vmem:[#allocation2 + $0x8] sm:$0xfe]
    %v1107 = vld [vmem:[#allocation2 + $0x18] sm:$0x1]
    %v1108 = vld [vmem:[#allocation2 + $0x20] sm:$0x1]
    %v1109 = vld [vmem:[#allocation2 + $0x30] sm:$0xfe]
    %v1110 = vld [vmem:[#allocation2 + $0x38] sm:$0xfe]
    %v1111 = vld [vmem:[#allocation2 + $0x48] sm:$0x1]
    %v1112 = vld [vmem:[#allocation2 + $0x50] sm:$0x1]
    %vm1121 = vcmask 1046528
    %v1122 = vrot.slane %v1105, 1
    %v1123 = vrot.slane %v1107, 1
    %v1124 = vsel %vm1121, %v1122, %v1123
    %v1125 = vrot.slane %v1106, 1
    %v1126 = vrot.slane %v1108, 1
    %v1127 = vsel %vm1121, %v1125, %v1126
    %v1128 = vrot.slane %v1109, 1
    %v1129 = vrot.slane %v1111, 1
    %v1130 = vsel %vm1121, %v1128, %v1129
    %v1131 = vrot.slane %v1110, 1
    %v1132 = vrot.slane %v1112, 1
    %v1133 = vsel %vm1121, %v1131, %v1132
    %v1138 = vld [vmem:[#allocation2 + $0x10] sm:$0xfe]
    %v1139 = vld [vmem:[#allocation2 + $0x28] sm:$0x1]
    %v1140 = vld [vmem:[#allocation2 + $0x40] sm:$0xfe]
    %v1141 = vld [vmem:[#allocation2 + $0x58] sm:$0x1]
    %v1146 = vrot.slane %v1138, 1
    %v1147 = vrot.slane %v1139, 1
    %v1148 = vsel %vm1121, %v1146, %v1147
    %v1149 = vrot.slane %v1140, 1
    %v1150 = vrot.slane %v1141, 1
    %v1151 = vsel %vm1121, %v1149, %v1150
    %v1152 = vld [vmem:[#allocation2] sm:$0xfc]
    %v1153 = vld [vmem:[#allocation2 + $0x8] sm:$0xfc]
    %v1154 = vld [vmem:[#allocation2 + $0x18] sm:$0x3]
    %v1155 = vld [vmem:[#allocation2 + $0x20] sm:$0x3]
    %v1156 = vld [vmem:[#allocation2 + $0x30] sm:$0xfc]
    %v1157 = vld [vmem:[#allocation2 + $0x38] sm:$0xfc]
    %v1158 = vld [vmem:[#allocation2 + $0x48] sm:$0x3]
    %v1159 = vld [vmem:[#allocation2 + $0x50] sm:$0x3]
    %vm1168 = vcmask 1045504
    %v1169 = vrot.slane %v1152, 2
    %v1170 = vrot.slane %v1154, 2
    %v1171 = vsel %vm1168, %v1169, %v1170
    %v1172 = vrot.slane %v1153, 2
    %v1173 = vrot.slane %v1155, 2
    %v1174 = vsel %vm1168, %v1172, %v1173
    %v1175 = vrot.slane %v1156, 2
    %v1176 = vrot.slane %v1158, 2
    %v1177 = vsel %vm1168, %v1175, %v1176
    %v1178 = vrot.slane %v1157, 2
    %v1179 = vrot.slane %v1159, 2
    %v1180 = vsel %vm1168, %v1178, %v1179
    %v1185 = vld [vmem:[#allocation2 + $0x10] sm:$0xfc]
    %v1186 = vld [vmem:[#allocation2 + $0x28] sm:$0x3]
    %v1187 = vld [vmem:[#allocation2 + $0x40] sm:$0xfc]
    %v1188 = vld [vmem:[#allocation2 + $0x58] sm:$0x3]
    %v1193 = vrot.slane %v1185, 2
    %v1194 = vrot.slane %v1186, 2
    %v1195 = vsel %vm1168, %v1193, %v1194
    %v1196 = vrot.slane %v1187, 2
    %v1197 = vrot.slane %v1188, 2
    %v1198 = vsel %vm1168, %v1196, %v1197
    %1205 = vrot.lane.b32.xlu0 %v1099, 96
    %v1206 = vpop.permute.xlu0 %1205
    %1207 = vrot.lane.b32.xlu0 %v1100, 96
    %v1208 = vpop.permute.xlu0 %1207
    %1209 = vrot.lane.b32.xlu0 %v1103, 96
    %v1210 = vpop.permute.xlu0 %1209
    %1211 = vrot.lane.b32.xlu0 %v1101, 96
    %v1212 = vpop.permute.xlu0 %1211
    %1213 = vrot.lane.b32.xlu0 %v1102, 96
    %v1214 = vpop.permute.xlu0 %1213
    %1215 = vrot.lane.b32.xlu0 %v1104, 96
    %v1216 = vpop.permute.xlu0 %1215
    %v1217 = vsel %vm137, %v1206, %v1208
    %v1218 = vsel %vm137, %v1208, %v1210
    %v1219 = vsel %vm137, %v1212, %v1214
    %v1220 = vsel %vm137, %v1214, %v1216
    %1225 = vrot.lane.b32.xlu0 %v1099, 64
    %v1226 = vpop.permute.xlu0 %1225
    %1227 = vrot.lane.b32.xlu0 %v1100, 64
    %v1228 = vpop.permute.xlu0 %1227
    %1229 = vrot.lane.b32.xlu0 %v1103, 64
    %v1230 = vpop.permute.xlu0 %1229
    %1231 = vrot.lane.b32.xlu0 %v1101, 64
    %v1232 = vpop.permute.xlu0 %1231
    %1233 = vrot.lane.b32.xlu0 %v1102, 64
    %v1234 = vpop.permute.xlu0 %1233
    %1235 = vrot.lane.b32.xlu0 %v1104, 64
    %v1236 = vpop.permute.xlu0 %1235
    %v1237 = vsel %vm134, %v1226, %v1228
    %v1238 = vsel %vm134, %v1228, %v1230
    %v1239 = vsel %vm134, %v1232, %v1234
    %v1240 = vsel %vm134, %v1234, %v1236
    %1245 = vrot.lane.b32.xlu0 %v1124, 96
    %v1246 = vpop.permute.xlu0 %1245
    %1247 = vrot.lane.b32.xlu0 %v1127, 96
    %v1248 = vpop.permute.xlu0 %1247
    %1249 = vrot.lane.b32.xlu0 %v1148, 96
    %v1250 = vpop.permute.xlu0 %1249
    %1251 = vrot.lane.b32.xlu0 %v1130, 96
    %v1252 = vpop.permute.xlu0 %1251
    %1253 = vrot.lane.b32.xlu0 %v1133, 96
    %v1254 = vpop.permute.xlu0 %1253
    %1255 = vrot.lane.b32.xlu0 %v1151, 96
    %v1256 = vpop.permute.xlu0 %1255
    %v1257 = vsel %vm137, %v1246, %v1248
    %v1258 = vsel %vm137, %v1248, %v1250
    %v1259 = vsel %vm137, %v1252, %v1254
    %v1260 = vsel %vm137, %v1254, %v1256
    %1265 = vrot.lane.b32.xlu0 %v1124, 64
    %v1266 = vpop.permute.xlu0 %1265
    %1267 = vrot.lane.b32.xlu0 %v1127, 64
    %v1268 = vpop.permute.xlu0 %1267
    %1269 = vrot.lane.b32.xlu0 %v1148, 64
    %v1270 = vpop.permute.xlu0 %1269
    %1271 = vrot.lane.b32.xlu0 %v1130, 64
    %v1272 = vpop.permute.xlu0 %1271
    %1273 = vrot.lane.b32.xlu0 %v1133, 64
    %v1274 = vpop.permute.xlu0 %1273
    %1275 = vrot.lane.b32.xlu0 %v1151, 64
    %v1276 = vpop.permute.xlu0 %1275
    %v1277 = vsel %vm134, %v1266, %v1268
    %v1278 = vsel %vm134, %v1268, %v1270
    %v1279 = vsel %vm134, %v1272, %v1274
    %v1280 = vsel %vm134, %v1274, %v1276
    %1285 = vrot.lane.b32.xlu0 %v1171, 96
    %v1286 = vpop.permute.xlu0 %1285
    %1287 = vrot.lane.b32.xlu0 %v1174, 96
    %v1288 = vpop.permute.xlu0 %1287
    %1289 = vrot.lane.b32.xlu0 %v1195, 96
    %v1290 = vpop.permute.xlu0 %1289
    %1291 = vrot.lane.b32.xlu0 %v1177, 96
    %v1292 = vpop.permute.xlu0 %1291
    %1293 = vrot.lane.b32.xlu0 %v1180, 96
    %v1294 = vpop.permute.xlu0 %1293
    %1295 = vrot.lane.b32.xlu0 %v1198, 96
    %v1296 = vpop.permute.xlu0 %1295
    %v1297 = vsel %vm137, %v1286, %v1288
    %v1298 = vsel %vm137, %v1288, %v1290
    %v1299 = vsel %vm137, %v1292, %v1294
    %v1300 = vsel %vm137, %v1294, %v1296
    %1305 = vrot.lane.b32.xlu0 %v1171, 64
    %v1306 = vpop.permute.xlu0 %1305
    %1307 = vrot.lane.b32.xlu0 %v1174, 64
    %v1308 = vpop.permute.xlu0 %1307
    %1309 = vrot.lane.b32.xlu0 %v1195, 64
    %v1310 = vpop.permute.xlu0 %1309
    %1311 = vrot.lane.b32.xlu0 %v1177, 64
    %v1312 = vpop.permute.xlu0 %1311
    %1313 = vrot.lane.b32.xlu0 %v1180, 64
    %v1314 = vpop.permute.xlu0 %1313
    %1315 = vrot.lane.b32.xlu0 %v1198, 64
    %v1316 = vpop.permute.xlu0 %1315
    %v1317 = vsel %vm134, %v1306, %v1308
    %v1318 = vsel %vm134, %v1308, %v1310
    %v1319 = vsel %vm134, %v1312, %v1314
    %v1320 = vsel %vm134, %v1314, %v1316
    %v1325 = vld [vmem:[%s3] sm:$0xff]
    %v1326 = vld [vmem:[%s3 + $0x8] sm:$0xff]
    %v1327 = vld [vmem:[%s3 + $0x10] sm:$0xff]
    %v1328 = vld [vmem:[%s3 + $0x18] sm:$0xff]
    %v1329 = vld [vmem:[%s3 + $0x20] sm:$0xff]
    %v1330 = vld [vmem:[%s3 + $0x28] sm:$0xff]
    %v1331 = vld [vmem:[%s3 + $0x30] sm:$0xff]
    %v1332 = vld [vmem:[%s3 + $0x38] sm:$0xff]
    %v1333 = vld [vmem:[%s3 + $0x40] sm:$0xff]
    %v1334 = vld [vmem:[%s3 + $0x48] sm:$0xff]
    %v1335 = vld [vmem:[%s3 + $0x50] sm:$0xff]
    %v1336 = vld [vmem:[%s3 + $0x58] sm:$0xff]
    %v1337 = vld [vmem:[%s3 + $0x60] sm:$0xff]
    %v1338 = vld [vmem:[%s3 + $0x68] sm:$0xff]
    %v1339 = vld [vmem:[%s3 + $0x70] sm:$0xff]
    %v1340 = vld [vmem:[%s3 + $0x78] sm:$0xff]
    %v1341 = vld [vmem:[%s3 + $0x80] sm:$0xff]
    %v1342 = vld [vmem:[%s3 + $0x88] sm:$0xff]
    %v1343 = vld [vmem:[%s3 + $0x90] sm:$0xff]
    %v1344 = vld [vmem:[%s3 + $0x98] sm:$0xff]
    %v1345 = vld [vmem:[%s3 + $0xa0] sm:$0xff]
    %v1346 = vld [vmem:[%s3 + $0xa8] sm:$0xff]
    %v1347 = vld [vmem:[%s3 + $0xb0] sm:$0xff]
    %v1348 = vld [vmem:[%s3 + $0xb8] sm:$0xff]
    %v1349 = vld [vmem:[%s3 + $0xc0] sm:$0xff]
    %v1350 = vld [vmem:[%s3 + $0xc8] sm:$0xff]
    %v1351 = vld [vmem:[%s3 + $0xd0] sm:$0xff]
    %v1352 = vld [vmem:[%s3 + $0xd8] sm:$0xff]
    %v1353 = vld [vmem:[%s3 + $0xe0] sm:$0xff]
    %v1354 = vld [vmem:[%s3 + $0xe8] sm:$0xff]
    %v1355 = vld [vmem:[%s3 + $0xf0] sm:$0xff]
    %v1356 = vld [vmem:[%s3 + $0xf8] sm:$0xff]
    %v1357 = vld [vmem:[%s3 + $0x100] sm:$0xff]
    %v1358 = vld [vmem:[%s3 + $0x108] sm:$0xff]
    %v1359 = vld [vmem:[%s3 + $0x110] sm:$0xff]
    %v1360 = vld [vmem:[%s3 + $0x118] sm:$0xff]
    %v1361 = vld [vmem:[%s3 + $0x120] sm:$0xff]
    %v1362 = vld [vmem:[%s3 + $0x128] sm:$0xff]
    %v1363 = vld [vmem:[%s3 + $0x130] sm:$0xff]
    %v1364 = vld [vmem:[%s3 + $0x138] sm:$0xff]
    %v1365 = vld [vmem:[%s3 + $0x140] sm:$0xff]
    %v1366 = vld [vmem:[%s3 + $0x148] sm:$0xff]
    %v1367 = vld [vmem:[%s3 + $0x150] sm:$0xff]
    %v1368 = vld [vmem:[%s3 + $0x158] sm:$0xff]
    %v1369 = vld [vmem:[%s3 + $0x160] sm:$0xff]
    %v1370 = vld [vmem:[%s3 + $0x168] sm:$0xff]
    %v1371 = vld [vmem:[%s3 + $0x170] sm:$0xff]
    %v1372 = vld [vmem:[%s3 + $0x178] sm:$0xff]
    %v1373 = vld [vmem:[%s3 + $0x180] sm:$0xff]
    %v1374 = vld [vmem:[%s3 + $0x188] sm:$0xff]
    %v1375 = vld [vmem:[%s3 + $0x190] sm:$0xff]
    %v1376 = vld [vmem:[%s3 + $0x198] sm:$0xff]
    %v1377 = vld [vmem:[%s3 + $0x1a0] sm:$0xff]
    %v1378 = vld [vmem:[%s3 + $0x1a8] sm:$0xff]
    %v1379 = vld [vmem:[%s3 + $0x1b0] sm:$0xff]
    %v1380 = vld [vmem:[%s3 + $0x1b8] sm:$0xff]
    %v1381 = vld [vmem:[%s3 + $0x1c0] sm:$0xff]
    %v1382 = vld [vmem:[%s3 + $0x1c8] sm:$0xff]
    %v1383 = vld [vmem:[%s3 + $0x1d0] sm:$0xff]
    %v1384 = vld [vmem:[%s3 + $0x1d8] sm:$0xff]
    %v1385 = vld [vmem:[%s3 + $0x1e0] sm:$0xff]
    %v1386 = vld [vmem:[%s3 + $0x1e8] sm:$0xff]
    %v1387 = vld [vmem:[%s3 + $0x1f0] sm:$0xff]
    %v1388 = vld [vmem:[%s3 + $0x1f8] sm:$0xff]
    %v1389 = vld [vmem:[%s3 + $0x200] sm:$0xff]
    %v1390 = vld [vmem:[%s3 + $0x208] sm:$0xff]
    %v1391 = vld [vmem:[%s3 + $0x210] sm:$0xff]
    %v1392 = vld [vmem:[%s3 + $0x218] sm:$0xff]
    %v1393 = vld [vmem:[%s3 + $0x220] sm:$0xff]
    %v1394 = vld [vmem:[%s3 + $0x228] sm:$0xff]
    %v1395 = vld [vmem:[%s3 + $0x230] sm:$0xff]
    %v1396 = vld [vmem:[%s3 + $0x238] sm:$0xff]
    %v1397 = vld [vmem:[%s3 + $0x240] sm:$0xff]
    %v1398 = vld [vmem:[%s3 + $0x248] sm:$0xff]
    %v1399 = vld [vmem:[%s3 + $0x250] sm:$0xff]
    %v1400 = vld [vmem:[%s3 + $0x258] sm:$0xff]
    %v1401 = vld [vmem:[%s3 + $0x260] sm:$0xff]
    %v1402 = vld [vmem:[%s3 + $0x268] sm:$0xff]
    %v1403 = vld [vmem:[%s3 + $0x270] sm:$0xff]
    %v1404 = vld [vmem:[%s3 + $0x278] sm:$0xff]
    %v1405 = vld [vmem:[%s3 + $0x280] sm:$0xff]
    %v1406 = vld [vmem:[%s3 + $0x288] sm:$0xff]
    %v1407 = vld [vmem:[%s3 + $0x290] sm:$0xff]
    %v1408 = vld [vmem:[%s3 + $0x298] sm:$0xff]
    %v1409 = vld [vmem:[%s3 + $0x2a0] sm:$0xff]
    %v1410 = vld [vmem:[%s3 + $0x2a8] sm:$0xff]
    %v1411 = vld [vmem:[%s3 + $0x2b0] sm:$0xff]
    %v1412 = vld [vmem:[%s3 + $0x2b8] sm:$0xff]
    %v1413 = vld [vmem:[%s3 + $0x2c0] sm:$0xff]
    %v1414 = vld [vmem:[%s3 + $0x2c8] sm:$0xff]
    %v1415 = vld [vmem:[%s3 + $0x2d0] sm:$0xff]
    %v1416 = vld [vmem:[%s3 + $0x2d8] sm:$0xff]
    %v1417 = vld [vmem:[%s3 + $0x2e0] sm:$0xff]
    %v1418 = vld [vmem:[%s3 + $0x2e8] sm:$0xff]
    %v1419 = vld [vmem:[%s3 + $0x2f0] sm:$0xff]
    %v1420 = vld [vmem:[%s3 + $0x2f8] sm:$0xff]
    %v1421 = vld [vmem:[%s3 + $0x300] sm:$0xff]
    %v1422 = vld [vmem:[%s3 + $0x308] sm:$0xff]
    %v1423 = vld [vmem:[%s3 + $0x310] sm:$0xff]
    %v1424 = vld [vmem:[%s3 + $0x318] sm:$0xff]
    %v1425 = vld [vmem:[%s3 + $0x320] sm:$0xff]
    %v1426 = vld [vmem:[%s3 + $0x328] sm:$0xff]
    %v1427 = vld [vmem:[%s3 + $0x330] sm:$0xff]
    %v1428 = vld [vmem:[%s3 + $0x338] sm:$0xff]
    %v1429 = vld [vmem:[%s3 + $0x340] sm:$0xff]
    %v1430 = vld [vmem:[%s3 + $0x348] sm:$0xff]
    %v1431 = vld [vmem:[%s3 + $0x350] sm:$0xff]
    %v1432 = vld [vmem:[%s3 + $0x358] sm:$0xff]
    %v1433 = vld [vmem:[%s3 + $0x360] sm:$0xff]
    %v1434 = vld [vmem:[%s3 + $0x368] sm:$0xff]
    %v1435 = vld [vmem:[%s3 + $0x370] sm:$0xff]
    %v1436 = vld [vmem:[%s3 + $0x378] sm:$0xff]
    %v1437 = vld [vmem:[%s3 + $0x380] sm:$0xff]
    %v1438 = vld [vmem:[%s3 + $0x388] sm:$0xff]
    %v1439 = vld [vmem:[%s3 + $0x390] sm:$0xff]
    %v1440 = vld [vmem:[%s3 + $0x398] sm:$0xff]
    %v1441 = vld [vmem:[%s3 + $0x3a0] sm:$0xff]
    %v1442 = vld [vmem:[%s3 + $0x3a8] sm:$0xff]
    %v1443 = vld [vmem:[%s3 + $0x3b0] sm:$0xff]
    %v1444 = vld [vmem:[%s3 + $0x3b8] sm:$0xff]
    %v1445 = vld [vmem:[%s3 + $0x3c0] sm:$0xff]
    %v1446 = vld [vmem:[%s3 + $0x3c8] sm:$0xff]
    %v1447 = vld [vmem:[%s3 + $0x3d0] sm:$0xff]
    %v1448 = vld [vmem:[%s3 + $0x3d8] sm:$0xff]
    %v1449 = vld [vmem:[%s3 + $0x3e0] sm:$0xff]
    %v1450 = vld [vmem:[%s3 + $0x3e8] sm:$0xff]
    %v1451 = vld [vmem:[%s3 + $0x3f0] sm:$0xff]
    %v1452 = vld [vmem:[%s3 + $0x3f8] sm:$0xff]
    %v1453 = vld [vmem:[%s3 + $0x400] sm:$0xff]
    %v1454 = vld [vmem:[%s3 + $0x408] sm:$0xff]
    %v1455 = vld [vmem:[%s3 + $0x410] sm:$0xff]
    %v1456 = vld [vmem:[%s3 + $0x418] sm:$0xff]
    %v1457 = vld [vmem:[%s3 + $0x420] sm:$0xff]
    %v1458 = vld [vmem:[%s3 + $0x428] sm:$0xff]
    %v1459 = vld [vmem:[%s3 + $0x430] sm:$0xff]
    %v1460 = vld [vmem:[%s3 + $0x438] sm:$0xff]
    %v1461 = vld [vmem:[%s3 + $0x440] sm:$0xff]
    %v1462 = vld [vmem:[%s3 + $0x448] sm:$0xff]
    %v1463 = vld [vmem:[%s3 + $0x450] sm:$0xff]
    %v1464 = vld [vmem:[%s3 + $0x458] sm:$0xff]
    %v1465 = vld [vmem:[%s3 + $0x460] sm:$0xff]
    %v1466 = vld [vmem:[%s3 + $0x468] sm:$0xff]
    %v1467 = vld [vmem:[%s3 + $0x470] sm:$0xff]
    %v1468 = vld [vmem:[%s3 + $0x478] sm:$0xff]
    %v1469 = vld [vmem:[%s3 + $0x480] sm:$0xff]
    %v1470 = vld [vmem:[%s3 + $0x488] sm:$0xff]
    %v1471 = vld [vmem:[%s3 + $0x490] sm:$0xff]
    %v1472 = vld [vmem:[%s3 + $0x498] sm:$0xff]
    %v1473 = vld [vmem:[%s3 + $0x4a0] sm:$0xff]
    %v1474 = vld [vmem:[%s3 + $0x4a8] sm:$0xff]
    %v1475 = vld [vmem:[%s3 + $0x4b0] sm:$0xff]
    %v1476 = vld [vmem:[%s3 + $0x4b8] sm:$0xff]
    %v1477 = vld [vmem:[%s3 + $0x4c0] sm:$0xff]
    %v1478 = vld [vmem:[%s3 + $0x4c8] sm:$0xff]
    %v1479 = vld [vmem:[%s3 + $0x4d0] sm:$0xff]
    %v1480 = vld [vmem:[%s3 + $0x4d8] sm:$0xff]
    %v1481 = vld [vmem:[%s3 + $0x4e0] sm:$0xff]
    %v1482 = vld [vmem:[%s3 + $0x4e8] sm:$0xff]
    %v1483 = vld [vmem:[%s3 + $0x4f0] sm:$0xff]
    %v1484 = vld [vmem:[%s3 + $0x4f8] sm:$0xff]
    %v1485 = vld [vmem:[%s3 + $0x500] sm:$0xff]
    %v1486 = vld [vmem:[%s3 + $0x508] sm:$0xff]
    %v1487 = vld [vmem:[%s3 + $0x510] sm:$0xff]
    %v1488 = vld [vmem:[%s3 + $0x518] sm:$0xff]
    %v1489 = vld [vmem:[%s3 + $0x520] sm:$0xff]
    %v1490 = vld [vmem:[%s3 + $0x528] sm:$0xff]
    %v1491 = vld [vmem:[%s3 + $0x530] sm:$0xff]
    %v1492 = vld [vmem:[%s3 + $0x538] sm:$0xff]
    %v1493 = vld [vmem:[%s3 + $0x540] sm:$0xff]
    %v1494 = vld [vmem:[%s3 + $0x548] sm:$0xff]
    %v1495 = vld [vmem:[%s3 + $0x550] sm:$0xff]
    %v1496 = vld [vmem:[%s3 + $0x558] sm:$0xff]
    %v1497 = vld [vmem:[%s3 + $0x560] sm:$0xff]
    %v1498 = vld [vmem:[%s3 + $0x568] sm:$0xff]
    %v1499 = vld [vmem:[%s3 + $0x570] sm:$0xff]
    %v1500 = vld [vmem:[%s3 + $0x578] sm:$0xff]
    %v1501 = vld [vmem:[%s3 + $0x580] sm:$0xff]
    %v1502 = vld [vmem:[%s3 + $0x588] sm:$0xff]
    %v1503 = vld [vmem:[%s3 + $0x590] sm:$0xff]
    %v1504 = vld [vmem:[%s3 + $0x598] sm:$0xff]
    %v1505 = vld [vmem:[%s3 + $0x5a0] sm:$0xff]
    %v1506 = vld [vmem:[%s3 + $0x5a8] sm:$0xff]
    %v1507 = vld [vmem:[%s3 + $0x5b0] sm:$0xff]
    %v1508 = vld [vmem:[%s3 + $0x5b8] sm:$0xff]
    %v1509 = vld [vmem:[%s3 + $0x5c0] sm:$0xff]
    %v1510 = vld [vmem:[%s3 + $0x5c8] sm:$0xff]
    %v1511 = vld [vmem:[%s3 + $0x5d0] sm:$0xff]
    %v1512 = vld [vmem:[%s3 + $0x5d8] sm:$0xff]
    %v1513 = vld [vmem:[%s3 + $0x5e0] sm:$0xff]
    %v1514 = vld [vmem:[%s3 + $0x5e8] sm:$0xff]
    %v1515 = vld [vmem:[%s3 + $0x5f0] sm:$0xff]
    %v1516 = vld [vmem:[%s3 + $0x5f8] sm:$0xff]
    %v1517 = vld [vmem:[%s3 + $0x600] sm:$0xff]
    %v1518 = vld [vmem:[%s3 + $0x608] sm:$0xff]
    %v1519 = vld [vmem:[%s3 + $0x610] sm:$0xff]
    %v1520 = vld [vmem:[%s3 + $0x618] sm:$0xff]
    %v1521 = vld [vmem:[%s3 + $0x620] sm:$0xff]
    %v1522 = vld [vmem:[%s3 + $0x628] sm:$0xff]
    %v1523 = vld [vmem:[%s3 + $0x630] sm:$0xff]
    %v1524 = vld [vmem:[%s3 + $0x638] sm:$0xff]
    %v1525 = vld [vmem:[%s3 + $0x640] sm:$0xff]
    %v1526 = vld [vmem:[%s3 + $0x648] sm:$0xff]
    %v1527 = vld [vmem:[%s3 + $0x650] sm:$0xff]
    %v1528 = vld [vmem:[%s3 + $0x658] sm:$0xff]
    %v1529 = vld [vmem:[%s3 + $0x660] sm:$0xff]
    %v1530 = vld [vmem:[%s3 + $0x668] sm:$0xff]
    %v1531 = vld [vmem:[%s3 + $0x670] sm:$0xff]
    %v1532 = vld [vmem:[%s3 + $0x678] sm:$0xff]
    %v1533 = vld [vmem:[%s3 + $0x680] sm:$0xff]
    %v1534 = vld [vmem:[%s3 + $0x688] sm:$0xff]
    %v1535 = vld [vmem:[%s3 + $0x690] sm:$0xff]
    %v1536 = vld [vmem:[%s3 + $0x698] sm:$0xff]
    %v1537 = vld [vmem:[%s3 + $0x6a0] sm:$0xff]
    %v1538 = vld [vmem:[%s3 + $0x6a8] sm:$0xff]
    %v1539 = vld [vmem:[%s3 + $0x6b0] sm:$0xff]
    %v1540 = vld [vmem:[%s3 + $0x6b8] sm:$0xff]
    %v1541 = vld [vmem:[%s3 + $0x6c0] sm:$0xff]
    %v1542 = vld [vmem:[%s3 + $0x6c8] sm:$0xff]
    %v1543 = vld [vmem:[%s3 + $0x6d0] sm:$0xff]
    %v1544 = vld [vmem:[%s3 + $0x6d8] sm:$0xff]
    %v1545 = vld [vmem:[%s3 + $0x6e0] sm:$0xff]
    %v1546 = vld [vmem:[%s3 + $0x6e8] sm:$0xff]
    %v1547 = vld [vmem:[%s3 + $0x6f0] sm:$0xff]
    %v1548 = vld [vmem:[%s3 + $0x6f8] sm:$0xff]
    %v1549 = vld [vmem:[%s3 + $0x700] sm:$0xff]
    %v1550 = vld [vmem:[%s3 + $0x708] sm:$0xff]
    %v1551 = vld [vmem:[%s3 + $0x710] sm:$0xff]
    %v1552 = vld [vmem:[%s3 + $0x718] sm:$0xff]
    %v1553 = vld [vmem:[%s3 + $0x720] sm:$0xff]
    %v1554 = vld [vmem:[%s3 + $0x728] sm:$0xff]
    %v1555 = vld [vmem:[%s3 + $0x730] sm:$0xff]
    %v1556 = vld [vmem:[%s3 + $0x738] sm:$0xff]
    %v1557 = vld [vmem:[%s3 + $0x740] sm:$0xff]
    %v1558 = vld [vmem:[%s3 + $0x748] sm:$0xff]
    %v1559 = vld [vmem:[%s3 + $0x750] sm:$0xff]
    %v1560 = vld [vmem:[%s3 + $0x758] sm:$0xff]
    %v1561 = vld [vmem:[%s3 + $0x760] sm:$0xff]
    %v1562 = vld [vmem:[%s3 + $0x768] sm:$0xff]
    %v1563 = vld [vmem:[%s3 + $0x770] sm:$0xff]
    %v1564 = vld [vmem:[%s3 + $0x778] sm:$0xff]
    %v1565 = vld [vmem:[%s3 + $0x780] sm:$0xff]
    %v1566 = vld [vmem:[%s3 + $0x788] sm:$0xff]
    %v1567 = vld [vmem:[%s3 + $0x790] sm:$0xff]
    %v1568 = vld [vmem:[%s3 + $0x798] sm:$0xff]
    %v1569 = vld [vmem:[%s3 + $0x7a0] sm:$0xff]
    %v1570 = vld [vmem:[%s3 + $0x7a8] sm:$0xff]
    %v1571 = vld [vmem:[%s3 + $0x7b0] sm:$0xff]
    %v1572 = vld [vmem:[%s3 + $0x7b8] sm:$0xff]
    %v1573 = vld [vmem:[%s3 + $0x7c0] sm:$0xff]
    %v1574 = vld [vmem:[%s3 + $0x7c8] sm:$0xff]
    %v1575 = vld [vmem:[%s3 + $0x7d0] sm:$0xff]
    %v1576 = vld [vmem:[%s3 + $0x7d8] sm:$0xff]
    %v1577 = vld [vmem:[%s3 + $0x7e0] sm:$0xff]
    %v1578 = vld [vmem:[%s3 + $0x7e8] sm:$0xff]
    %v1579 = vld [vmem:[%s3 + $0x7f0] sm:$0xff]
    %v1580 = vld [vmem:[%s3 + $0x7f8] sm:$0xff]
    %v1581 = vld [vmem:[%s3 + $0x800] sm:$0xff]
    %v1582 = vld [vmem:[%s3 + $0x808] sm:$0xff]
    %v1583 = vld [vmem:[%s3 + $0x810] sm:$0xff]
    %v1584 = vld [vmem:[%s3 + $0x818] sm:$0xff]
    %v1585 = vld [vmem:[%s3 + $0x820] sm:$0xff]
    %v1586 = vld [vmem:[%s3 + $0x828] sm:$0xff]
    %v1587 = vld [vmem:[%s3 + $0x830] sm:$0xff]
    %v1588 = vld [vmem:[%s3 + $0x838] sm:$0xff]
    %v1589 = vld [vmem:[%s3 + $0x840] sm:$0xff]
    %v1590 = vld [vmem:[%s3 + $0x848] sm:$0xff]
    %v1591 = vld [vmem:[%s3 + $0x850] sm:$0xff]
    %v1592 = vld [vmem:[%s3 + $0x858] sm:$0xff]
    %v1593 = vld [vmem:[%s3 + $0x860] sm:$0xff]
    %v1594 = vld [vmem:[%s3 + $0x868] sm:$0xff]
    %v1595 = vld [vmem:[%s3 + $0x870] sm:$0xff]
    %v1596 = vld [vmem:[%s3 + $0x878] sm:$0xff]
    %v1597 = vld [vmem:[%s3 + $0x880] sm:$0xff]
    %v1598 = vld [vmem:[%s3 + $0x888] sm:$0xff]
    %v1599 = vld [vmem:[%s3 + $0x890] sm:$0xff]
    %v1600 = vld [vmem:[%s3 + $0x898] sm:$0xff]
    %v1601 = vld [vmem:[%s3 + $0x8a0] sm:$0xff]
    %v1602 = vld [vmem:[%s3 + $0x8a8] sm:$0xff]
    %v1603 = vld [vmem:[%s3 + $0x8b0] sm:$0xff]
    %v1604 = vld [vmem:[%s3 + $0x8b8] sm:$0xff]
    %v1605 = vld [vmem:[%s3 + $0x8c0] sm:$0xff]
    %v1606 = vld [vmem:[%s3 + $0x8c8] sm:$0xff]
    %v1607 = vld [vmem:[%s3 + $0x8d0] sm:$0xff]
    %v1608 = vld [vmem:[%s3 + $0x8d8] sm:$0xff]
    %v1609 = vld [vmem:[%s3 + $0x8e0] sm:$0xff]
    %v1610 = vld [vmem:[%s3 + $0x8e8] sm:$0xff]
    %v1611 = vld [vmem:[%s3 + $0x8f0] sm:$0xff]
    %v1612 = vld [vmem:[%s3 + $0x8f8] sm:$0xff]
    %v1613 = vld [vmem:[%s3 + $0x900] sm:$0xff]
    %v1614 = vld [vmem:[%s3 + $0x908] sm:$0xff]
    %v1615 = vld [vmem:[%s3 + $0x910] sm:$0xff]
    %v1616 = vld [vmem:[%s3 + $0x918] sm:$0xff]
    %v1617 = vld [vmem:[%s3 + $0x920] sm:$0xff]
    %v1618 = vld [vmem:[%s3 + $0x928] sm:$0xff]
    %v1619 = vld [vmem:[%s3 + $0x930] sm:$0xff]
    %v1620 = vld [vmem:[%s3 + $0x938] sm:$0xff]
    %v1621 = vld [vmem:[%s3 + $0x940] sm:$0xff]
    %v1622 = vld [vmem:[%s3 + $0x948] sm:$0xff]
    %v1623 = vld [vmem:[%s3 + $0x950] sm:$0xff]
    %v1624 = vld [vmem:[%s3 + $0x958] sm:$0xff]
    %v1625 = vld [vmem:[%s3 + $0x960] sm:$0xff]
    %v1626 = vld [vmem:[%s3 + $0x968] sm:$0xff]
    %v1627 = vld [vmem:[%s3 + $0x970] sm:$0xff]
    %v1628 = vld [vmem:[%s3 + $0x978] sm:$0xff]
    %v1629 = vld [vmem:[%s3 + $0x980] sm:$0xff]
    %v1630 = vld [vmem:[%s3 + $0x988] sm:$0xff]
    %v1631 = vld [vmem:[%s3 + $0x990] sm:$0xff]
    %v1632 = vld [vmem:[%s3 + $0x998] sm:$0xff]
    %v1633 = vld [vmem:[%s3 + $0x9a0] sm:$0xff]
    %v1634 = vld [vmem:[%s3 + $0x9a8] sm:$0xff]
    %v1635 = vld [vmem:[%s3 + $0x9b0] sm:$0xff]
    %v1636 = vld [vmem:[%s3 + $0x9b8] sm:$0xff]
    %v1637 = vld [vmem:[%s3 + $0x9c0] sm:$0xff]
    %v1638 = vld [vmem:[%s3 + $0x9c8] sm:$0xff]
    %v1639 = vld [vmem:[%s3 + $0x9d0] sm:$0xff]
    %v1640 = vld [vmem:[%s3 + $0x9d8] sm:$0xff]
    %v1641 = vld [vmem:[%s3 + $0x9e0] sm:$0xff]
    %v1642 = vld [vmem:[%s3 + $0x9e8] sm:$0xff]
    %v1643 = vld [vmem:[%s3 + $0x9f0] sm:$0xff]
    %v1644 = vld [vmem:[%s3 + $0x9f8] sm:$0xff]
    %v1645 = vld [vmem:[%s3 + $0xa00] sm:$0xff]
    %v1646 = vld [vmem:[%s3 + $0xa08] sm:$0xff]
    %v1647 = vld [vmem:[%s3 + $0xa10] sm:$0xff]
    %v1648 = vld [vmem:[%s3 + $0xa18] sm:$0xff]
    %v1649 = vld [vmem:[%s3 + $0xa20] sm:$0xff]
    %v1650 = vld [vmem:[%s3 + $0xa28] sm:$0xff]
    %v1651 = vld [vmem:[%s3 + $0xa30] sm:$0xff]
    %v1652 = vld [vmem:[%s3 + $0xa38] sm:$0xff]
    %v1653 = vld [vmem:[%s3 + $0xa40] sm:$0xff]
    %v1654 = vld [vmem:[%s3 + $0xa48] sm:$0xff]
    %v1655 = vld [vmem:[%s3 + $0xa50] sm:$0xff]
    %v1656 = vld [vmem:[%s3 + $0xa58] sm:$0xff]
    %v1657 = vld [vmem:[%s3 + $0xa60] sm:$0xff]
    %v1658 = vld [vmem:[%s3 + $0xa68] sm:$0xff]
    %v1659 = vld [vmem:[%s3 + $0xa70] sm:$0xff]
    %v1660 = vld [vmem:[%s3 + $0xa78] sm:$0xff]
    %v1661 = vld [vmem:[%s3 + $0xa80] sm:$0xff]
    %v1662 = vld [vmem:[%s3 + $0xa88] sm:$0xff]
    %v1663 = vld [vmem:[%s3 + $0xa90] sm:$0xff]
    %v1664 = vld [vmem:[%s3 + $0xa98] sm:$0xff]
    %v1665 = vld [vmem:[%s3 + $0xaa0] sm:$0xff]
    %v1666 = vld [vmem:[%s3 + $0xaa8] sm:$0xff]
    %v1667 = vld [vmem:[%s3 + $0xab0] sm:$0xff]
    %v1668 = vld [vmem:[%s3 + $0xab8] sm:$0xff]
    %v1669 = vld [vmem:[%s3 + $0xac0] sm:$0xff]
    %v1670 = vld [vmem:[%s3 + $0xac8] sm:$0xff]
    %v1671 = vld [vmem:[%s3 + $0xad0] sm:$0xff]
    %v1672 = vld [vmem:[%s3 + $0xad8] sm:$0xff]
    %v1673 = vld [vmem:[%s3 + $0xae0] sm:$0xff]
    %v1674 = vld [vmem:[%s3 + $0xae8] sm:$0xff]
    %v1675 = vld [vmem:[%s3 + $0xaf0] sm:$0xff]
    %v1676 = vld [vmem:[%s3 + $0xaf8] sm:$0xff]
    %v1677 = vld [vmem:[%s3 + $0xb00] sm:$0xff]
    %v1678 = vld [vmem:[%s3 + $0xb08] sm:$0xff]
    %v1679 = vld [vmem:[%s3 + $0xb10] sm:$0xff]
    %v1680 = vld [vmem:[%s3 + $0xb18] sm:$0xff]
    %v1681 = vld [vmem:[%s3 + $0xb20] sm:$0xff]
    %v1682 = vld [vmem:[%s3 + $0xb28] sm:$0xff]
    %v1683 = vld [vmem:[%s3 + $0xb30] sm:$0xff]
    %v1684 = vld [vmem:[%s3 + $0xb38] sm:$0xff]
    %v1685 = vld [vmem:[%s3 + $0xb40] sm:$0xff]
    %v1686 = vld [vmem:[%s3 + $0xb48] sm:$0xff]
    %v1687 = vld [vmem:[%s3 + $0xb50] sm:$0xff]
    %v1688 = vld [vmem:[%s3 + $0xb58] sm:$0xff]
    %v1689 = vld [vmem:[%s3 + $0xb60] sm:$0xff]
    %v1690 = vld [vmem:[%s3 + $0xb68] sm:$0xff]
    %v1691 = vld [vmem:[%s3 + $0xb70] sm:$0xff]
    %v1692 = vld [vmem:[%s3 + $0xb78] sm:$0xff]
    %v1693 = vld [vmem:[%s3 + $0xb80] sm:$0xff]
    %v1694 = vld [vmem:[%s3 + $0xb88] sm:$0xff]
    %v1695 = vld [vmem:[%s3 + $0xb90] sm:$0xff]
    %v1696 = vld [vmem:[%s3 + $0xb98] sm:$0xff]
    %v1697 = vld [vmem:[%s3 + $0xba0] sm:$0xff]
    %v1698 = vld [vmem:[%s3 + $0xba8] sm:$0xff]
    %v1699 = vld [vmem:[%s3 + $0xbb0] sm:$0xff]
    %v1700 = vld [vmem:[%s3 + $0xbb8] sm:$0xff]
    %v1701 = vld [vmem:[%s3 + $0xbc0] sm:$0xff]
    %v1702 = vld [vmem:[%s3 + $0xbc8] sm:$0xff]
    %v1703 = vld [vmem:[%s3 + $0xbd0] sm:$0xff]
    %v1704 = vld [vmem:[%s3 + $0xbd8] sm:$0xff]
    %v1705 = vld [vmem:[%s3 + $0xbe0] sm:$0xff]
    %v1706 = vld [vmem:[%s3 + $0xbe8] sm:$0xff]
    %v1707 = vld [vmem:[%s3 + $0xbf0] sm:$0xff]
    %v1708 = vld [vmem:[%s3 + $0xbf8] sm:$0xff]
    %v1709 = vld [vmem:[%s3 + $0xc00] sm:$0xff]
    %v1710 = vld [vmem:[%s3 + $0xc08] sm:$0xff]
    %v1711 = vld [vmem:[%s3 + $0xc10] sm:$0xff]
    %v1712 = vld [vmem:[%s3 + $0xc18] sm:$0xff]
    %v1713 = vld [vmem:[%s3 + $0xc20] sm:$0xff]
    %v1714 = vld [vmem:[%s3 + $0xc28] sm:$0xff]
    %v1715 = vld [vmem:[%s3 + $0xc30] sm:$0xff]
    %v1716 = vld [vmem:[%s3 + $0xc38] sm:$0xff]
    %v1717 = vld [vmem:[%s3 + $0xc40] sm:$0xff]
    %v1718 = vld [vmem:[%s3 + $0xc48] sm:$0xff]
    %v1719 = vld [vmem:[%s3 + $0xc50] sm:$0xff]
    %v1720 = vld [vmem:[%s3 + $0xc58] sm:$0xff]
    %v1721 = vld [vmem:[%s3 + $0xc60] sm:$0xff]
    %v1722 = vld [vmem:[%s3 + $0xc68] sm:$0xff]
    %v1723 = vld [vmem:[%s3 + $0xc70] sm:$0xff]
    %v1724 = vld [vmem:[%s3 + $0xc78] sm:$0xff]
    %v1725 = vld [vmem:[%s3 + $0xc80] sm:$0xff]
    %v1726 = vld [vmem:[%s3 + $0xc88] sm:$0xff]
    %v1727 = vld [vmem:[%s3 + $0xc90] sm:$0xff]
    %v1728 = vld [vmem:[%s3 + $0xc98] sm:$0xff]
    %v1729 = vld [vmem:[%s3 + $0xca0] sm:$0xff]
    %v1730 = vld [vmem:[%s3 + $0xca8] sm:$0xff]
    %v1731 = vld [vmem:[%s3 + $0xcb0] sm:$0xff]
    %v1732 = vld [vmem:[%s3 + $0xcb8] sm:$0xff]
    %v1733 = vld [vmem:[%s3 + $0xcc0] sm:$0xff]
    %v1734 = vld [vmem:[%s3 + $0xcc8] sm:$0xff]
    %v1735 = vld [vmem:[%s3 + $0xcd0] sm:$0xff]
    %v1736 = vld [vmem:[%s3 + $0xcd8] sm:$0xff]
    %v1737 = vld [vmem:[%s3 + $0xce0] sm:$0xff]
    %v1738 = vld [vmem:[%s3 + $0xce8] sm:$0xff]
    %v1739 = vld [vmem:[%s3 + $0xcf0] sm:$0xff]
    %v1740 = vld [vmem:[%s3 + $0xcf8] sm:$0xff]
    %v1741 = vld [vmem:[%s3 + $0xd00] sm:$0xff]
    %v1742 = vld [vmem:[%s3 + $0xd08] sm:$0xff]
    %v1743 = vld [vmem:[%s3 + $0xd10] sm:$0xff]
    %v1744 = vld [vmem:[%s3 + $0xd18] sm:$0xff]
    %v1745 = vld [vmem:[%s3 + $0xd20] sm:$0xff]
    %v1746 = vld [vmem:[%s3 + $0xd28] sm:$0xff]
    %v1747 = vld [vmem:[%s3 + $0xd30] sm:$0xff]
    %v1748 = vld [vmem:[%s3 + $0xd38] sm:$0xff]
    %v1749 = vld [vmem:[%s3 + $0xd40] sm:$0xff]
    %v1750 = vld [vmem:[%s3 + $0xd48] sm:$0xff]
    %v1751 = vld [vmem:[%s3 + $0xd50] sm:$0xff]
    %v1752 = vld [vmem:[%s3 + $0xd58] sm:$0xff]
    %v1753 = vld [vmem:[%s3 + $0xd60] sm:$0xff]
    %v1754 = vld [vmem:[%s3 + $0xd68] sm:$0xff]
    %v1755 = vld [vmem:[%s3 + $0xd70] sm:$0xff]
    %v1756 = vld [vmem:[%s3 + $0xd78] sm:$0xff]
    %v1757 = vld [vmem:[%s3 + $0xd80] sm:$0xff]
    %v1758 = vld [vmem:[%s3 + $0xd88] sm:$0xff]
    %v1759 = vld [vmem:[%s3 + $0xd90] sm:$0xff]
    %v1760 = vld [vmem:[%s3 + $0xd98] sm:$0xff]
    %v1761 = vld [vmem:[%s3 + $0xda0] sm:$0xff]
    %v1762 = vld [vmem:[%s3 + $0xda8] sm:$0xff]
    %v1763 = vld [vmem:[%s3 + $0xdb0] sm:$0xff]
    %v1764 = vld [vmem:[%s3 + $0xdb8] sm:$0xff]
    %v1765 = vld [vmem:[%s3 + $0xdc0] sm:$0xff]
    %v1766 = vld [vmem:[%s3 + $0xdc8] sm:$0xff]
    %v1767 = vld [vmem:[%s3 + $0xdd0] sm:$0xff]
    %v1768 = vld [vmem:[%s3 + $0xdd8] sm:$0xff]
    %v1769 = vld [vmem:[%s3 + $0xde0] sm:$0xff]
    %v1770 = vld [vmem:[%s3 + $0xde8] sm:$0xff]
    %v1771 = vld [vmem:[%s3 + $0xdf0] sm:$0xff]
    %v1772 = vld [vmem:[%s3 + $0xdf8] sm:$0xff]
    %v1773 = vld [vmem:[%s3 + $0xe00] sm:$0xff]
    %v1774 = vld [vmem:[%s3 + $0xe08] sm:$0xff]
    %v1775 = vld [vmem:[%s3 + $0xe10] sm:$0xff]
    %v1776 = vld [vmem:[%s3 + $0xe18] sm:$0xff]
    %v1777 = vld [vmem:[%s3 + $0xe20] sm:$0xff]
    %v1778 = vld [vmem:[%s3 + $0xe28] sm:$0xff]
    %v1779 = vld [vmem:[%s3 + $0xe30] sm:$0xff]
    %v1780 = vld [vmem:[%s3 + $0xe38] sm:$0xff]
    %v1781 = vld [vmem:[%s3 + $0xe40] sm:$0xff]
    %v1782 = vld [vmem:[%s3 + $0xe48] sm:$0xff]
    %v1783 = vld [vmem:[%s3 + $0xe50] sm:$0xff]
    %v1784 = vld [vmem:[%s3 + $0xe58] sm:$0xff]
    %v1785 = vld [vmem:[%s3 + $0xe60] sm:$0xff]
    %v1786 = vld [vmem:[%s3 + $0xe68] sm:$0xff]
    %v1787 = vld [vmem:[%s3 + $0xe70] sm:$0xff]
    %v1788 = vld [vmem:[%s3 + $0xe78] sm:$0xff]
    %v1789 = vld [vmem:[%s3 + $0xe80] sm:$0xff]
    %v1790 = vld [vmem:[%s3 + $0xe88] sm:$0xff]
    %v1791 = vld [vmem:[%s3 + $0xe90] sm:$0xff]
    %v1792 = vld [vmem:[%s3 + $0xe98] sm:$0xff]
    %v1793 = vld [vmem:[%s3 + $0xea0] sm:$0xff]
    %v1794 = vld [vmem:[%s3 + $0xea8] sm:$0xff]
    %v1795 = vld [vmem:[%s3 + $0xeb0] sm:$0xff]
    %v1796 = vld [vmem:[%s3 + $0xeb8] sm:$0xff]
    %v1797 = vld [vmem:[%s3 + $0xec0] sm:$0xff]
    %v1798 = vld [vmem:[%s3 + $0xec8] sm:$0xff]
    %v1799 = vld [vmem:[%s3 + $0xed0] sm:$0xff]
    %v1800 = vld [vmem:[%s3 + $0xed8] sm:$0xff]
    %v1801 = vld [vmem:[%s3 + $0xee0] sm:$0xff]
    %v1802 = vld [vmem:[%s3 + $0xee8] sm:$0xff]
    %v1803 = vld [vmem:[%s3 + $0xef0] sm:$0xff]
    %v1804 = vld [vmem:[%s3 + $0xef8] sm:$0xff]
    %v1805 = vld [vmem:[%s3 + $0xf00] sm:$0xff]
    %v1806 = vld [vmem:[%s3 + $0xf08] sm:$0xff]
    %v1807 = vld [vmem:[%s3 + $0xf10] sm:$0xff]
    %v1808 = vld [vmem:[%s3 + $0xf18] sm:$0xff]
    %v1809 = vld [vmem:[%s3 + $0xf20] sm:$0xff]
    %v1810 = vld [vmem:[%s3 + $0xf28] sm:$0xff]
    %v1811 = vld [vmem:[%s3 + $0xf30] sm:$0xff]
    %v1812 = vld [vmem:[%s3 + $0xf38] sm:$0xff]
    %v1813 = vld [vmem:[%s3 + $0xf40] sm:$0xff]
    %v1814 = vld [vmem:[%s3 + $0xf48] sm:$0xff]
    %v1815 = vld [vmem:[%s3 + $0xf50] sm:$0xff]
    %v1816 = vld [vmem:[%s3 + $0xf58] sm:$0xff]
    %v1817 = vld [vmem:[%s3 + $0xf60] sm:$0xff]
    %v1818 = vld [vmem:[%s3 + $0xf68] sm:$0xff]
    %v1819 = vld [vmem:[%s3 + $0xf70] sm:$0xff]
    %v1820 = vld [vmem:[%s3 + $0xf78] sm:$0xff]
    %v1821 = vld [vmem:[%s3 + $0xf80] sm:$0xff]
    %v1822 = vld [vmem:[%s3 + $0xf88] sm:$0xff]
    %v1823 = vld [vmem:[%s3 + $0xf90] sm:$0xff]
    %v1824 = vld [vmem:[%s3 + $0xf98] sm:$0xff]
    %v1825 = vld [vmem:[%s3 + $0xfa0] sm:$0xff]
    %v1826 = vld [vmem:[%s3 + $0xfa8] sm:$0xff]
    %v1827 = vld [vmem:[%s3 + $0xfb0] sm:$0xff]
    %v1828 = vld [vmem:[%s3 + $0xfb8] sm:$0xff]
    %v1829 = vld [vmem:[%s3 + $0xfc0] sm:$0xff]
    %v1830 = vld [vmem:[%s3 + $0xfc8] sm:$0xff]
    %v1831 = vld [vmem:[%s3 + $0xfd0] sm:$0xff]
    %v1832 = vld [vmem:[%s3 + $0xfd8] sm:$0xff]
    %v1833 = vld [vmem:[%s3 + $0xfe0] sm:$0xff]
    %v1834 = vld [vmem:[%s3 + $0xfe8] sm:$0xff]
    %v1835 = vld [vmem:[%s3 + $0xff0] sm:$0xff]
    %v1836 = vld [vmem:[%s3 + $0xff8] sm:$0xff]
    %v1837 = vld [vmem:[%s3 + $0x1000] sm:$0xff]
    %v1838 = vld [vmem:[%s3 + $0x1008] sm:$0xff]
    %v1839 = vld [vmem:[%s3 + $0x1010] sm:$0xff]
    %v1840 = vld [vmem:[%s3 + $0x1018] sm:$0xff]
    %v1841 = vld [vmem:[%s3 + $0x1020] sm:$0xff]
    %v1842 = vld [vmem:[%s3 + $0x1028] sm:$0xff]
    %v1843 = vld [vmem:[%s3 + $0x1030] sm:$0xff]
    %v1844 = vld [vmem:[%s3 + $0x1038] sm:$0xff]
    %v1845 = vld [vmem:[%s3 + $0x1040] sm:$0xff]
    %v1846 = vld [vmem:[%s3 + $0x1048] sm:$0xff]
    %v1847 = vld [vmem:[%s3 + $0x1050] sm:$0xff]
    %v1848 = vld [vmem:[%s3 + $0x1058] sm:$0xff]
    %v1849 = vld [vmem:[%s3 + $0x1060] sm:$0xff]
    %v1850 = vld [vmem:[%s3 + $0x1068] sm:$0xff]
    %v1851 = vld [vmem:[%s3 + $0x1070] sm:$0xff]
    %v1852 = vld [vmem:[%s3 + $0x1078] sm:$0xff]
    %v1853 = vld [vmem:[%s3 + $0x1080] sm:$0xff]
    %v1854 = vld [vmem:[%s3 + $0x1088] sm:$0xff]
    %v1855 = vld [vmem:[%s3 + $0x1090] sm:$0xff]
    %v1856 = vld [vmem:[%s3 + $0x1098] sm:$0xff]
    %v1857 = vld [vmem:[%s3 + $0x10a0] sm:$0xff]
    %v1858 = vld [vmem:[%s3 + $0x10a8] sm:$0xff]
    %v1859 = vld [vmem:[%s3 + $0x10b0] sm:$0xff]
    %v1860 = vld [vmem:[%s3 + $0x10b8] sm:$0xff]
    %v1861 = vld [vmem:[%s3 + $0x10c0] sm:$0xff]
    %v1862 = vld [vmem:[%s3 + $0x10c8] sm:$0xff]
    %v1863 = vld [vmem:[%s3 + $0x10d0] sm:$0xff]
    %v1864 = vld [vmem:[%s3 + $0x10d8] sm:$0xff]
    %v1865 = vld [vmem:[%s3 + $0x10e0] sm:$0xff]
    %v1866 = vld [vmem:[%s3 + $0x10e8] sm:$0xff]
    %v1867 = vld [vmem:[%s3 + $0x10f0] sm:$0xff]
    %v1868 = vld [vmem:[%s3 + $0x10f8] sm:$0xff]
    %v1869 = vld [vmem:[%s3 + $0x1100] sm:$0xff]
    %v1870 = vld [vmem:[%s3 + $0x1108] sm:$0xff]
    %v1871 = vld [vmem:[%s3 + $0x1110] sm:$0xff]
    %v1872 = vld [vmem:[%s3 + $0x1118] sm:$0xff]
    %v1873 = vld [vmem:[%s3 + $0x1120] sm:$0xff]
    %v1874 = vld [vmem:[%s3 + $0x1128] sm:$0xff]
    %v1875 = vld [vmem:[%s3 + $0x1130] sm:$0xff]
    %v1876 = vld [vmem:[%s3 + $0x1138] sm:$0xff]
    %v1877 = vld [vmem:[%s3 + $0x1140] sm:$0xff]
    %v1878 = vld [vmem:[%s3 + $0x1148] sm:$0xff]
    %v1879 = vld [vmem:[%s3 + $0x1150] sm:$0xff]
    %v1880 = vld [vmem:[%s3 + $0x1158] sm:$0xff]
    %v1881 = vld [vmem:[%s3 + $0x1160] sm:$0xff]
    %v1882 = vld [vmem:[%s3 + $0x1168] sm:$0xff]
    %v1883 = vld [vmem:[%s3 + $0x1170] sm:$0xff]
    %v1884 = vld [vmem:[%s3 + $0x1178] sm:$0xff]
    %v1885 = vld [vmem:[%s3 + $0x1180] sm:$0xff]
    %v1886 = vld [vmem:[%s3 + $0x1188] sm:$0xff]
    %v1887 = vld [vmem:[%s3 + $0x1190] sm:$0xff]
    %v1888 = vld [vmem:[%s3 + $0x1198] sm:$0xff]
    %v1889 = vld [vmem:[%s3 + $0x11a0] sm:$0xff]
    %v1890 = vld [vmem:[%s3 + $0x11a8] sm:$0xff]
    %v1891 = vld [vmem:[%s3 + $0x11b0] sm:$0xff]
    %v1892 = vld [vmem:[%s3 + $0x11b8] sm:$0xff]
    %v1893 = vld [vmem:[%s3 + $0x11c0] sm:$0xff]
    %v1894 = vld [vmem:[%s3 + $0x11c8] sm:$0xff]
    %v1895 = vld [vmem:[%s3 + $0x11d0] sm:$0xff]
    %v1896 = vld [vmem:[%s3 + $0x11d8] sm:$0xff]
    %v1897 = vld [vmem:[%s3 + $0x11e0] sm:$0xff]
    %v1898 = vld [vmem:[%s3 + $0x11e8] sm:$0xff]
    %v1899 = vld [vmem:[%s3 + $0x11f0] sm:$0xff]
    %v1900 = vld [vmem:[%s3 + $0x11f8] sm:$0xff]
    %v1901 = vld [vmem:[%s4] sm:$0x3]
    %v1903 = vlaneseq
    %v1904 = vshrl.u32 %v1903, 7
    %v1905 = vsub.s32 0, %v1904
    %v1906 = vrot.slane %v1901, %v1905
    %v1907 = vlaneseq
    %v1908 = vshrl.u32 %v1907, 7
    %v1909 = vsub.s32 1, %v1908
    %v1910 = vrot.slane %v1901, %v1909
    %1913 = vmatprep.subr.mxu0 %v1356
    %1914 = vmatpush1.msra.mxu0 %v1355
    %1915 = vmatprep.subr.mxu0 %v1354
    %1916 = vmatpush1.msra.mxu0 %v1353
    %1917 = vmatprep.subr.mxu0 %v1352
    %1918 = vmatpush1.msra.mxu0 %v1351
    %1919 = vmatprep.subr.mxu0 %v1350
    %1920 = vmatpush1.msra.mxu0 %v1349
    %1921 = vmatprep.subr.mxu0 %v1348
    %1922 = vmatpush1.msra.mxu0 %v1347
    %1923 = vmatprep.subr.mxu0 %v1346
    %1924 = vmatpush1.msra.mxu0 %v1345
    %1925 = vmatprep.subr.mxu0 %v1344
    %1926 = vmatpush1.msra.mxu0 %v1343
    %1927 = vmatprep.subr.mxu0 %v1342
    %1928 = vmatpush1.msra.mxu0 %v1341
    %1929 = vmatprep.subr.mxu0 %v1340
    %1930 = vmatpush1.msra.mxu0 %v1339
    %1931 = vmatprep.subr.mxu0 %v1338
    %1932 = vmatpush1.msra.mxu0 %v1337
    %1933 = vmatprep.subr.mxu0 %v1336
    %1934 = vmatpush1.msra.mxu0 %v1335
    %1935 = vmatprep.subr.mxu0 %v1334
    %1936 = vmatpush1.msra.mxu0 %v1333
    %1937 = vmatprep.subr.mxu0 %v1332
    %1938 = vmatpush1.msra.mxu0 %v1331
    %1939 = vmatprep.subr.mxu0 %v1330
    %1940 = vmatpush1.msra.mxu0 %v1329
    %1941 = vmatprep.subr.mxu0 %v1328
    %1942 = vmatpush1.msra.mxu0 %v1327
    %1943 = vmatprep.subr.mxu0 %v1326
    %1944 = vmatpush1.msra.mxu0 %v1325
    %1945 = vmatprep.subr.mxu0 %v1388
    %1946 = vmatpush2.msra.mxu0 %v1387
    %1947 = vmatprep.subr.mxu0 %v1386
    %1948 = vmatpush2.msra.mxu0 %v1385
    %1949 = vmatprep.subr.mxu0 %v1384
    %1950 = vmatpush2.msra.mxu0 %v1383
    %1951 = vmatprep.subr.mxu0 %v1382
    %1952 = vmatpush2.msra.mxu0 %v1381
    %1953 = vmatprep.subr.mxu0 %v1380
    %1954 = vmatpush2.msra.mxu0 %v1379
    %1955 = vmatprep.subr.mxu0 %v1378
    %1956 = vmatpush2.msra.mxu0 %v1377
    %1957 = vmatprep.subr.mxu0 %v1376
    %1958 = vmatpush2.msra.mxu0 %v1375
    %1959 = vmatprep.subr.mxu0 %v1374
    %1960 = vmatpush2.msra.mxu0 %v1373
    %1961 = vmatprep.subr.mxu0 %v1372
    %1962 = vmatpush2.msra.mxu0 %v1371
    %1963 = vmatprep.subr.mxu0 %v1370
    %1964 = vmatpush2.msra.mxu0 %v1369
    %1965 = vmatprep.subr.mxu0 %v1368
    %1966 = vmatpush2.msra.mxu0 %v1367
    %1967 = vmatprep.subr.mxu0 %v1366
    %1968 = vmatpush2.msra.mxu0 %v1365
    %1969 = vmatprep.subr.mxu0 %v1364
    %1970 = vmatpush2.msra.mxu0 %v1363
    %1971 = vmatprep.subr.mxu0 %v1362
    %1972 = vmatpush2.msra.mxu0 %v1361
    %1973 = vmatprep.subr.mxu0 %v1360
    %1974 = vmatpush2.msra.mxu0 %v1359
    %1975 = vmatprep.subr.mxu0 %v1358
    %1976 = vmatpush2.msra.mxu0 %v1357
    %1977 = vmatprep.mubr.f32.mxu0 %v1100
    %1978 = vmatmul.mubr.f32.gmra.mxu0 %v1099
    %v1979 = vpop.f32.mrf.mxu0
    %v1980 = vadd.f32 %v1906, %v1979
    %v1981 = vpop.f32.mrf.mxu0
    %v1982 = vadd.f32 %v1910, %v1981
    %1983 = vmatprep.mubr.f32.mxu0 %v1102
    %1984 = vmatmul.mubr.f32.gmra.mxu0 %v1101
    %v1985 = vpop.f32.mrf.mxu0
    %v1986 = vadd.f32 %v1906, %v1985
    %v1987 = vpop.f32.mrf.mxu0
    %v1988 = vadd.f32 %v1910, %v1987
    %1989 = vdwg.mxu0
    %1990 = vmatprep.subr.mxu0 %v1420
    %1991 = vmatpush1.msra.mxu0 %v1419
    %1992 = vmatprep.subr.mxu0 %v1418
    %1993 = vmatpush1.msra.mxu0 %v1417
    %1994 = vmatprep.subr.mxu0 %v1416
    %1995 = vmatpush1.msra.mxu0 %v1415
    %1996 = vmatprep.subr.mxu0 %v1414
    %1997 = vmatpush1.msra.mxu0 %v1413
    %1998 = vmatprep.subr.mxu0 %v1412
    %1999 = vmatpush1.msra.mxu0 %v1411
    %2000 = vmatprep.subr.mxu0 %v1410
    %2001 = vmatpush1.msra.mxu0 %v1409
    %2002 = vmatprep.subr.mxu0 %v1408
    %2003 = vmatpush1.msra.mxu0 %v1407
    %2004 = vmatprep.subr.mxu0 %v1406
    %2005 = vmatpush1.msra.mxu0 %v1405
    %2006 = vmatprep.subr.mxu0 %v1404
    %2007 = vmatpush1.msra.mxu0 %v1403
    %2008 = vmatprep.subr.mxu0 %v1402
    %2009 = vmatpush1.msra.mxu0 %v1401
    %2010 = vmatprep.subr.mxu0 %v1400
    %2011 = vmatpush1.msra.mxu0 %v1399
    %2012 = vmatprep.subr.mxu0 %v1398
    %2013 = vmatpush1.msra.mxu0 %v1397
    %2014 = vmatprep.subr.mxu0 %v1396
    %2015 = vmatpush1.msra.mxu0 %v1395
    %2016 = vmatprep.subr.mxu0 %v1394
    %2017 = vmatpush1.msra.mxu0 %v1393
    %2018 = vmatprep.subr.mxu0 %v1392
    %2019 = vmatpush1.msra.mxu0 %v1391
    %2020 = vmatprep.subr.mxu0 %v1390
    %2021 = vmatpush1.msra.mxu0 %v1389
    %2022 = vmatprep.subr.mxu0 %v1452
    %2023 = vmatpush2.msra.mxu0 %v1451
    %2024 = vmatprep.subr.mxu0 %v1450
    %2025 = vmatpush2.msra.mxu0 %v1449
    %2026 = vmatprep.subr.mxu0 %v1448
    %2027 = vmatpush2.msra.mxu0 %v1447
    %2028 = vmatprep.subr.mxu0 %v1446
    %2029 = vmatpush2.msra.mxu0 %v1445
    %2030 = vmatprep.subr.mxu0 %v1444
    %2031 = vmatpush2.msra.mxu0 %v1443
    %2032 = vmatprep.subr.mxu0 %v1442
    %2033 = vmatpush2.msra.mxu0 %v1441
    %2034 = vmatprep.subr.mxu0 %v1440
    %2035 = vmatpush2.msra.mxu0 %v1439
    %2036 = vmatprep.subr.mxu0 %v1438
    %2037 = vmatpush2.msra.mxu0 %v1437
    %2038 = vmatprep.subr.mxu0 %v1436
    %2039 = vmatpush2.msra.mxu0 %v1435
    %2040 = vmatprep.subr.mxu0 %v1434
    %2041 = vmatpush2.msra.mxu0 %v1433
    %2042 = vmatprep.subr.mxu0 %v1432
    %2043 = vmatpush2.msra.mxu0 %v1431
    %2044 = vmatprep.subr.mxu0 %v1430
    %2045 = vmatpush2.msra.mxu0 %v1429
    %2046 = vmatprep.subr.mxu0 %v1428
    %2047 = vmatpush2.msra.mxu0 %v1427
    %2048 = vmatprep.subr.mxu0 %v1426
    %2049 = vmatpush2.msra.mxu0 %v1425
    %2050 = vmatprep.subr.mxu0 %v1424
    %2051 = vmatpush2.msra.mxu0 %v1423
    %2052 = vmatprep.subr.mxu0 %v1422
    %2053 = vmatpush2.msra.mxu0 %v1421
    %2054 = vmatprep.mubr.f32.mxu0 %v1218
    %2055 = vmatmul.mubr.f32.gmra.mxu0 %v1217
    %v2056 = vpop.f32.mrf.mxu0
    %v2057 = vadd.f32 %v1980, %v2056
    %v2058 = vpop.f32.mrf.mxu0
    %v2059 = vadd.f32 %v1982, %v2058
    %2060 = vmatprep.mubr.f32.mxu0 %v1220
    %2061 = vmatmul.mubr.f32.gmra.mxu0 %v1219
    %v2062 = vpop.f32.mrf.mxu0
    %v2063 = vadd.f32 %v1986, %v2062
    %v2064 = vpop.f32.mrf.mxu0
    %v2065 = vadd.f32 %v1988, %v2064
    %2066 = vdwg.mxu0
    %2067 = vmatprep.subr.mxu0 %v1484
    %2068 = vmatpush1.msra.mxu0 %v1483
    %2069 = vmatprep.subr.mxu0 %v1482
    %2070 = vmatpush1.msra.mxu0 %v1481
    %2071 = vmatprep.subr.mxu0 %v1480
    %2072 = vmatpush1.msra.mxu0 %v1479
    %2073 = vmatprep.subr.mxu0 %v1478
    %2074 = vmatpush1.msra.mxu0 %v1477
    %2075 = vmatprep.subr.mxu0 %v1476
    %2076 = vmatpush1.msra.mxu0 %v1475
    %2077 = vmatprep.subr.mxu0 %v1474
    %2078 = vmatpush1.msra.mxu0 %v1473
    %2079 = vmatprep.subr.mxu0 %v1472
    %2080 = vmatpush1.msra.mxu0 %v1471
    %2081 = vmatprep.subr.mxu0 %v1470
    %2082 = vmatpush1.msra.mxu0 %v1469
    %2083 = vmatprep.subr.mxu0 %v1468
    %2084 = vmatpush1.msra.mxu0 %v1467
    %2085 = vmatprep.subr.mxu0 %v1466
    %2086 = vmatpush1.msra.mxu0 %v1465
    %2087 = vmatprep.subr.mxu0 %v1464
    %2088 = vmatpush1.msra.mxu0 %v1463
    %2089 = vmatprep.subr.mxu0 %v1462
    %2090 = vmatpush1.msra.mxu0 %v1461
    %2091 = vmatprep.subr.mxu0 %v1460
    %2092 = vmatpush1.msra.mxu0 %v1459
    %2093 = vmatprep.subr.mxu0 %v1458
    %2094 = vmatpush1.msra.mxu0 %v1457
    %2095 = vmatprep.subr.mxu0 %v1456
    %2096 = vmatpush1.msra.mxu0 %v1455
    %2097 = vmatprep.subr.mxu0 %v1454
    %2098 = vmatpush1.msra.mxu0 %v1453
    %2099 = vmatprep.subr.mxu0 %v1516
    %2100 = vmatpush2.msra.mxu0 %v1515
    %2101 = vmatprep.subr.mxu0 %v1514
    %2102 = vmatpush2.msra.mxu0 %v1513
    %2103 = vmatprep.subr.mxu0 %v1512
    %2104 = vmatpush2.msra.mxu0 %v1511
    %2105 = vmatprep.subr.mxu0 %v1510
    %2106 = vmatpush2.msra.mxu0 %v1509
    %2107 = vmatprep.subr.mxu0 %v1508
    %2108 = vmatpush2.msra.mxu0 %v1507
    %2109 = vmatprep.subr.mxu0 %v1506
    %2110 = vmatpush2.msra.mxu0 %v1505
    %2111 = vmatprep.subr.mxu0 %v1504
    %2112 = vmatpush2.msra.mxu0 %v1503
    %2113 = vmatprep.subr.mxu0 %v1502
    %2114 = vmatpush2.msra.mxu0 %v1501
    %2115 = vmatprep.subr.mxu0 %v1500
    %2116 = vmatpush2.msra.mxu0 %v1499
    %2117 = vmatprep.subr.mxu0 %v1498
    %2118 = vmatpush2.msra.mxu0 %v1497
    %2119 = vmatprep.subr.mxu0 %v1496
    %2120 = vmatpush2.msra.mxu0 %v1495
    %2121 = vmatprep.subr.mxu0 %v1494
    %2122 = vmatpush2.msra.mxu0 %v1493
    %2123 = vmatprep.subr.mxu0 %v1492
    %2124 = vmatpush2.msra.mxu0 %v1491
    %2125 = vmatprep.subr.mxu0 %v1490
    %2126 = vmatpush2.msra.mxu0 %v1489
    %2127 = vmatprep.subr.mxu0 %v1488
    %2128 = vmatpush2.msra.mxu0 %v1487
    %2129 = vmatprep.subr.mxu0 %v1486
    %2130 = vmatpush2.msra.mxu0 %v1485
    %2131 = vmatprep.mubr.f32.mxu0 %v1238
    %2132 = vmatmul.mubr.f32.gmra.mxu0 %v1237
    %v2133 = vpop.f32.mrf.mxu0
    %v2134 = vadd.f32 %v2057, %v2133
    %v2135 = vpop.f32.mrf.mxu0
    %v2136 = vadd.f32 %v2059, %v2135
    %2137 = vmatprep.mubr.f32.mxu0 %v1240
    %2138 = vmatmul.mubr.f32.gmra.mxu0 %v1239
    %v2139 = vpop.f32.mrf.mxu0
    %v2140 = vadd.f32 %v2063, %v2139
    %v2141 = vpop.f32.mrf.mxu0
    %v2142 = vadd.f32 %v2065, %v2141
    %2143 = vdwg.mxu0
    %2144 = vmatprep.subr.mxu0 %v1548
    %2145 = vmatpush1.msra.mxu0 %v1547
    %2146 = vmatprep.subr.mxu0 %v1546
    %2147 = vmatpush1.msra.mxu0 %v1545
    %2148 = vmatprep.subr.mxu0 %v1544
    %2149 = vmatpush1.msra.mxu0 %v1543
    %2150 = vmatprep.subr.mxu0 %v1542
    %2151 = vmatpush1.msra.mxu0 %v1541
    %2152 = vmatprep.subr.mxu0 %v1540
    %2153 = vmatpush1.msra.mxu0 %v1539
    %2154 = vmatprep.subr.mxu0 %v1538
    %2155 = vmatpush1.msra.mxu0 %v1537
    %2156 = vmatprep.subr.mxu0 %v1536
    %2157 = vmatpush1.msra.mxu0 %v1535
    %2158 = vmatprep.subr.mxu0 %v1534
    %2159 = vmatpush1.msra.mxu0 %v1533
    %2160 = vmatprep.subr.mxu0 %v1532
    %2161 = vmatpush1.msra.mxu0 %v1531
    %2162 = vmatprep.subr.mxu0 %v1530
    %2163 = vmatpush1.msra.mxu0 %v1529
    %2164 = vmatprep.subr.mxu0 %v1528
    %2165 = vmatpush1.msra.mxu0 %v1527
    %2166 = vmatprep.subr.mxu0 %v1526
    %2167 = vmatpush1.msra.mxu0 %v1525
    %2168 = vmatprep.subr.mxu0 %v1524
    %2169 = vmatpush1.msra.mxu0 %v1523
    %2170 = vmatprep.subr.mxu0 %v1522
    %2171 = vmatpush1.msra.mxu0 %v1521
    %2172 = vmatprep.subr.mxu0 %v1520
    %2173 = vmatpush1.msra.mxu0 %v1519
    %2174 = vmatprep.subr.mxu0 %v1518
    %2175 = vmatpush1.msra.mxu0 %v1517
    %2176 = vmatprep.subr.mxu0 %v1580
    %2177 = vmatpush2.msra.mxu0 %v1579
    %2178 = vmatprep.subr.mxu0 %v1578
    %2179 = vmatpush2.msra.mxu0 %v1577
    %2180 = vmatprep.subr.mxu0 %v1576
    %2181 = vmatpush2.msra.mxu0 %v1575
    %2182 = vmatprep.subr.mxu0 %v1574
    %2183 = vmatpush2.msra.mxu0 %v1573
    %2184 = vmatprep.subr.mxu0 %v1572
    %2185 = vmatpush2.msra.mxu0 %v1571
    %2186 = vmatprep.subr.mxu0 %v1570
    %2187 = vmatpush2.msra.mxu0 %v1569
    %2188 = vmatprep.subr.mxu0 %v1568
    %2189 = vmatpush2.msra.mxu0 %v1567
    %2190 = vmatprep.subr.mxu0 %v1566
    %2191 = vmatpush2.msra.mxu0 %v1565
    %2192 = vmatprep.subr.mxu0 %v1564
    %2193 = vmatpush2.msra.mxu0 %v1563
    %2194 = vmatprep.subr.mxu0 %v1562
    %2195 = vmatpush2.msra.mxu0 %v1561
    %2196 = vmatprep.subr.mxu0 %v1560
    %2197 = vmatpush2.msra.mxu0 %v1559
    %2198 = vmatprep.subr.mxu0 %v1558
    %2199 = vmatpush2.msra.mxu0 %v1557
    %2200 = vmatprep.subr.mxu0 %v1556
    %2201 = vmatpush2.msra.mxu0 %v1555
    %2202 = vmatprep.subr.mxu0 %v1554
    %2203 = vmatpush2.msra.mxu0 %v1553
    %2204 = vmatprep.subr.mxu0 %v1552
    %2205 = vmatpush2.msra.mxu0 %v1551
    %2206 = vmatprep.subr.mxu0 %v1550
    %2207 = vmatpush2.msra.mxu0 %v1549
    %2208 = vmatprep.mubr.f32.mxu0 %v1127
    %2209 = vmatmul.mubr.f32.gmra.mxu0 %v1124
    %v2210 = vpop.f32.mrf.mxu0
    %v2211 = vadd.f32 %v2134, %v2210
    %v2212 = vpop.f32.mrf.mxu0
    %v2213 = vadd.f32 %v2136, %v2212
    %2214 = vmatprep.mubr.f32.mxu0 %v1133
    %2215 = vmatmul.mubr.f32.gmra.mxu0 %v1130
    %v2216 = vpop.f32.mrf.mxu0
    %v2217 = vadd.f32 %v2140, %v2216
    %v2218 = vpop.f32.mrf.mxu0
    %v2219 = vadd.f32 %v2142, %v2218
    %2220 = vdwg.mxu0
    %2221 = vmatprep.subr.mxu0 %v1612
    %2222 = vmatpush1.msra.mxu0 %v1611
    %2223 = vmatprep.subr.mxu0 %v1610
    %2224 = vmatpush1.msra.mxu0 %v1609
    %2225 = vmatprep.subr.mxu0 %v1608
    %2226 = vmatpush1.msra.mxu0 %v1607
    %2227 = vmatprep.subr.mxu0 %v1606
    %2228 = vmatpush1.msra.mxu0 %v1605
    %2229 = vmatprep.subr.mxu0 %v1604
    %2230 = vmatpush1.msra.mxu0 %v1603
    %2231 = vmatprep.subr.mxu0 %v1602
    %2232 = vmatpush1.msra.mxu0 %v1601
    %2233 = vmatprep.subr.mxu0 %v1600
    %2234 = vmatpush1.msra.mxu0 %v1599
    %2235 = vmatprep.subr.mxu0 %v1598
    %2236 = vmatpush1.msra.mxu0 %v1597
    %2237 = vmatprep.subr.mxu0 %v1596
    %2238 = vmatpush1.msra.mxu0 %v1595
    %2239 = vmatprep.subr.mxu0 %v1594
    %2240 = vmatpush1.msra.mxu0 %v1593
    %2241 = vmatprep.subr.mxu0 %v1592
    %2242 = vmatpush1.msra.mxu0 %v1591
    %2243 = vmatprep.subr.mxu0 %v1590
    %2244 = vmatpush1.msra.mxu0 %v1589
    %2245 = vmatprep.subr.mxu0 %v1588
    %2246 = vmatpush1.msra.mxu0 %v1587
    %2247 = vmatprep.subr.mxu0 %v1586
    %2248 = vmatpush1.msra.mxu0 %v1585
    %2249 = vmatprep.subr.mxu0 %v1584
    %2250 = vmatpush1.msra.mxu0 %v1583
    %2251 = vmatprep.subr.mxu0 %v1582
    %2252 = vmatpush1.msra.mxu0 %v1581
    %2253 = vmatprep.subr.mxu0 %v1644
    %2254 = vmatpush2.msra.mxu0 %v1643
    %2255 = vmatprep.subr.mxu0 %v1642
    %2256 = vmatpush2.msra.mxu0 %v1641
    %2257 = vmatprep.subr.mxu0 %v1640
    %2258 = vmatpush2.msra.mxu0 %v1639
    %2259 = vmatprep.subr.mxu0 %v1638
    %2260 = vmatpush2.msra.mxu0 %v1637
    %2261 = vmatprep.subr.mxu0 %v1636
    %2262 = vmatpush2.msra.mxu0 %v1635
    %2263 = vmatprep.subr.mxu0 %v1634
    %2264 = vmatpush2.msra.mxu0 %v1633
    %2265 = vmatprep.subr.mxu0 %v1632
    %2266 = vmatpush2.msra.mxu0 %v1631
    %2267 = vmatprep.subr.mxu0 %v1630
    %2268 = vmatpush2.msra.mxu0 %v1629
    %2269 = vmatprep.subr.mxu0 %v1628
    %2270 = vmatpush2.msra.mxu0 %v1627
    %2271 = vmatprep.subr.mxu0 %v1626
    %2272 = vmatpush2.msra.mxu0 %v1625
    %2273 = vmatprep.subr.mxu0 %v1624
    %2274 = vmatpush2.msra.mxu0 %v1623
    %2275 = vmatprep.subr.mxu0 %v1622
    %2276 = vmatpush2.msra.mxu0 %v1621
    %2277 = vmatprep.subr.mxu0 %v1620
    %2278 = vmatpush2.msra.mxu0 %v1619
    %2279 = vmatprep.subr.mxu0 %v1618
    %2280 = vmatpush2.msra.mxu0 %v1617
    %2281 = vmatprep.subr.mxu0 %v1616
    %2282 = vmatpush2.msra.mxu0 %v1615
    %2283 = vmatprep.subr.mxu0 %v1614
    %2284 = vmatpush2.msra.mxu0 %v1613
    %2285 = vmatprep.mubr.f32.mxu0 %v1258
    %2286 = vmatmul.mubr.f32.gmra.mxu0 %v1257
    %v2287 = vpop.f32.mrf.mxu0
    %v2288 = vadd.f32 %v2211, %v2287
    %v2289 = vpop.f32.mrf.mxu0
    %v2290 = vadd.f32 %v2213, %v2289
    %2291 = vmatprep.mubr.f32.mxu0 %v1260
    %2292 = vmatmul.mubr.f32.gmra.mxu0 %v1259
    %v2293 = vpop.f32.mrf.mxu0
    %v2294 = vadd.f32 %v2217, %v2293
    %v2295 = vpop.f32.mrf.mxu0
    %v2296 = vadd.f32 %v2219, %v2295
    %2297 = vdwg.mxu0
    %2298 = vmatprep.subr.mxu0 %v1676
    %2299 = vmatpush1.msra.mxu0 %v1675
    %2300 = vmatprep.subr.mxu0 %v1674
    %2301 = vmatpush1.msra.mxu0 %v1673
    %2302 = vmatprep.subr.mxu0 %v1672
    %2303 = vmatpush1.msra.mxu0 %v1671
    %2304 = vmatprep.subr.mxu0 %v1670
    %2305 = vmatpush1.msra.mxu0 %v1669
    %2306 = vmatprep.subr.mxu0 %v1668
    %2307 = vmatpush1.msra.mxu0 %v1667
    %2308 = vmatprep.subr.mxu0 %v1666
    %2309 = vmatpush1.msra.mxu0 %v1665
    %2310 = vmatprep.subr.mxu0 %v1664
    %2311 = vmatpush1.msra.mxu0 %v1663
    %2312 = vmatprep.subr.mxu0 %v1662
    %2313 = vmatpush1.msra.mxu0 %v1661
    %2314 = vmatprep.subr.mxu0 %v1660
    %2315 = vmatpush1.msra.mxu0 %v1659
    %2316 = vmatprep.subr.mxu0 %v1658
    %2317 = vmatpush1.msra.mxu0 %v1657
    %2318 = vmatprep.subr.mxu0 %v1656
    %2319 = vmatpush1.msra.mxu0 %v1655
    %2320 = vmatprep.subr.mxu0 %v1654
    %2321 = vmatpush1.msra.mxu0 %v1653
    %2322 = vmatprep.subr.mxu0 %v1652
    %2323 = vmatpush1.msra.mxu0 %v1651
    %2324 = vmatprep.subr.mxu0 %v1650
    %2325 = vmatpush1.msra.mxu0 %v1649
    %2326 = vmatprep.subr.mxu0 %v1648
    %2327 = vmatpush1.msra.mxu0 %v1647
    %2328 = vmatprep.subr.mxu0 %v1646
    %2329 = vmatpush1.msra.mxu0 %v1645
    %2330 = vmatprep.subr.mxu0 %v1708
    %2331 = vmatpush2.msra.mxu0 %v1707
    %2332 = vmatprep.subr.mxu0 %v1706
    %2333 = vmatpush2.msra.mxu0 %v1705
    %2334 = vmatprep.subr.mxu0 %v1704
    %2335 = vmatpush2.msra.mxu0 %v1703
    %2336 = vmatprep.subr.mxu0 %v1702
    %2337 = vmatpush2.msra.mxu0 %v1701
    %2338 = vmatprep.subr.mxu0 %v1700
    %2339 = vmatpush2.msra.mxu0 %v1699
    %2340 = vmatprep.subr.mxu0 %v1698
    %2341 = vmatpush2.msra.mxu0 %v1697
    %2342 = vmatprep.subr.mxu0 %v1696
    %2343 = vmatpush2.msra.mxu0 %v1695
    %2344 = vmatprep.subr.mxu0 %v1694
    %2345 = vmatpush2.msra.mxu0 %v1693
    %2346 = vmatprep.subr.mxu0 %v1692
    %2347 = vmatpush2.msra.mxu0 %v1691
    %2348 = vmatprep.subr.mxu0 %v1690
    %2349 = vmatpush2.msra.mxu0 %v1689
    %2350 = vmatprep.subr.mxu0 %v1688
    %2351 = vmatpush2.msra.mxu0 %v1687
    %2352 = vmatprep.subr.mxu0 %v1686
    %2353 = vmatpush2.msra.mxu0 %v1685
    %2354 = vmatprep.subr.mxu0 %v1684
    %2355 = vmatpush2.msra.mxu0 %v1683
    %2356 = vmatprep.subr.mxu0 %v1682
    %2357 = vmatpush2.msra.mxu0 %v1681
    %2358 = vmatprep.subr.mxu0 %v1680
    %2359 = vmatpush2.msra.mxu0 %v1679
    %2360 = vmatprep.subr.mxu0 %v1678
    %2361 = vmatpush2.msra.mxu0 %v1677
    %2362 = vmatprep.mubr.f32.mxu0 %v1278
    %2363 = vmatmul.mubr.f32.gmra.mxu0 %v1277
    %v2364 = vpop.f32.mrf.mxu0
    %v2365 = vadd.f32 %v2288, %v2364
    %v2366 = vpop.f32.mrf.mxu0
    %v2367 = vadd.f32 %v2290, %v2366
    %2368 = vmatprep.mubr.f32.mxu0 %v1280
    %2369 = vmatmul.mubr.f32.gmra.mxu0 %v1279
    %v2370 = vpop.f32.mrf.mxu0
    %v2371 = vadd.f32 %v2294, %v2370
    %v2372 = vpop.f32.mrf.mxu0
    %v2373 = vadd.f32 %v2296, %v2372
    %2374 = vdwg.mxu0
    %2375 = vmatprep.subr.mxu0 %v1740
    %2376 = vmatpush1.msra.mxu0 %v1739
    %2377 = vmatprep.subr.mxu0 %v1738
    %2378 = vmatpush1.msra.mxu0 %v1737
    %2379 = vmatprep.subr.mxu0 %v1736
    %2380 = vmatpush1.msra.mxu0 %v1735
    %2381 = vmatprep.subr.mxu0 %v1734
    %2382 = vmatpush1.msra.mxu0 %v1733
    %2383 = vmatprep.subr.mxu0 %v1732
    %2384 = vmatpush1.msra.mxu0 %v1731
    %2385 = vmatprep.subr.mxu0 %v1730
    %2386 = vmatpush1.msra.mxu0 %v1729
    %2387 = vmatprep.subr.mxu0 %v1728
    %2388 = vmatpush1.msra.mxu0 %v1727
    %2389 = vmatprep.subr.mxu0 %v1726
    %2390 = vmatpush1.msra.mxu0 %v1725
    %2391 = vmatprep.subr.mxu0 %v1724
    %2392 = vmatpush1.msra.mxu0 %v1723
    %2393 = vmatprep.subr.mxu0 %v1722
    %2394 = vmatpush1.msra.mxu0 %v1721
    %2395 = vmatprep.subr.mxu0 %v1720
    %2396 = vmatpush1.msra.mxu0 %v1719
    %2397 = vmatprep.subr.mxu0 %v1718
    %2398 = vmatpush1.msra.mxu0 %v1717
    %2399 = vmatprep.subr.mxu0 %v1716
    %2400 = vmatpush1.msra.mxu0 %v1715
    %2401 = vmatprep.subr.mxu0 %v1714
    %2402 = vmatpush1.msra.mxu0 %v1713
    %2403 = vmatprep.subr.mxu0 %v1712
    %2404 = vmatpush1.msra.mxu0 %v1711
    %2405 = vmatprep.subr.mxu0 %v1710
    %2406 = vmatpush1.msra.mxu0 %v1709
    %2407 = vmatprep.subr.mxu0 %v1772
    %2408 = vmatpush2.msra.mxu0 %v1771
    %2409 = vmatprep.subr.mxu0 %v1770
    %2410 = vmatpush2.msra.mxu0 %v1769
    %2411 = vmatprep.subr.mxu0 %v1768
    %2412 = vmatpush2.msra.mxu0 %v1767
    %2413 = vmatprep.subr.mxu0 %v1766
    %2414 = vmatpush2.msra.mxu0 %v1765
    %2415 = vmatprep.subr.mxu0 %v1764
    %2416 = vmatpush2.msra.mxu0 %v1763
    %2417 = vmatprep.subr.mxu0 %v1762
    %2418 = vmatpush2.msra.mxu0 %v1761
    %2419 = vmatprep.subr.mxu0 %v1760
    %2420 = vmatpush2.msra.mxu0 %v1759
    %2421 = vmatprep.subr.mxu0 %v1758
    %2422 = vmatpush2.msra.mxu0 %v1757
    %2423 = vmatprep.subr.mxu0 %v1756
    %2424 = vmatpush2.msra.mxu0 %v1755
    %2425 = vmatprep.subr.mxu0 %v1754
    %2426 = vmatpush2.msra.mxu0 %v1753
    %2427 = vmatprep.subr.mxu0 %v1752
    %2428 = vmatpush2.msra.mxu0 %v1751
    %2429 = vmatprep.subr.mxu0 %v1750
    %2430 = vmatpush2.msra.mxu0 %v1749
    %2431 = vmatprep.subr.mxu0 %v1748
    %2432 = vmatpush2.msra.mxu0 %v1747
    %2433 = vmatprep.subr.mxu0 %v1746
    %2434 = vmatpush2.msra.mxu0 %v1745
    %2435 = vmatprep.subr.mxu0 %v1744
    %2436 = vmatpush2.msra.mxu0 %v1743
    %2437 = vmatprep.subr.mxu0 %v1742
    %2438 = vmatpush2.msra.mxu0 %v1741
    %2439 = vmatprep.mubr.f32.mxu0 %v1174
    %2440 = vmatmul.mubr.f32.gmra.mxu0 %v1171
    %v2441 = vpop.f32.mrf.mxu0
    %v2442 = vadd.f32 %v2365, %v2441
    %v2443 = vpop.f32.mrf.mxu0
    %v2444 = vadd.f32 %v2367, %v2443
    %2445 = vmatprep.mubr.f32.mxu0 %v1180
    %2446 = vmatmul.mubr.f32.gmra.mxu0 %v1177
    %v2447 = vpop.f32.mrf.mxu0
    %v2448 = vadd.f32 %v2371, %v2447
    %v2449 = vpop.f32.mrf.mxu0
    %v2450 = vadd.f32 %v2373, %v2449
    %2451 = vdwg.mxu0
    %2452 = vmatprep.subr.mxu0 %v1804
    %2453 = vmatpush1.msra.mxu0 %v1803
    %2454 = vmatprep.subr.mxu0 %v1802
    %2455 = vmatpush1.msra.mxu0 %v1801
    %2456 = vmatprep.subr.mxu0 %v1800
    %2457 = vmatpush1.msra.mxu0 %v1799
    %2458 = vmatprep.subr.mxu0 %v1798
    %2459 = vmatpush1.msra.mxu0 %v1797
    %2460 = vmatprep.subr.mxu0 %v1796
    %2461 = vmatpush1.msra.mxu0 %v1795
    %2462 = vmatprep.subr.mxu0 %v1794
    %2463 = vmatpush1.msra.mxu0 %v1793
    %2464 = vmatprep.subr.mxu0 %v1792
    %2465 = vmatpush1.msra.mxu0 %v1791
    %2466 = vmatprep.subr.mxu0 %v1790
    %2467 = vmatpush1.msra.mxu0 %v1789
    %2468 = vmatprep.subr.mxu0 %v1788
    %2469 = vmatpush1.msra.mxu0 %v1787
    %2470 = vmatprep.subr.mxu0 %v1786
    %2471 = vmatpush1.msra.mxu0 %v1785
    %2472 = vmatprep.subr.mxu0 %v1784
    %2473 = vmatpush1.msra.mxu0 %v1783
    %2474 = vmatprep.subr.mxu0 %v1782
    %2475 = vmatpush1.msra.mxu0 %v1781
    %2476 = vmatprep.subr.mxu0 %v1780
    %2477 = vmatpush1.msra.mxu0 %v1779
    %2478 = vmatprep.subr.mxu0 %v1778
    %2479 = vmatpush1.msra.mxu0 %v1777
    %2480 = vmatprep.subr.mxu0 %v1776
    %2481 = vmatpush1.msra.mxu0 %v1775
    %2482 = vmatprep.subr.mxu0 %v1774
    %2483 = vmatpush1.msra.mxu0 %v1773
    %2484 = vmatprep.subr.mxu0 %v1836
    %2485 = vmatpush2.msra.mxu0 %v1835
    %2486 = vmatprep.subr.mxu0 %v1834
    %2487 = vmatpush2.msra.mxu0 %v1833
    %2488 = vmatprep.subr.mxu0 %v1832
    %2489 = vmatpush2.msra.mxu0 %v1831
    %2490 = vmatprep.subr.mxu0 %v1830
    %2491 = vmatpush2.msra.mxu0 %v1829
    %2492 = vmatprep.subr.mxu0 %v1828
    %2493 = vmatpush2.msra.mxu0 %v1827
    %2494 = vmatprep.subr.mxu0 %v1826
    %2495 = vmatpush2.msra.mxu0 %v1825
    %2496 = vmatprep.subr.mxu0 %v1824
    %2497 = vmatpush2.msra.mxu0 %v1823
    %2498 = vmatprep.subr.mxu0 %v1822
    %2499 = vmatpush2.msra.mxu0 %v1821
    %2500 = vmatprep.subr.mxu0 %v1820
    %2501 = vmatpush2.msra.mxu0 %v1819
    %2502 = vmatprep.subr.mxu0 %v1818
    %2503 = vmatpush2.msra.mxu0 %v1817
    %2504 = vmatprep.subr.mxu0 %v1816
    %2505 = vmatpush2.msra.mxu0 %v1815
    %2506 = vmatprep.subr.mxu0 %v1814
    %2507 = vmatpush2.msra.mxu0 %v1813
    %2508 = vmatprep.subr.mxu0 %v1812
    %2509 = vmatpush2.msra.mxu0 %v1811
    %2510 = vmatprep.subr.mxu0 %v1810
    %2511 = vmatpush2.msra.mxu0 %v1809
    %2512 = vmatprep.subr.mxu0 %v1808
    %2513 = vmatpush2.msra.mxu0 %v1807
    %2514 = vmatprep.subr.mxu0 %v1806
    %2515 = vmatpush2.msra.mxu0 %v1805
    %2516 = vmatprep.mubr.f32.mxu0 %v1298
    %2517 = vmatmul.mubr.f32.gmra.mxu0 %v1297
    %v2518 = vpop.f32.mrf.mxu0
    %v2519 = vadd.f32 %v2442, %v2518
    %v2520 = vpop.f32.mrf.mxu0
    %v2521 = vadd.f32 %v2444, %v2520
    %2522 = vmatprep.mubr.f32.mxu0 %v1300
    %2523 = vmatmul.mubr.f32.gmra.mxu0 %v1299
    %v2524 = vpop.f32.mrf.mxu0
    %v2525 = vadd.f32 %v2448, %v2524
    %v2526 = vpop.f32.mrf.mxu0
    %v2527 = vadd.f32 %v2450, %v2526
    %2528 = vdwg.mxu0
    %2529 = vmatprep.subr.mxu0 %v1868
    %2530 = vmatpush1.msra.mxu0 %v1867
    %2531 = vmatprep.subr.mxu0 %v1866
    %2532 = vmatpush1.msra.mxu0 %v1865
    %2533 = vmatprep.subr.mxu0 %v1864
    %2534 = vmatpush1.msra.mxu0 %v1863
    %2535 = vmatprep.subr.mxu0 %v1862
    %2536 = vmatpush1.msra.mxu0 %v1861
    %2537 = vmatprep.subr.mxu0 %v1860
    %2538 = vmatpush1.msra.mxu0 %v1859
    %2539 = vmatprep.subr.mxu0 %v1858
    %2540 = vmatpush1.msra.mxu0 %v1857
    %2541 = vmatprep.subr.mxu0 %v1856
    %2542 = vmatpush1.msra.mxu0 %v1855
    %2543 = vmatprep.subr.mxu0 %v1854
    %2544 = vmatpush1.msra.mxu0 %v1853
    %2545 = vmatprep.subr.mxu0 %v1852
    %2546 = vmatpush1.msra.mxu0 %v1851
    %2547 = vmatprep.subr.mxu0 %v1850
    %2548 = vmatpush1.msra.mxu0 %v1849
    %2549 = vmatprep.subr.mxu0 %v1848
    %2550 = vmatpush1.msra.mxu0 %v1847
    %2551 = vmatprep.subr.mxu0 %v1846
    %2552 = vmatpush1.msra.mxu0 %v1845
    %2553 = vmatprep.subr.mxu0 %v1844
    %2554 = vmatpush1.msra.mxu0 %v1843
    %2555 = vmatprep.subr.mxu0 %v1842
    %2556 = vmatpush1.msra.mxu0 %v1841
    %2557 = vmatprep.subr.mxu0 %v1840
    %2558 = vmatpush1.msra.mxu0 %v1839
    %2559 = vmatprep.subr.mxu0 %v1838
    %2560 = vmatpush1.msra.mxu0 %v1837
    %2561 = vmatprep.subr.mxu0 %v1900
    %2562 = vmatpush2.msra.mxu0 %v1899
    %2563 = vmatprep.subr.mxu0 %v1898
    %2564 = vmatpush2.msra.mxu0 %v1897
    %2565 = vmatprep.subr.mxu0 %v1896
    %2566 = vmatpush2.msra.mxu0 %v1895
    %2567 = vmatprep.subr.mxu0 %v1894
    %2568 = vmatpush2.msra.mxu0 %v1893
    %2569 = vmatprep.subr.mxu0 %v1892
    %2570 = vmatpush2.msra.mxu0 %v1891
    %2571 = vmatprep.subr.mxu0 %v1890
    %2572 = vmatpush2.msra.mxu0 %v1889
    %2573 = vmatprep.subr.mxu0 %v1888
    %2574 = vmatpush2.msra.mxu0 %v1887
    %2575 = vmatprep.subr.mxu0 %v1886
    %2576 = vmatpush2.msra.mxu0 %v1885
    %2577 = vmatprep.subr.mxu0 %v1884
    %2578 = vmatpush2.msra.mxu0 %v1883
    %2579 = vmatprep.subr.mxu0 %v1882
    %2580 = vmatpush2.msra.mxu0 %v1881
    %2581 = vmatprep.subr.mxu0 %v1880
    %2582 = vmatpush2.msra.mxu0 %v1879
    %2583 = vmatprep.subr.mxu0 %v1878
    %2584 = vmatpush2.msra.mxu0 %v1877
    %2585 = vmatprep.subr.mxu0 %v1876
    %2586 = vmatpush2.msra.mxu0 %v1875
    %2587 = vmatprep.subr.mxu0 %v1874
    %2588 = vmatpush2.msra.mxu0 %v1873
    %2589 = vmatprep.subr.mxu0 %v1872
    %2590 = vmatpush2.msra.mxu0 %v1871
    %2591 = vmatprep.subr.mxu0 %v1870
    %2592 = vmatpush2.msra.mxu0 %v1869
    %2593 = vmatprep.mubr.f32.mxu0 %v1318
    %2594 = vmatmul.mubr.f32.gmra.mxu0 %v1317
    %v2595 = vpop.f32.mrf.mxu0
    %v2596 = vadd.f32 %v2519, %v2595
    %v2597 = vpop.f32.mrf.mxu0
    %v2598 = vadd.f32 %v2521, %v2597
    %2599 = vmatprep.mubr.f32.mxu0 %v1320
    %2600 = vmatmul.mubr.f32.gmra.mxu0 %v1319
    %v2601 = vpop.f32.mrf.mxu0
    %v2602 = vadd.f32 %v2525, %v2601
    %v2603 = vpop.f32.mrf.mxu0
    %v2604 = vadd.f32 %v2527, %v2603
    %2605 = vdwg.mxu0
    %v2606 = vmax.f32 %v2596, 0.0
    %v2607 = vmax.f32 %v2598, 0.0
    %v2608 = vmax.f32 %v2602, 0.0
    %v2609 = vmax.f32 %v2604, 0.0
    %2614 = vrot.lane.b32.xlu0 %v2606, 96
    %v2615 = vpop.permute.xlu0 %2614
    %2616 = vrot.lane.b32.xlu0 %v2607, 96
    %v2617 = vpop.permute.xlu0 %2616
    %2618 = vrot.lane.b32.xlu0 %v2608, 96
    %v2619 = vpop.permute.xlu0 %2618
    %2620 = vrot.lane.b32.xlu0 %v2609, 96
    %v2621 = vpop.permute.xlu0 %2620
    %v2622 = vsel %vm137, %v2615, %v2617
    %v2623 = vsel %vm137, %v2619, %v2621
    %v2628 = vmax.f32 %v2606, %v2622
    %v2629 = vmax.f32 %v2607, %v2617
    %v2630 = vmax.f32 %v2608, %v2623
    %v2631 = vmax.f32 %v2609, %v2621
    %v2636 = vrot.slane %v2628, 1
    %v2637 = vrot.slane %v2629, 1
    %v2638 = vrot.slane %v2630, 1
    %v2639 = vrot.slane %v2631, 1
    %v2644 = vmax.f32 %v2628, %v2636
    %v2645 = vmax.f32 %v2629, %v2637
    %v2646 = vmax.f32 %v2630, %v2638
    %v2647 = vmax.f32 %v2631, %v2639
    %v2652 = vrot.slane %v2646, 7
    %vm2653 = vcmask 1041409
    %v2654 = vsel %vm2653, %v2652, %v2644
    %v2655 = vrot.slane %v2647, 7
    %v2656 = vsel %vm2653, %v2655, %v2645
    %v2659 = vrot.slane %v2644, 2
    %v2660 = vrot.slane %v2646, 1
    %v2661 = vsel %vm2653, %v2660, %v2659
    %v2662 = vrot.slane %v2645, 2
    %v2663 = vrot.slane %v2647, 1
    %v2664 = vsel %vm2653, %v2663, %v2662
    %2665 = vrot.lane.b32.xlu0 %v2661, 96
    %v2666 = vpop.permute.xlu0 %2665
    %2667 = vrot.lane.b32.xlu0 %v2664, 96
    %v2668 = vpop.permute.xlu0 %2667
    %v2669 = vsel %vm137, %v2666, %v2668
    %v2673 = vrot.slane %v2644, 4
    %v2674 = vrot.slane %v2646, 3
    %v2675 = vsel %vm2653, %v2674, %v2673
    %v2676 = vrot.slane %v2645, 4
    %v2677 = vrot.slane %v2647, 3
    %v2678 = vsel %vm2653, %v2677, %v2676
    %2679 = vrot.lane.b32.xlu0 %v2675, 64
    %v2680 = vpop.permute.xlu0 %2679
    %2681 = vrot.lane.b32.xlu0 %v2678, 64
    %v2682 = vpop.permute.xlu0 %2681
    %v2683 = vsel %vm134, %v2680, %v2682
    %v2687 = vrot.slane %v2644, 6
    %v2688 = vrot.slane %v2646, 5
    %v2689 = vsel %vm2653, %v2688, %v2687
    %v2690 = vrot.slane %v2645, 6
    %v2691 = vrot.slane %v2647, 5
    %v2692 = vsel %vm2653, %v2691, %v2690
    %2693 = vrot.lane.b32.xlu0 %v2689, 32
    %v2694 = vpop.permute.xlu0 %2693
    %2695 = vrot.lane.b32.xlu0 %v2692, 32
    %v2696 = vpop.permute.xlu0 %2695
    %v2697 = vsel %vm131, %v2694, %v2696
    %v2700 = vsel %vm137, %v2656, %v2666
    %v2701 = vsel %vm134, %v2668, %v2680
    %v2702 = vsel %vm131, %v2682, %v2694
    %v2703 = vld [vmem:[#allocation3] sm:$0xff]
    %v2704 = vld [vmem:[#allocation3 + $0x8] sm:$0xff]
    %v2705 = vld [vmem:[#allocation3 + $0x10] sm:$0xff]
    %v2706 = vld [vmem:[#allocation3 + $0x18] sm:$0xff]
    %v2707 = vld [vmem:[#allocation3 + $0x20] sm:$0xff]
    %v2708 = vld [vmem:[#allocation3 + $0x28] sm:$0xff]
    %v2709 = vld [vmem:[#allocation3 + $0x30] sm:$0xff]
    %v2710 = vld [vmem:[#allocation3 + $0x38] sm:$0xff]
    %v2711 = vld [vmem:[#allocation3 + $0x40] sm:$0xff]
    %v2712 = vld [vmem:[#allocation3 + $0x48] sm:$0xff]
    %v2713 = vld [vmem:[#allocation3 + $0x50] sm:$0xff]
    %v2714 = vld [vmem:[#allocation3 + $0x58] sm:$0xff]
    %v2715 = vld [vmem:[#allocation3 + $0x60] sm:$0xff]
    %v2716 = vld [vmem:[#allocation3 + $0x68] sm:$0xff]
    %v2717 = vld [vmem:[#allocation3 + $0x70] sm:$0xff]
    %v2718 = vld [vmem:[#allocation3 + $0x78] sm:$0xff]
    %v2719 = vld [vmem:[#allocation3 + $0x80] sm:$0xff]
    %v2720 = vld [vmem:[#allocation3 + $0x88] sm:$0xff]
    %v2721 = vld [vmem:[#allocation3 + $0x90] sm:$0xff]
    %v2722 = vld [vmem:[#allocation3 + $0x98] sm:$0xff]
    %v2723 = vld [vmem:[#allocation3 + $0xa0] sm:$0xff]
    %v2724 = vld [vmem:[#allocation3 + $0xa8] sm:$0xff]
    %v2725 = vld [vmem:[#allocation3 + $0xb0] sm:$0xff]
    %v2726 = vld [vmem:[#allocation3 + $0xb8] sm:$0xff]
    %v2727 = vld [vmem:[#allocation3 + $0xc0] sm:$0xff]
    %v2728 = vld [vmem:[#allocation3 + $0xc8] sm:$0xff]
    %v2729 = vld [vmem:[#allocation3 + $0xd0] sm:$0xff]
    %v2730 = vld [vmem:[#allocation3 + $0xd8] sm:$0xff]
    %v2731 = vld [vmem:[#allocation3 + $0xe0] sm:$0xff]
    %v2732 = vld [vmem:[#allocation3 + $0xe8] sm:$0xff]
    %v2733 = vld [vmem:[#allocation3 + $0xf0] sm:$0xff]
    %v2734 = vld [vmem:[#allocation3 + $0xf8] sm:$0xff]
    %v2735 = vld [vmem:[#allocation3 + $0x100] sm:$0xff]
    %v2736 = vld [vmem:[#allocation3 + $0x108] sm:$0xff]
    %v2737 = vld [vmem:[#allocation3 + $0x110] sm:$0xff]
    %v2738 = vld [vmem:[#allocation3 + $0x118] sm:$0xff]
    %v2739 = vld [vmem:[#allocation3 + $0x120] sm:$0xff]
    %v2740 = vld [vmem:[#allocation3 + $0x128] sm:$0xff]
    %v2741 = vld [vmem:[#allocation3 + $0x130] sm:$0xff]
    %v2742 = vld [vmem:[#allocation3 + $0x138] sm:$0xff]
    %v2743 = vld [vmem:[#allocation3 + $0x140] sm:$0xff]
    %v2744 = vld [vmem:[#allocation3 + $0x148] sm:$0xff]
    %v2745 = vld [vmem:[#allocation3 + $0x150] sm:$0xff]
    %v2746 = vld [vmem:[#allocation3 + $0x158] sm:$0xff]
    %v2747 = vld [vmem:[#allocation3 + $0x160] sm:$0xff]
    %v2748 = vld [vmem:[#allocation3 + $0x168] sm:$0xff]
    %v2749 = vld [vmem:[#allocation3 + $0x170] sm:$0xff]
    %v2750 = vld [vmem:[#allocation3 + $0x178] sm:$0xff]
    %v2751 = vld [vmem:[#allocation3 + $0x180] sm:$0xff]
    %v2752 = vld [vmem:[#allocation3 + $0x188] sm:$0xff]
    %v2753 = vld [vmem:[#allocation3 + $0x190] sm:$0xff]
    %v2754 = vld [vmem:[#allocation3 + $0x198] sm:$0xff]
    %v2755 = vld [vmem:[#allocation3 + $0x1a0] sm:$0xff]
    %v2756 = vld [vmem:[#allocation3 + $0x1a8] sm:$0xff]
    %v2757 = vld [vmem:[#allocation3 + $0x1b0] sm:$0xff]
    %v2758 = vld [vmem:[#allocation3 + $0x1b8] sm:$0xff]
    %v2759 = vld [vmem:[#allocation3 + $0x1c0] sm:$0xff]
    %v2760 = vld [vmem:[#allocation3 + $0x1c8] sm:$0xff]
    %v2761 = vld [vmem:[#allocation3 + $0x1d0] sm:$0xff]
    %v2762 = vld [vmem:[#allocation3 + $0x1d8] sm:$0xff]
    %v2763 = vld [vmem:[#allocation3 + $0x1e0] sm:$0xff]
    %v2764 = vld [vmem:[#allocation3 + $0x1e8] sm:$0xff]
    %v2765 = vld [vmem:[#allocation3 + $0x1f0] sm:$0xff]
    %v2766 = vld [vmem:[#allocation3 + $0x1f8] sm:$0xff]
    %v2767 = vld [vmem:[#allocation3 + $0x200] sm:$0xff]
    %v2768 = vld [vmem:[#allocation3 + $0x208] sm:$0xff]
    %v2769 = vld [vmem:[#allocation3 + $0x210] sm:$0xff]
    %v2770 = vld [vmem:[#allocation3 + $0x218] sm:$0xff]
    %v2771 = vld [vmem:[#allocation3 + $0x220] sm:$0xff]
    %v2772 = vld [vmem:[#allocation3 + $0x228] sm:$0xff]
    %v2773 = vld [vmem:[#allocation3 + $0x230] sm:$0xff]
    %v2774 = vld [vmem:[#allocation3 + $0x238] sm:$0xff]
    %v2775 = vld [vmem:[#allocation3 + $0x240] sm:$0xff]
    %v2776 = vld [vmem:[#allocation3 + $0x248] sm:$0xff]
    %v2777 = vld [vmem:[#allocation3 + $0x250] sm:$0xff]
    %v2778 = vld [vmem:[#allocation3 + $0x258] sm:$0xff]
    %v2779 = vld [vmem:[#allocation3 + $0x260] sm:$0xff]
    %v2780 = vld [vmem:[#allocation3 + $0x268] sm:$0xff]
    %v2781 = vld [vmem:[#allocation3 + $0x270] sm:$0xff]
    %v2782 = vld [vmem:[#allocation3 + $0x278] sm:$0xff]
    %v2783 = vld [vmem:[#allocation3 + $0x280] sm:$0xff]
    %v2784 = vld [vmem:[#allocation3 + $0x288] sm:$0xff]
    %v2785 = vld [vmem:[#allocation3 + $0x290] sm:$0xff]
    %v2786 = vld [vmem:[#allocation3 + $0x298] sm:$0xff]
    %v2787 = vld [vmem:[#allocation3 + $0x2a0] sm:$0xff]
    %v2788 = vld [vmem:[#allocation3 + $0x2a8] sm:$0xff]
    %v2789 = vld [vmem:[#allocation3 + $0x2b0] sm:$0xff]
    %v2790 = vld [vmem:[#allocation3 + $0x2b8] sm:$0xff]
    %v2791 = vld [vmem:[#allocation3 + $0x2c0] sm:$0xff]
    %v2792 = vld [vmem:[#allocation3 + $0x2c8] sm:$0xff]
    %v2793 = vld [vmem:[#allocation3 + $0x2d0] sm:$0xff]
    %v2794 = vld [vmem:[#allocation3 + $0x2d8] sm:$0xff]
    %v2795 = vld [vmem:[#allocation3 + $0x2e0] sm:$0xff]
    %v2796 = vld [vmem:[#allocation3 + $0x2e8] sm:$0xff]
    %v2797 = vld [vmem:[#allocation3 + $0x2f0] sm:$0xff]
    %v2798 = vld [vmem:[#allocation3 + $0x2f8] sm:$0xff]
    %v2799 = vld [vmem:[#allocation3 + $0x300] sm:$0xff]
    %v2800 = vld [vmem:[#allocation3 + $0x308] sm:$0xff]
    %v2801 = vld [vmem:[#allocation3 + $0x310] sm:$0xff]
    %v2802 = vld [vmem:[#allocation3 + $0x318] sm:$0xff]
    %v2803 = vld [vmem:[#allocation3 + $0x320] sm:$0xff]
    %v2804 = vld [vmem:[#allocation3 + $0x328] sm:$0xff]
    %v2805 = vld [vmem:[#allocation3 + $0x330] sm:$0xff]
    %v2806 = vld [vmem:[#allocation3 + $0x338] sm:$0xff]
    %v2807 = vld [vmem:[#allocation3 + $0x340] sm:$0xff]
    %v2808 = vld [vmem:[#allocation3 + $0x348] sm:$0xff]
    %v2809 = vld [vmem:[#allocation3 + $0x350] sm:$0xff]
    %v2810 = vld [vmem:[#allocation3 + $0x358] sm:$0xff]
    %v2811 = vld [vmem:[#allocation3 + $0x360] sm:$0xff]
    %v2812 = vld [vmem:[#allocation3 + $0x368] sm:$0xff]
    %v2813 = vld [vmem:[#allocation3 + $0x370] sm:$0xff]
    %v2814 = vld [vmem:[#allocation3 + $0x378] sm:$0xff]
    %v2815 = vld [vmem:[#allocation3 + $0x380] sm:$0xff]
    %v2816 = vld [vmem:[#allocation3 + $0x388] sm:$0xff]
    %v2817 = vld [vmem:[#allocation3 + $0x390] sm:$0xff]
    %v2818 = vld [vmem:[#allocation3 + $0x398] sm:$0xff]
    %v2819 = vld [vmem:[#allocation3 + $0x3a0] sm:$0xff]
    %v2820 = vld [vmem:[#allocation3 + $0x3a8] sm:$0xff]
    %v2821 = vld [vmem:[#allocation3 + $0x3b0] sm:$0xff]
    %v2822 = vld [vmem:[#allocation3 + $0x3b8] sm:$0xff]
    %v2823 = vld [vmem:[#allocation3 + $0x3c0] sm:$0xff]
    %v2824 = vld [vmem:[#allocation3 + $0x3c8] sm:$0xff]
    %v2825 = vld [vmem:[#allocation3 + $0x3d0] sm:$0xff]
    %v2826 = vld [vmem:[#allocation3 + $0x3d8] sm:$0xff]
    %v2827 = vld [vmem:[#allocation3 + $0x3e0] sm:$0xff]
    %v2828 = vld [vmem:[#allocation3 + $0x3e8] sm:$0xff]
    %v2829 = vld [vmem:[#allocation3 + $0x3f0] sm:$0xff]
    %v2830 = vld [vmem:[#allocation3 + $0x3f8] sm:$0xff]
    %v2831 = vld [vmem:[#allocation3 + $0x400] sm:$0xff]
    %v2832 = vld [vmem:[#allocation3 + $0x408] sm:$0xff]
    %v2833 = vld [vmem:[#allocation3 + $0x410] sm:$0xff]
    %v2834 = vld [vmem:[#allocation3 + $0x418] sm:$0xff]
    %v2835 = vld [vmem:[#allocation3 + $0x420] sm:$0xff]
    %v2836 = vld [vmem:[#allocation3 + $0x428] sm:$0xff]
    %v2837 = vld [vmem:[#allocation3 + $0x430] sm:$0xff]
    %v2838 = vld [vmem:[#allocation3 + $0x438] sm:$0xff]
    %v2839 = vld [vmem:[#allocation3 + $0x440] sm:$0xff]
    %v2840 = vld [vmem:[#allocation3 + $0x448] sm:$0xff]
    %v2841 = vld [vmem:[#allocation3 + $0x450] sm:$0xff]
    %v2842 = vld [vmem:[#allocation3 + $0x458] sm:$0xff]
    %v2843 = vld [vmem:[#allocation3 + $0x460] sm:$0xff]
    %v2844 = vld [vmem:[#allocation3 + $0x468] sm:$0xff]
    %v2845 = vld [vmem:[#allocation3 + $0x470] sm:$0xff]
    %v2846 = vld [vmem:[#allocation3 + $0x478] sm:$0xff]
    %v2847 = vld [vmem:[#allocation3 + $0x480] sm:$0xff]
    %v2848 = vld [vmem:[#allocation3 + $0x488] sm:$0xff]
    %v2849 = vld [vmem:[#allocation3 + $0x490] sm:$0xff]
    %v2850 = vld [vmem:[#allocation3 + $0x498] sm:$0xff]
    %v2851 = vld [vmem:[#allocation3 + $0x4a0] sm:$0xff]
    %v2852 = vld [vmem:[#allocation3 + $0x4a8] sm:$0xff]
    %v2853 = vld [vmem:[#allocation3 + $0x4b0] sm:$0xff]
    %v2854 = vld [vmem:[#allocation3 + $0x4b8] sm:$0xff]
    %v2855 = vld [vmem:[#allocation3 + $0x4c0] sm:$0xff]
    %v2856 = vld [vmem:[#allocation3 + $0x4c8] sm:$0xff]
    %v2857 = vld [vmem:[#allocation3 + $0x4d0] sm:$0xff]
    %v2858 = vld [vmem:[#allocation3 + $0x4d8] sm:$0xff]
    %v2859 = vld [vmem:[#allocation3 + $0x4e0] sm:$0xff]
    %v2860 = vld [vmem:[#allocation3 + $0x4e8] sm:$0xff]
    %v2861 = vld [vmem:[#allocation3 + $0x4f0] sm:$0xff]
    %v2862 = vld [vmem:[#allocation3 + $0x4f8] sm:$0xff]
    %v2863 = vld [vmem:[#allocation3 + $0x500] sm:$0xff]
    %v2864 = vld [vmem:[#allocation3 + $0x508] sm:$0xff]
    %v2865 = vld [vmem:[#allocation3 + $0x510] sm:$0xff]
    %v2866 = vld [vmem:[#allocation3 + $0x518] sm:$0xff]
    %v2867 = vld [vmem:[#allocation3 + $0x520] sm:$0xff]
    %v2868 = vld [vmem:[#allocation3 + $0x528] sm:$0xff]
    %v2869 = vld [vmem:[#allocation3 + $0x530] sm:$0xff]
    %v2870 = vld [vmem:[#allocation3 + $0x538] sm:$0xff]
    %v2871 = vld [vmem:[#allocation3 + $0x540] sm:$0xff]
    %v2872 = vld [vmem:[#allocation3 + $0x548] sm:$0xff]
    %v2873 = vld [vmem:[#allocation3 + $0x550] sm:$0xff]
    %v2874 = vld [vmem:[#allocation3 + $0x558] sm:$0xff]
    %v2875 = vld [vmem:[#allocation3 + $0x560] sm:$0xff]
    %v2876 = vld [vmem:[#allocation3 + $0x568] sm:$0xff]
    %v2877 = vld [vmem:[#allocation3 + $0x570] sm:$0xff]
    %v2878 = vld [vmem:[#allocation3 + $0x578] sm:$0xff]
    %v2879 = vld [vmem:[#allocation3 + $0x580] sm:$0xff]
    %v2880 = vld [vmem:[#allocation3 + $0x588] sm:$0xff]
    %v2881 = vld [vmem:[#allocation3 + $0x590] sm:$0xff]
    %v2882 = vld [vmem:[#allocation3 + $0x598] sm:$0xff]
    %v2883 = vld [vmem:[#allocation3 + $0x5a0] sm:$0xff]
    %v2884 = vld [vmem:[#allocation3 + $0x5a8] sm:$0xff]
    %v2885 = vld [vmem:[#allocation3 + $0x5b0] sm:$0xff]
    %v2886 = vld [vmem:[#allocation3 + $0x5b8] sm:$0xff]
    %v2887 = vld [vmem:[#allocation3 + $0x5c0] sm:$0xff]
    %v2888 = vld [vmem:[#allocation3 + $0x5c8] sm:$0xff]
    %v2889 = vld [vmem:[#allocation3 + $0x5d0] sm:$0xff]
    %v2890 = vld [vmem:[#allocation3 + $0x5d8] sm:$0xff]
    %v2891 = vld [vmem:[#allocation3 + $0x5e0] sm:$0xff]
    %v2892 = vld [vmem:[#allocation3 + $0x5e8] sm:$0xff]
    %v2893 = vld [vmem:[#allocation3 + $0x5f0] sm:$0xff]
    %v2894 = vld [vmem:[#allocation3 + $0x5f8] sm:$0xff]
    %v2895 = vld [vmem:[#allocation3 + $0x600] sm:$0xff]
    %v2896 = vld [vmem:[#allocation3 + $0x608] sm:$0xff]
    %v2897 = vld [vmem:[#allocation3 + $0x610] sm:$0xff]
    %v2898 = vld [vmem:[#allocation3 + $0x618] sm:$0xff]
    %v2899 = vld [vmem:[#allocation3 + $0x620] sm:$0xff]
    %v2900 = vld [vmem:[#allocation3 + $0x628] sm:$0xff]
    %v2901 = vld [vmem:[#allocation3 + $0x630] sm:$0xff]
    %v2902 = vld [vmem:[#allocation3 + $0x638] sm:$0xff]
    %v2903 = vld [vmem:[#allocation3 + $0x640] sm:$0xff]
    %v2904 = vld [vmem:[#allocation3 + $0x648] sm:$0xff]
    %v2905 = vld [vmem:[#allocation3 + $0x650] sm:$0xff]
    %v2906 = vld [vmem:[#allocation3 + $0x658] sm:$0xff]
    %v2907 = vld [vmem:[#allocation3 + $0x660] sm:$0xff]
    %v2908 = vld [vmem:[#allocation3 + $0x668] sm:$0xff]
    %v2909 = vld [vmem:[#allocation3 + $0x670] sm:$0xff]
    %v2910 = vld [vmem:[#allocation3 + $0x678] sm:$0xff]
    %v2911 = vld [vmem:[#allocation3 + $0x680] sm:$0xff]
    %v2912 = vld [vmem:[#allocation3 + $0x688] sm:$0xff]
    %v2913 = vld [vmem:[#allocation3 + $0x690] sm:$0xff]
    %v2914 = vld [vmem:[#allocation3 + $0x698] sm:$0xff]
    %v2915 = vld [vmem:[#allocation3 + $0x6a0] sm:$0xff]
    %v2916 = vld [vmem:[#allocation3 + $0x6a8] sm:$0xff]
    %v2917 = vld [vmem:[#allocation3 + $0x6b0] sm:$0xff]
    %v2918 = vld [vmem:[#allocation3 + $0x6b8] sm:$0xff]
    %v2919 = vld [vmem:[#allocation3 + $0x6c0] sm:$0xff]
    %v2920 = vld [vmem:[#allocation3 + $0x6c8] sm:$0xff]
    %v2921 = vld [vmem:[#allocation3 + $0x6d0] sm:$0xff]
    %v2922 = vld [vmem:[#allocation3 + $0x6d8] sm:$0xff]
    %v2923 = vld [vmem:[#allocation3 + $0x6e0] sm:$0xff]
    %v2924 = vld [vmem:[#allocation3 + $0x6e8] sm:$0xff]
    %v2925 = vld [vmem:[#allocation3 + $0x6f0] sm:$0xff]
    %v2926 = vld [vmem:[#allocation3 + $0x6f8] sm:$0xff]
    %v2927 = vld [vmem:[%s6] sm:$0x3]
    %v2929 = vlaneseq
    %v2930 = vshrl.u32 %v2929, 7
    %v2931 = vsub.s32 0, %v2930
    %v2932 = vrot.slane %v2927, %v2931
    %v2933 = vlaneseq
    %v2934 = vshrl.u32 %v2933, 7
    %v2935 = vsub.s32 1, %v2934
    %v2936 = vrot.slane %v2927, %v2935
    %2939 = vmatprep.subr.mxu0 %v2734
    %2940 = vmatpush1.msra.mxu0 %v2733
    %2941 = vmatprep.subr.mxu0 %v2732
    %2942 = vmatpush1.msra.mxu0 %v2731
    %2943 = vmatprep.subr.mxu0 %v2730
    %2944 = vmatpush1.msra.mxu0 %v2729
    %2945 = vmatprep.subr.mxu0 %v2728
    %2946 = vmatpush1.msra.mxu0 %v2727
    %2947 = vmatprep.subr.mxu0 %v2726
    %2948 = vmatpush1.msra.mxu0 %v2725
    %2949 = vmatprep.subr.mxu0 %v2724
    %2950 = vmatpush1.msra.mxu0 %v2723
    %2951 = vmatprep.subr.mxu0 %v2722
    %2952 = vmatpush1.msra.mxu0 %v2721
    %2953 = vmatprep.subr.mxu0 %v2720
    %2954 = vmatpush1.msra.mxu0 %v2719
    %2955 = vmatprep.subr.mxu0 %v2718
    %2956 = vmatpush1.msra.mxu0 %v2717
    %2957 = vmatprep.subr.mxu0 %v2716
    %2958 = vmatpush1.msra.mxu0 %v2715
    %2959 = vmatprep.subr.mxu0 %v2714
    %2960 = vmatpush1.msra.mxu0 %v2713
    %2961 = vmatprep.subr.mxu0 %v2712
    %2962 = vmatpush1.msra.mxu0 %v2711
    %2963 = vmatprep.subr.mxu0 %v2710
    %2964 = vmatpush1.msra.mxu0 %v2709
    %2965 = vmatprep.subr.mxu0 %v2708
    %2966 = vmatpush1.msra.mxu0 %v2707
    %2967 = vmatprep.subr.mxu0 %v2706
    %2968 = vmatpush1.msra.mxu0 %v2705
    %2969 = vmatprep.subr.mxu0 %v2704
    %2970 = vmatpush1.msra.mxu0 %v2703
    %2971 = vmatprep.subr.mxu0 %v2766
    %2972 = vmatpush2.msra.mxu0 %v2765
    %2973 = vmatprep.subr.mxu0 %v2764
    %2974 = vmatpush2.msra.mxu0 %v2763
    %2975 = vmatprep.subr.mxu0 %v2762
    %2976 = vmatpush2.msra.mxu0 %v2761
    %2977 = vmatprep.subr.mxu0 %v2760
    %2978 = vmatpush2.msra.mxu0 %v2759
    %2979 = vmatprep.subr.mxu0 %v2758
    %2980 = vmatpush2.msra.mxu0 %v2757
    %2981 = vmatprep.subr.mxu0 %v2756
    %2982 = vmatpush2.msra.mxu0 %v2755
    %2983 = vmatprep.subr.mxu0 %v2754
    %2984 = vmatpush2.msra.mxu0 %v2753
    %2985 = vmatprep.subr.mxu0 %v2752
    %2986 = vmatpush2.msra.mxu0 %v2751
    %2987 = vmatprep.subr.mxu0 %v2750
    %2988 = vmatpush2.msra.mxu0 %v2749
    %2989 = vmatprep.subr.mxu0 %v2748
    %2990 = vmatpush2.msra.mxu0 %v2747
    %2991 = vmatprep.subr.mxu0 %v2746
    %2992 = vmatpush2.msra.mxu0 %v2745
    %2993 = vmatprep.subr.mxu0 %v2744
    %2994 = vmatpush2.msra.mxu0 %v2743
    %2995 = vmatprep.subr.mxu0 %v2742
    %2996 = vmatpush2.msra.mxu0 %v2741
    %2997 = vmatprep.subr.mxu0 %v2740
    %2998 = vmatpush2.msra.mxu0 %v2739
    %2999 = vmatprep.subr.mxu0 %v2738
    %3000 = vmatpush2.msra.mxu0 %v2737
    %3001 = vmatprep.subr.mxu0 %v2736
    %3002 = vmatpush2.msra.mxu0 %v2735
    %3003 = vmatprep.mubr.f32.mxu0 %v2700
    %3004 = vmatmul.mubr.f32.gmra.mxu0 %v2654
    %v3005 = vpop.f32.mrf.mxu0
    %v3006 = vadd.f32 %v2932, %v3005
    %v3007 = vpop.f32.mrf.mxu0
    %v3008 = vadd.f32 %v2936, %v3007
    %3009 = vdwg.mxu0
    %3010 = vmatprep.subr.mxu0 %v2798
    %3011 = vmatpush1.msra.mxu0 %v2797
    %3012 = vmatprep.subr.mxu0 %v2796
    %3013 = vmatpush1.msra.mxu0 %v2795
    %3014 = vmatprep.subr.mxu0 %v2794
    %3015 = vmatpush1.msra.mxu0 %v2793
    %3016 = vmatprep.subr.mxu0 %v2792
    %3017 = vmatpush1.msra.mxu0 %v2791
    %3018 = vmatprep.subr.mxu0 %v2790
    %3019 = vmatpush1.msra.mxu0 %v2789
    %3020 = vmatprep.subr.mxu0 %v2788
    %3021 = vmatpush1.msra.mxu0 %v2787
    %3022 = vmatprep.subr.mxu0 %v2786
    %3023 = vmatpush1.msra.mxu0 %v2785
    %3024 = vmatprep.subr.mxu0 %v2784
    %3025 = vmatpush1.msra.mxu0 %v2783
    %3026 = vmatprep.subr.mxu0 %v2782
    %3027 = vmatpush1.msra.mxu0 %v2781
    %3028 = vmatprep.subr.mxu0 %v2780
    %3029 = vmatpush1.msra.mxu0 %v2779
    %3030 = vmatprep.subr.mxu0 %v2778
    %3031 = vmatpush1.msra.mxu0 %v2777
    %3032 = vmatprep.subr.mxu0 %v2776
    %3033 = vmatpush1.msra.mxu0 %v2775
    %3034 = vmatprep.subr.mxu0 %v2774
    %3035 = vmatpush1.msra.mxu0 %v2773
    %3036 = vmatprep.subr.mxu0 %v2772
    %3037 = vmatpush1.msra.mxu0 %v2771
    %3038 = vmatprep.subr.mxu0 %v2770
    %3039 = vmatpush1.msra.mxu0 %v2769
    %3040 = vmatprep.subr.mxu0 %v2768
    %3041 = vmatpush1.msra.mxu0 %v2767
    %3042 = vmatprep.subr.mxu0 %v2830
    %3043 = vmatpush2.msra.mxu0 %v2829
    %3044 = vmatprep.subr.mxu0 %v2828
    %3045 = vmatpush2.msra.mxu0 %v2827
    %3046 = vmatprep.subr.mxu0 %v2826
    %3047 = vmatpush2.msra.mxu0 %v2825
    %3048 = vmatprep.subr.mxu0 %v2824
    %3049 = vmatpush2.msra.mxu0 %v2823
    %3050 = vmatprep.subr.mxu0 %v2822
    %3051 = vmatpush2.msra.mxu0 %v2821
    %3052 = vmatprep.subr.mxu0 %v2820
    %3053 = vmatpush2.msra.mxu0 %v2819
    %3054 = vmatprep.subr.mxu0 %v2818
    %3055 = vmatpush2.msra.mxu0 %v2817
    %3056 = vmatprep.subr.mxu0 %v2816
    %3057 = vmatpush2.msra.mxu0 %v2815
    %3058 = vmatprep.subr.mxu0 %v2814
    %3059 = vmatpush2.msra.mxu0 %v2813
    %3060 = vmatprep.subr.mxu0 %v2812
    %3061 = vmatpush2.msra.mxu0 %v2811
    %3062 = vmatprep.subr.mxu0 %v2810
    %3063 = vmatpush2.msra.mxu0 %v2809
    %3064 = vmatprep.subr.mxu0 %v2808
    %3065 = vmatpush2.msra.mxu0 %v2807
    %3066 = vmatprep.subr.mxu0 %v2806
    %3067 = vmatpush2.msra.mxu0 %v2805
    %3068 = vmatprep.subr.mxu0 %v2804
    %3069 = vmatpush2.msra.mxu0 %v2803
    %3070 = vmatprep.subr.mxu0 %v2802
    %3071 = vmatpush2.msra.mxu0 %v2801
    %3072 = vmatprep.subr.mxu0 %v2800
    %3073 = vmatpush2.msra.mxu0 %v2799
    %3074 = vmatprep.mubr.f32.mxu0 %v2701
    %3075 = vmatmul.mubr.f32.gmra.mxu0 %v2669
    %v3076 = vpop.f32.mrf.mxu0
    %v3077 = vadd.f32 %v3006, %v3076
    %v3078 = vpop.f32.mrf.mxu0
    %v3079 = vadd.f32 %v3008, %v3078
    %3080 = vdwg.mxu0
    %3081 = vmatprep.subr.mxu0 %v2862
    %3082 = vmatpush1.msra.mxu0 %v2861
    %3083 = vmatprep.subr.mxu0 %v2860
    %3084 = vmatpush1.msra.mxu0 %v2859
    %3085 = vmatprep.subr.mxu0 %v2858
    %3086 = vmatpush1.msra.mxu0 %v2857
    %3087 = vmatprep.subr.mxu0 %v2856
    %3088 = vmatpush1.msra.mxu0 %v2855
    %3089 = vmatprep.subr.mxu0 %v2854
    %3090 = vmatpush1.msra.mxu0 %v2853
    %3091 = vmatprep.subr.mxu0 %v2852
    %3092 = vmatpush1.msra.mxu0 %v2851
    %3093 = vmatprep.subr.mxu0 %v2850
    %3094 = vmatpush1.msra.mxu0 %v2849
    %3095 = vmatprep.subr.mxu0 %v2848
    %3096 = vmatpush1.msra.mxu0 %v2847
    %3097 = vmatprep.subr.mxu0 %v2846
    %3098 = vmatpush1.msra.mxu0 %v2845
    %3099 = vmatprep.subr.mxu0 %v2844
    %3100 = vmatpush1.msra.mxu0 %v2843
    %3101 = vmatprep.subr.mxu0 %v2842
    %3102 = vmatpush1.msra.mxu0 %v2841
    %3103 = vmatprep.subr.mxu0 %v2840
    %3104 = vmatpush1.msra.mxu0 %v2839
    %3105 = vmatprep.subr.mxu0 %v2838
    %3106 = vmatpush1.msra.mxu0 %v2837
    %3107 = vmatprep.subr.mxu0 %v2836
    %3108 = vmatpush1.msra.mxu0 %v2835
    %3109 = vmatprep.subr.mxu0 %v2834
    %3110 = vmatpush1.msra.mxu0 %v2833
    %3111 = vmatprep.subr.mxu0 %v2832
    %3112 = vmatpush1.msra.mxu0 %v2831
    %3113 = vmatprep.subr.mxu0 %v2894
    %3114 = vmatpush2.msra.mxu0 %v2893
    %3115 = vmatprep.subr.mxu0 %v2892
    %3116 = vmatpush2.msra.mxu0 %v2891
    %3117 = vmatprep.subr.mxu0 %v2890
    %3118 = vmatpush2.msra.mxu0 %v2889
    %3119 = vmatprep.subr.mxu0 %v2888
    %3120 = vmatpush2.msra.mxu0 %v2887
    %3121 = vmatprep.subr.mxu0 %v2886
    %3122 = vmatpush2.msra.mxu0 %v2885
    %3123 = vmatprep.subr.mxu0 %v2884
    %3124 = vmatpush2.msra.mxu0 %v2883
    %3125 = vmatprep.subr.mxu0 %v2882
    %3126 = vmatpush2.msra.mxu0 %v2881
    %3127 = vmatprep.subr.mxu0 %v2880
    %3128 = vmatpush2.msra.mxu0 %v2879
    %3129 = vmatprep.subr.mxu0 %v2878
    %3130 = vmatpush2.msra.mxu0 %v2877
    %3131 = vmatprep.subr.mxu0 %v2876
    %3132 = vmatpush2.msra.mxu0 %v2875
    %3133 = vmatprep.subr.mxu0 %v2874
    %3134 = vmatpush2.msra.mxu0 %v2873
    %3135 = vmatprep.subr.mxu0 %v2872
    %3136 = vmatpush2.msra.mxu0 %v2871
    %3137 = vmatprep.subr.mxu0 %v2870
    %3138 = vmatpush2.msra.mxu0 %v2869
    %3139 = vmatprep.subr.mxu0 %v2868
    %3140 = vmatpush2.msra.mxu0 %v2867
    %3141 = vmatprep.subr.mxu0 %v2866
    %3142 = vmatpush2.msra.mxu0 %v2865
    %3143 = vmatprep.subr.mxu0 %v2864
    %3144 = vmatpush2.msra.mxu0 %v2863
    %3145 = vmatprep.mubr.f32.mxu0 %v2702
    %3146 = vmatmul.mubr.f32.gmra.mxu0 %v2683
    %v3147 = vpop.f32.mrf.mxu0
    %v3148 = vadd.f32 %v3077, %v3147
    %v3149 = vpop.f32.mrf.mxu0
    %v3150 = vadd.f32 %v3079, %v3149
    %3151 = vdwg.mxu0
    %3152 = vmatprep.subr.mxu0 %v2926
    %3153 = vmatpush1.msra.mxu0 %v2925
    %3154 = vmatprep.subr.mxu0 %v2924
    %3155 = vmatpush1.msra.mxu0 %v2923
    %3156 = vmatprep.subr.mxu0 %v2922
    %3157 = vmatpush1.msra.mxu0 %v2921
    %3158 = vmatprep.subr.mxu0 %v2920
    %3159 = vmatpush1.msra.mxu0 %v2919
    %3160 = vmatprep.subr.mxu0 %v2918
    %3161 = vmatpush1.msra.mxu0 %v2917
    %3162 = vmatprep.subr.mxu0 %v2916
    %3163 = vmatpush1.msra.mxu0 %v2915
    %3164 = vmatprep.subr.mxu0 %v2914
    %3165 = vmatpush1.msra.mxu0 %v2913
    %3166 = vmatprep.subr.mxu0 %v2912
    %3167 = vmatpush1.msra.mxu0 %v2911
    %3168 = vmatprep.subr.mxu0 %v2910
    %3169 = vmatpush1.msra.mxu0 %v2909
    %3170 = vmatprep.subr.mxu0 %v2908
    %3171 = vmatpush1.msra.mxu0 %v2907
    %3172 = vmatprep.subr.mxu0 %v2906
    %3173 = vmatpush1.msra.mxu0 %v2905
    %3174 = vmatprep.subr.mxu0 %v2904
    %3175 = vmatpush1.msra.mxu0 %v2903
    %3176 = vmatprep.subr.mxu0 %v2902
    %3177 = vmatpush1.msra.mxu0 %v2901
    %3178 = vmatprep.subr.mxu0 %v2900
    %3179 = vmatpush1.msra.mxu0 %v2899
    %3180 = vmatprep.subr.mxu0 %v2898
    %3181 = vmatpush1.msra.mxu0 %v2897
    %3182 = vmatprep.subr.mxu0 %v2896
    %3183 = vmatpush1.msra.mxu0 %v2895
    %3184 = vmatprep.subr.mxu0 0.0
    %3185 = vmatpush2.msra.mxu0 0.0
    %3186 = vmatprep.subr.mxu0 0.0
    %3187 = vmatpush2.msra.mxu0 0.0
    %3188 = vmatprep.subr.mxu0 0.0
    %3189 = vmatpush2.msra.mxu0 0.0
    %3190 = vmatprep.subr.mxu0 0.0
    %3191 = vmatpush2.msra.mxu0 0.0
    %3192 = vmatprep.subr.mxu0 0.0
    %3193 = vmatpush2.msra.mxu0 0.0
    %3194 = vmatprep.subr.mxu0 0.0
    %3195 = vmatpush2.msra.mxu0 0.0
    %3196 = vmatprep.subr.mxu0 0.0
    %3197 = vmatpush2.msra.mxu0 0.0
    %3198 = vmatprep.subr.mxu0 0.0
    %3199 = vmatpush2.msra.mxu0 0.0
    %3200 = vmatprep.subr.mxu0 0.0
    %3201 = vmatpush2.msra.mxu0 0.0
    %3202 = vmatprep.subr.mxu0 0.0
    %3203 = vmatpush2.msra.mxu0 0.0
    %3204 = vmatprep.subr.mxu0 0.0
    %3205 = vmatpush2.msra.mxu0 0.0
    %3206 = vmatprep.subr.mxu0 0.0
    %3207 = vmatpush2.msra.mxu0 0.0
    %3208 = vmatprep.subr.mxu0 0.0
    %3209 = vmatpush2.msra.mxu0 0.0
    %3210 = vmatprep.subr.mxu0 0.0
    %3211 = vmatpush2.msra.mxu0 0.0
    %3212 = vmatprep.subr.mxu0 0.0
    %3213 = vmatpush2.msra.mxu0 0.0
    %3214 = vmatprep.subr.mxu0 0.0
    %3215 = vmatpush2.msra.mxu0 0.0
    %3216 = vmatprep.mubr.f32.mxu0 0.0
    %3217 = vmatmul.mubr.f32.gmra.mxu0 %v2697
    %v3218 = vpop.f32.mrf.mxu0
    %v3219 = vadd.f32 %v3148, %v3218
    %v3220 = vpop.f32.mrf.mxu0
    %v3221 = vadd.f32 %v3150, %v3220
    %3222 = vdwg.mxu0
    %v3223 = vmax.f32 %v3219, 0.0
    %v3224 = vmax.f32 %v3221, 0.0
    %v3225 = vld [vmem:[#allocation5] sm:$0xff]
    %v3226 = vld [vmem:[#allocation5 + $0x8] sm:$0xff]
    %v3227 = vld [vmem:[#allocation5 + $0x10] sm:$0xff]
    %v3228 = vld [vmem:[#allocation5 + $0x18] sm:$0xff]
    %v3229 = vld [vmem:[#allocation5 + $0x20] sm:$0xff]
    %v3230 = vld [vmem:[#allocation5 + $0x28] sm:$0xff]
    %v3231 = vld [vmem:[#allocation5 + $0x30] sm:$0xff]
    %v3232 = vld [vmem:[#allocation5 + $0x38] sm:$0xff]
    %v3233 = vld [vmem:[#allocation5 + $0x40] sm:$0xff]
    %v3234 = vld [vmem:[#allocation5 + $0x48] sm:$0xff]
    %v3235 = vld [vmem:[#allocation5 + $0x50] sm:$0xff]
    %v3236 = vld [vmem:[#allocation5 + $0x58] sm:$0xff]
    %v3237 = vld [vmem:[#allocation5 + $0x60] sm:$0xff]
    %v3238 = vld [vmem:[#allocation5 + $0x68] sm:$0xff]
    %v3239 = vld [vmem:[#allocation5 + $0x70] sm:$0xff]
    %v3240 = vld [vmem:[#allocation5 + $0x78] sm:$0xff]
    %v3241 = vld [vmem:[#allocation5 + $0x80] sm:$0xff]
    %v3242 = vld [vmem:[#allocation5 + $0x88] sm:$0xff]
    %v3243 = vld [vmem:[#allocation5 + $0x90] sm:$0xff]
    %v3244 = vld [vmem:[#allocation5 + $0x98] sm:$0xff]
    %v3245 = vld [vmem:[#allocation5 + $0xa0] sm:$0xff]
    %v3246 = vld [vmem:[#allocation5 + $0xa8] sm:$0xff]
    %v3247 = vld [vmem:[#allocation5 + $0xb0] sm:$0xff]
    %v3248 = vld [vmem:[#allocation5 + $0xb8] sm:$0xff]
    %v3249 = vld [vmem:[#allocation5 + $0xc0] sm:$0xff]
    %v3250 = vld [vmem:[#allocation5 + $0xc8] sm:$0xff]
    %v3251 = vld [vmem:[#allocation5 + $0xd0] sm:$0xff]
    %v3252 = vld [vmem:[#allocation5 + $0xd8] sm:$0xff]
    %v3253 = vld [vmem:[#allocation5 + $0xe0] sm:$0xff]
    %v3254 = vld [vmem:[#allocation5 + $0xe8] sm:$0xff]
    %v3255 = vld [vmem:[#allocation5 + $0xf0] sm:$0xff]
    %v3256 = vld [vmem:[#allocation5 + $0xf8] sm:$0xff]
    %v3257 = vld [vmem:[%s8] sm:$0x1]
    %v3259 = vlaneseq
    %v3260 = vshrl.u32 %v3259, 7
    %v3261 = vsub.s32 0, %v3260
    %v3262 = vrot.slane %v3257, %v3261
    %3264 = vmatprep.subr.mxu0 0.0
    %3265 = vmatpush1.msra.mxu0 %v3240
    %3266 = vmatprep.subr.mxu0 0.0
    %3267 = vmatpush1.msra.mxu0 %v3239
    %3268 = vmatprep.subr.mxu0 0.0
    %3269 = vmatpush1.msra.mxu0 %v3238
    %3270 = vmatprep.subr.mxu0 0.0
    %3271 = vmatpush1.msra.mxu0 %v3237
    %3272 = vmatprep.subr.mxu0 0.0
    %3273 = vmatpush1.msra.mxu0 %v3236
    %3274 = vmatprep.subr.mxu0 0.0
    %3275 = vmatpush1.msra.mxu0 %v3235
    %3276 = vmatprep.subr.mxu0 0.0
    %3277 = vmatpush1.msra.mxu0 %v3234
    %3278 = vmatprep.subr.mxu0 0.0
    %3279 = vmatpush1.msra.mxu0 %v3233
    %3280 = vmatprep.subr.mxu0 0.0
    %3281 = vmatpush1.msra.mxu0 %v3232
    %3282 = vmatprep.subr.mxu0 0.0
    %3283 = vmatpush1.msra.mxu0 %v3231
    %3284 = vmatprep.subr.mxu0 0.0
    %3285 = vmatpush1.msra.mxu0 %v3230
    %3286 = vmatprep.subr.mxu0 0.0
    %3287 = vmatpush1.msra.mxu0 %v3229
    %3288 = vmatprep.subr.mxu0 0.0
    %3289 = vmatpush1.msra.mxu0 %v3228
    %3290 = vmatprep.subr.mxu0 0.0
    %3291 = vmatpush1.msra.mxu0 %v3227
    %3292 = vmatprep.subr.mxu0 0.0
    %3293 = vmatpush1.msra.mxu0 %v3226
    %3294 = vmatprep.subr.mxu0 0.0
    %3295 = vmatpush1.msra.mxu0 %v3225
    %3296 = vmatprep.subr.mxu0 0.0
    %3297 = vmatpush2.msra.mxu0 %v3256
    %3298 = vmatprep.subr.mxu0 0.0
    %3299 = vmatpush2.msra.mxu0 %v3255
    %3300 = vmatprep.subr.mxu0 0.0
    %3301 = vmatpush2.msra.mxu0 %v3254
    %3302 = vmatprep.subr.mxu0 0.0
    %3303 = vmatpush2.msra.mxu0 %v3253
    %3304 = vmatprep.subr.mxu0 0.0
    %3305 = vmatpush2.msra.mxu0 %v3252
    %3306 = vmatprep.subr.mxu0 0.0
    %3307 = vmatpush2.msra.mxu0 %v3251
    %3308 = vmatprep.subr.mxu0 0.0
    %3309 = vmatpush2.msra.mxu0 %v3250
    %3310 = vmatprep.subr.mxu0 0.0
    %3311 = vmatpush2.msra.mxu0 %v3249
    %3312 = vmatprep.subr.mxu0 0.0
    %3313 = vmatpush2.msra.mxu0 %v3248
    %3314 = vmatprep.subr.mxu0 0.0
    %3315 = vmatpush2.msra.mxu0 %v3247
    %3316 = vmatprep.subr.mxu0 0.0
    %3317 = vmatpush2.msra.mxu0 %v3246
    %3318 = vmatprep.subr.mxu0 0.0
    %3319 = vmatpush2.msra.mxu0 %v3245
    %3320 = vmatprep.subr.mxu0 0.0
    %3321 = vmatpush2.msra.mxu0 %v3244
    %3322 = vmatprep.subr.mxu0 0.0
    %3323 = vmatpush2.msra.mxu0 %v3243
    %3324 = vmatprep.subr.mxu0 0.0
    %3325 = vmatpush2.msra.mxu0 %v3242
    %3326 = vmatprep.subr.mxu0 0.0
    %3327 = vmatpush2.msra.mxu0 %v3241
    %3328 = vmatprep.mubr.f32.mxu0 %v3224
    %3329 = vmatmul.mubr.f32.gmra.mxu0 %v3223
    %v3330 = vpop.f32.mrf.mxu0
    %v3331 = vadd.f32 %v3262, %v3330
    %v3332 = vpop.f32.mrf.mxu0
    %3333 = vdwg.mxu0
    %3334 = vst [vmem:[%s9] sm:$0x3] %v3331
    // Predicated region
    $region46: #{actor_critic_forward.1} parent=1 // pred_check
      _
    $region47: #{actor_critic_forward.1} parent=1 // pred_check_branch
      %3336 = sbr.rel (0) target = $region49
    $region48: #{actor_critic_forward.1} parent=1 // pred_region
      _
    $region49: #{actor_critic_forward.1} parent=1 // pred_fallthru
      _
    // Predicated region
    $region50: #{actor_critic_forward.1} parent=1 // pred_check
      _
    $region51: #{actor_critic_forward.1} parent=1 // pred_check_branch
      %3338 = sbr.rel (0) target = $region53
    $region52: #{actor_critic_forward.1} parent=1 // pred_region
      _
    $region53: #{actor_critic_forward.1} parent=1 // pred_fallthru
      _
    %3339 = vsyncpa [#allocation4], 1
    %3340 = vsyncpa [#allocation6], 1

</llo_original>
